<compile_context>
chip_gen: v5e
topology: v5e:2x2
jax: 0.10.0
libtpu: 0.0.40
codegen_flags: <defaults>
</compile_context>

<pallas_src>
import math

import jax
import jax.numpy as jnp
from jax import lax
from jax.experimental import pallas as pl
from jax.experimental.pallas import tpu as pltpu

P_ENVELOPE = 6  # PolynomialEnvelope default p


def _round_up(x, m):
    return ((x + m - 1) // m) * m


def _make_kernel(Cp, TE, TN, Np, cutoff):
    p = float(P_ENVELOPE)
    pre_factor = math.sqrt(2.0 / cutoff)
    c6 = (p + 1.0) * (p + 2.0) / 2.0
    c7 = p * (p + 2.0)
    c8 = p * (p + 1.0) / 2.0

    def kernel(d_ref, vec_ref, i_ref, j_ref, semb_ref, vemb_ref,
               freq_ref, Wf_ref, bf_ref, W1_ref, b1_ref, W2_ref, b2_ref,
               out_ref, g_ref):
        e_step = pl.program_id(1)

        # ---- once per atom-block pass: Phi MLP + fused gather source -------
        # (edge-independent; for very large N this could be hoisted to the
        #  wrapper instead of being recomputed per atom block)
        @pl.when(e_step == 0)
        def _init():
            s = semb_ref[...]                                            # (Np, Cp) bf16
            h = jnp.dot(s, W1_ref[...],
                        preferred_element_type=jnp.float32) + b1_ref[...]
            h = h * jax.nn.sigmoid(h)                                    # SiLU (f32, EUP)
            nf = jnp.dot(h.astype(jnp.bfloat16), W2_ref[...],
                         preferred_element_type=jnp.float32) + b2_ref[...]   # (Np, 3Cp)
            g_ref[:, :3 * Cp] = nf.astype(jnp.bfloat16)
            g_ref[:, 3 * Cp:] = vemb_ref[...]                            # already bf16
            out_ref[...] = jnp.zeros_like(out_ref)

        # ---- radial filter * polynomial envelope (per edge tile) -----------
        d = d_ref[...]                                                   # (TE, 1) f32
        inv_d = pl.reciprocal(d, approx=True)                            # EUP
        u = vec_ref[...] * inv_d                                         # (TE, 3) unit vecs

        bessel = pre_factor * jnp.sin(d * freq_ref[...]) * inv_d         # (TE, R)
        filt = jnp.dot(bessel.astype(jnp.bfloat16), Wf_ref[...],
                       preferred_element_type=jnp.float32) + bf_ref[...]  # (TE, 3Cp)

        dr = d * (1.0 / cutoff)
        dr2 = dr * dr
        dr6 = dr2 * dr2 * dr2
        env = 1.0 - c6 * dr6 + c7 * dr6 * dr - c8 * dr6 * dr2
        env = env * (d < cutoff).astype(jnp.float32)                     # padded edges -> 0
        edge_emb = filt * env                                            # (TE, 3Cp)

        # ---- gather over neighbours j: per-tile one-hot built on the VPU ---
        j_oh = (j_ref[...] == lax.broadcasted_iota(jnp.int32, (TE, Np), 1))
        gathered = jnp.dot(j_oh.astype(jnp.bfloat16), g_ref[...],
                           preferred_element_type=jnp.float32)           # (TE, 6Cp)
        nf_j = gathered[:, :3 * Cp]
        v_j = gathered[:, 3 * Cp:]

        x_ij = nf_j * edge_emb                                           # (TE, 3Cp)
        a = x_ij[:, :Cp]
        b = x_ij[:, Cp:2 * Cp]
        c = x_ij[:, 2 * Cp:]

        vx = b * u[:, 0:1] + c * v_j[:, :Cp]
        vy = b * u[:, 1:2] + c * v_j[:, Cp:2 * Cp]
        vz = b * u[:, 2:3] + c * v_j[:, 2 * Cp:]
        msg = jnp.concatenate([a, vx, vy, vz], axis=-1)                  # (TE, 4Cp)

        # ---- scatter-sum over central atoms of this atom block -------------
        base = pl.program_id(0) * TN
        i_oh = (i_ref[...] ==
                lax.broadcasted_iota(jnp.int32, (TE, TN), 1) + base)     # (TE, TN)
        out_ref[...] += lax.dot_general(
            i_oh.astype(jnp.bfloat16), msg.astype(jnp.bfloat16),
            (((0,), (0,)), ((), ())),                                    # contract edges
            preferred_element_type=jnp.float32)                          # (TN, 4Cp)

    return kernel


def painn_interaction(distances, vectors, scalar_emb, vector_emb,
                      i_idx, j_idx, params, cutoff,
                      *, edge_tile=256, atom_tile=256):
    """
    distances  : (E,)       neighbour distances (must be > 0, as in the reference)
    vectors    : (E, 3)     neighbour displacement vectors
    scalar_emb : (N, C)
    vector_emb : (N, C, 3)  (torch layout)
    i_idx      : (E,) int   central-atom index (scatter target)
    j_idx      : (E,) int   neighbour-atom index (gather source)
    returns (delta_v (N, C, 3), delta_s (N, C))
    """
    N, C = scalar_emb.shape
    E = distances.shape[0]
    R = params["freq"].shape[0]

    Cp = _round_up(C, 128)                       # lane-aligned channel blocks
    TE = min(edge_tile, _round_up(E, 128))       # edge tile
    E_pad = _round_up(E, TE)
    TN = min(atom_tile, _round_up(N, 8))         # atom (output) tile
    Np = _round_up(N, TN)

    f32, bf16 = jnp.float32, jnp.bfloat16

    # ---- edge quantities, padded along the edge axis -----------------------
    d_pad = jnp.full((E_pad, 1), 2.0 * cutoff, f32).at[:E, 0].set(
        distances.astype(f32))
    vec_pad = jnp.zeros((E_pad, 3), f32).at[:E].set(vectors.astype(f32))
    i_pad = jnp.zeros((E_pad, 1), jnp.int32).at[:E, 0].set(i_idx.astype(jnp.int32))
    j_pad = jnp.zeros((E_pad, 1), jnp.int32).at[:E, 0].set(j_idx.astype(jnp.int32))

    # ---- per-atom embeddings, padded to lane-aligned slabs ------------------
    semb = jnp.zeros((Np, Cp), f32).at[:N, :C].set(scalar_emb.astype(f32)).astype(bf16)
    vemb3 = jnp.transpose(vector_emb.astype(f32), (2, 0, 1))             # (3, N, C)
    vemb = jnp.zeros((Np, 3 * Cp), f32)
    for k in range(3):
        vemb = vemb.at[:N, k * Cp:k * Cp + C].set(vemb3[k])
    vemb = vemb.astype(bf16)

    # ---- parameters, channel blocks placed at lane-aligned offsets ----------
    def split_cols(W, rows_pad):
        rows = W.shape[0]
        out = jnp.zeros((rows_pad, 3 * Cp), f32)
        for k in range(3):
            out = out.at[:rows, k * Cp:k * Cp + C].set(
                W[:, k * C:(k + 1) * C].astype(f32))
        return out

    def split_bias(bvec):
        out = jnp.zeros((1, 3 * Cp), f32)
        for k in range(3):
            out = out.at[0, k * Cp:k * Cp + C].set(
                bvec[k * C:(k + 1) * C].astype(f32))
        return out

    freq = params["freq"].reshape(1, R).astype(f32)
    Wf = split_cols(params["Wf"], R).astype(bf16)                        # (R, 3Cp)
    bf_ = split_bias(params["bf"])                                       # (1, 3Cp)
    W1 = jnp.zeros((Cp, Cp), f32).at[:C, :C].set(params["W1"].astype(f32)).astype(bf16)
    b1 = jnp.zeros((1, Cp), f32).at[0, :C].set(params["b1"].astype(f32))
    W2 = split_cols(params["W2"], Cp).astype(bf16)                       # (Cp, 3Cp)
    b2 = split_bias(params["b2"])                                        # (1, 3Cp)

    inputs = (d_pad, vec_pad, i_pad, j_pad, semb, vemb,
              freq, Wf, bf_, W1, b1, W2, b2)

    def edge_spec(last):
        return pl.BlockSpec((TE, last), lambda b, e: (e, 0))

    def const_spec(shape):
        return pl.BlockSpec(shape, lambda b, e: (0, 0))

    in_specs = [
        edge_spec(1), edge_spec(3), edge_spec(1), edge_spec(1),
        const_spec((Np, Cp)), const_spec((Np, 3 * Cp)),
        const_spec((1, R)), const_spec((R, 3 * Cp)), const_spec((1, 3 * Cp)),
        const_spec((Cp, Cp)), const_spec((1, Cp)),
        const_spec((Cp, 3 * Cp)), const_spec((1, 3 * Cp)),
    ]
    out_spec = pl.BlockSpec((TN, 4 * Cp), lambda b, e: (b, 0))           # accumulator

    grid = (Np // TN, E_pad // TE)

    out = pl.pallas_call(
        _make_kernel(Cp, TE, TN, Np, float(cutoff)),
        out_shape=jax.ShapeDtypeStruct((Np, 4 * Cp), jnp.float32),
        grid_spec=pltpu.PrefetchScalarGridSpec(
            num_scalar_prefetch=0,
            grid=grid,
            in_specs=in_specs,
            out_specs=out_spec,
            scratch_shapes=[pltpu.VMEM((Np, 6 * Cp), jnp.bfloat16)]),
        compiler_params=pltpu.CompilerParams(
            dimension_semantics=("parallel", "arbitrary"),
            vmem_limit_bytes=32 * 1024 * 1024),
    )(*inputs)

    delta_s = out[:N, :C]
    delta_v = jnp.stack(
        [out[:N, Cp:Cp + C],
         out[:N, 2 * Cp:2 * Cp + C],
         out[:N, 3 * Cp:3 * Cp + C]], axis=-1)                           # (N, C, 3)
    return delta_v, delta_s


def reference(distances, vectors, scalar_emb, vector_emb, i_idx, j_idx, params, cutoff):
    """Pure-JAX reference reproducing the torch forward pass."""
    C = scalar_emb.shape[1]
    N = scalar_emb.shape[0]
    d = distances[:, None]
    u = vectors / d
    bessel = math.sqrt(2.0 / cutoff) * jnp.sin(d * params["freq"][None, :]) / d
    filt = bessel @ params["Wf"] + params["bf"]
    p = float(P_ENVELOPE)
    dr = d / cutoff
    env = (1.0 - (p + 1) * (p + 2) / 2 * dr**6 + p * (p + 2) * dr**7
           - p * (p + 1) / 2 * dr**8) * (d < cutoff)
    edge_emb = filt * env
    h = jax.nn.silu(scalar_emb @ params["W1"] + params["b1"])
    new_feat = h @ params["W2"] + params["b2"]
    x_ij = new_feat[j_idx] * edge_emb
    a, b, c = x_ij[:, :C], x_ij[:, C:2 * C], x_ij[:, 2 * C:]
    delta_s = jax.ops.segment_sum(a, i_idx, num_segments=N)
    v_ij = b[:, :, None] * u[:, None, :] + c[:, :, None] * vector_emb[j_idx]
    delta_v = jax.ops.segment_sum(v_ij, i_idx, num_segments=N)
    return delta_v, delta_s


if __name__ == "__main__":
    N, E, C, R = 8, 16, 32, 8          # atoms, edges, channels, radial features
    cutoff = 5.0

    key = jax.random.PRNGKey(0)
    k_vec, k_len, k_i, k_j, k_s, k_v, k_wf, k_w1, k_w2, k_b = jax.random.split(key, 10)

    raw = jax.random.normal(k_vec, (E, 3), jnp.float32)
    dirs = raw / jnp.linalg.norm(raw, axis=-1, keepdims=True)
    lengths = jax.random.uniform(k_len, (E, 1), jnp.float32, 0.5, 4.5)
    vectors = dirs * lengths                          # neighbour displacement vectors
    distances = jnp.linalg.norm(vectors, axis=-1)     # (E,)

    i_idx = jax.random.randint(k_i, (E,), 0, N)       # central atoms
    j_idx = jax.random.randint(k_j, (E,), 0, N)       # neighbours

    scalar_emb = jax.random.normal(k_s, (N, C), jnp.float32)
    vector_emb = jax.random.normal(k_v, (N, C, 3), jnp.float32)

    params = {
        "freq": jnp.arange(1, R + 1, dtype=jnp.float32) * math.pi / cutoff,
        "Wf": 0.1 * jax.random.normal(k_wf, (R, 3 * C), jnp.float32),
        "bf": 0.01 * jnp.ones((3 * C,), jnp.float32),
        "W1": 0.1 * jax.random.normal(k_w1, (C, C), jnp.float32),
        "b1": 0.01 * jnp.ones((C,), jnp.float32),
        "W2": 0.1 * jax.random.normal(k_w2, (C, 3 * C), jnp.float32),
        "b2": 0.01 * jnp.ones((3 * C,), jnp.float32),
    }

    delta_v, delta_s = painn_interaction(
        distances, vectors, scalar_emb, vector_emb, i_idx, j_idx, params, cutoff)
    jax.block_until_ready((delta_v, delta_s))

    ref_v, ref_s = reference(
        distances, vectors, scalar_emb, vector_emb, i_idx, j_idx, params, cutoff)

    assert delta_v.shape == (N, C, 3) and delta_s.shape == (N, C)
    assert jnp.allclose(delta_s, ref_s, rtol=1e-2, atol=1e-2)
    assert jnp.allclose(delta_v, ref_v, rtol=1e-2, atol=1e-2)

    print("KERNEL_OK")
</pallas_src>

<mosaic_0001>
module attributes {stable_mosaic.version = 11 : i64} {
  func.func @kernel(%arg0: i32, %arg1: i32, %arg2: memref<128x1xf32, #tpu.memory_space<vmem>>, %arg3: memref<128x3xf32, #tpu.memory_space<vmem>>, %arg4: memref<128x1xi32, #tpu.memory_space<vmem>>, %arg5: memref<128x1xi32, #tpu.memory_space<vmem>>, %arg6: memref<8x128xbf16, #tpu.memory_space<vmem>>, %arg7: memref<8x384xbf16, #tpu.memory_space<vmem>>, %arg8: memref<1x8xf32, #tpu.memory_space<vmem>>, %arg9: memref<8x384xbf16, #tpu.memory_space<vmem>>, %arg10: memref<1x384xf32, #tpu.memory_space<vmem>>, %arg11: memref<128x128xbf16, #tpu.memory_space<vmem>>, %arg12: memref<1x128xf32, #tpu.memory_space<vmem>>, %arg13: memref<128x384xbf16, #tpu.memory_space<vmem>>, %arg14: memref<1x384xf32, #tpu.memory_space<vmem>>, %arg15: memref<8x512xf32, #tpu.memory_space<vmem>>, %arg16: memref<8x768xbf16, #tpu.memory_space<vmem>>) attributes {dimension_semantics = [#tpu.dimension_semantics<parallel>, #tpu.dimension_semantics<arbitrary>], iteration_bounds = array<i64: 1, 1>, scalar_prefetch = 0 : i64, scratch_operands = 1 : i64, tpu.core_type = #tpu.core_type<tc>, window_params = [{transform_indices = @transform_0, window_bounds = array<i64: 128, 1>}, {transform_indices = @transform_1, window_bounds = array<i64: 128, 3>}, {transform_indices = @transform_2, window_bounds = array<i64: 128, 1>}, {transform_indices = @transform_3, window_bounds = array<i64: 128, 1>}, {pipeline_mode = #tpu.pipeline_mode<synchronous>, transform_indices = @transform_4, window_bounds = array<i64: 8, 128>}, {pipeline_mode = #tpu.pipeline_mode<synchronous>, transform_indices = @transform_5, window_bounds = array<i64: 8, 384>}, {pipeline_mode = #tpu.pipeline_mode<synchronous>, transform_indices = @transform_6, window_bounds = array<i64: 1, 8>}, {pipeline_mode = #tpu.pipeline_mode<synchronous>, transform_indices = @transform_7, window_bounds = array<i64: 8, 384>}, {pipeline_mode = #tpu.pipeline_mode<synchronous>, transform_indices = @transform_8, window_bounds = array<i64: 1, 384>}, {pipeline_mode = #tpu.pipeline_mode<synchronous>, transform_indices = @transform_9, window_bounds = array<i64: 128, 128>}, {pipeline_mode = #tpu.pipeline_mode<synchronous>, transform_indices = @transform_10, window_bounds = array<i64: 1, 128>}, {pipeline_mode = #tpu.pipeline_mode<synchronous>, transform_indices = @transform_11, window_bounds = array<i64: 128, 384>}, {pipeline_mode = #tpu.pipeline_mode<synchronous>, transform_indices = @transform_12, window_bounds = array<i64: 1, 384>}, {transform_indices = @transform_13, window_bounds = array<i64: 8, 512>}]} {
    %c0_i32 = arith.constant 0 : i32
    %0 = arith.cmpi eq, %arg1, %c0_i32 : i32
    %1 = arith.extui %0 : i1 to i32
    %c0_i32_0 = arith.constant 0 : i32
    %2 = arith.cmpi ne, %1, %c0_i32_0 : i32
    scf.if %2 {
      %c0_29 = arith.constant 0 : index
      %c0_30 = arith.constant 0 : index
      %96 = vector.load %arg6[%c0_29, %c0_30] : memref<8x128xbf16, #tpu.memory_space<vmem>>, vector<8x128xbf16>
      %c0_31 = arith.constant 0 : index
      %c0_32 = arith.constant 0 : index
      %97 = vector.load %arg11[%c0_31, %c0_32] : memref<128x128xbf16, #tpu.memory_space<vmem>>, vector<128x128xbf16>
      %cst_33 = arith.constant dense<0.000000e+00> : vector<8x128xf32>
      %98 = tpu.matmul %96, %97, %cst_33 {dimension_numbers = #tpu.dot_dimension_numbers<[1], [0], [0], [1], [0, 0, 1, 1], [], []>} : vector<8x128xbf16>, vector<128x128xbf16>, vector<8x128xf32> -> vector<8x128xf32>
      %c0_34 = arith.constant 0 : index
      %c0_35 = arith.constant 0 : index
      %99 = vector.load %arg12[%c0_34, %c0_35] : memref<1x128xf32, #tpu.memory_space<vmem>>, vector<1x128xf32>
      %100 = vector.broadcast %99 : vector<1x128xf32> to vector<8x128xf32>
      %101 = arith.addf %98, %100 : vector<8x128xf32>
      %102 = arith.negf %101 : vector<8x128xf32>
      %103 = math.exp %102 : vector<8x128xf32>
      %cst_36 = arith.constant 1.000000e+00 : f32
      %104 = vector.broadcast %cst_36 : f32 to vector<8x128xf32>
      %105 = arith.addf %104, %103 : vector<8x128xf32>
      %106 = arith.divf %104, %105 : vector<8x128xf32>
      %107 = arith.mulf %101, %106 : vector<8x128xf32>
      %108 = arith.truncf %107 : vector<8x128xf32> to vector<8x128xbf16>
      %c0_37 = arith.constant 0 : index
      %c0_38 = arith.constant 0 : index
      %109 = vector.load %arg13[%c0_37, %c0_38] : memref<128x384xbf16, #tpu.memory_space<vmem>>, vector<128x384xbf16>
      %cst_39 = arith.constant dense<0.000000e+00> : vector<8x384xf32>
      %110 = tpu.matmul %108, %109, %cst_39 {dimension_numbers = #tpu.dot_dimension_numbers<[1], [0], [0], [1], [0, 0, 1, 1], [], []>} : vector<8x128xbf16>, vector<128x384xbf16>, vector<8x384xf32> -> vector<8x384xf32>
      %c0_40 = arith.constant 0 : index
      %c0_41 = arith.constant 0 : index
      %111 = vector.load %arg14[%c0_40, %c0_41] : memref<1x384xf32, #tpu.memory_space<vmem>>, vector<1x384xf32>
      %112 = vector.broadcast %111 : vector<1x384xf32> to vector<8x384xf32>
      %113 = arith.addf %110, %112 : vector<8x384xf32>
      %114 = arith.truncf %113 : vector<8x384xf32> to vector<8x384xbf16>
      %c0_42 = arith.constant 0 : index
      %c0_43 = arith.constant 0 : index
      %115 = vector.load %arg16[%c0_42, %c0_43] : memref<8x768xbf16, #tpu.memory_space<vmem>>, vector<8x384xbf16>
      tpu.vector_store %arg16[%c0_42, %c0_43], %114 {strides = array<i32>} : memref<8x768xbf16, #tpu.memory_space<vmem>>, vector<8x384xbf16>,
      %c0_44 = arith.constant 0 : index
      %c0_45 = arith.constant 0 : index
      %116 = vector.load %arg7[%c0_44, %c0_45] : memref<8x384xbf16, #tpu.memory_space<vmem>>, vector<8x384xbf16>
      %c0_46 = arith.constant 0 : index
      %c384 = arith.constant 384 : index
      %117 = vector.load %arg16[%c0_46, %c384] : memref<8x768xbf16, #tpu.memory_space<vmem>>, vector<8x384xbf16>
      tpu.vector_store %arg16[%c0_46, %c384], %116 {strides = array<i32>} : memref<8x768xbf16, #tpu.memory_space<vmem>>, vector<8x384xbf16>,
      %cst_47 = arith.constant 0.000000e+00 : f32
      %118 = vector.broadcast %cst_47 : f32 to vector<8x512xf32>
      %c0_48 = arith.constant 0 : index
      %c0_49 = arith.constant 0 : index
      %119 = vector.load %arg15[%c0_48, %c0_49] : memref<8x512xf32, #tpu.memory_space<vmem>>, vector<8x512xf32>
      tpu.vector_store %arg15[%c0_48, %c0_49], %118 {strides = array<i32>} : memref<8x512xf32, #tpu.memory_space<vmem>>, vector<8x512xf32>,
    } else {
    }
    %c0 = arith.constant 0 : index
    %c0_1 = arith.constant 0 : index
    %3 = vector.load %arg2[%c0, %c0_1] : memref<128x1xf32, #tpu.memory_space<vmem>>, vector<128x1xf32>
    %4 = tpu.reciprocal %3 {approx = true} : vector<128x1xf32> -> vector<128x1xf32>
    %c0_2 = arith.constant 0 : index
    %c0_3 = arith.constant 0 : index
    %5 = vector.load %arg3[%c0_2, %c0_3] : memref<128x3xf32, #tpu.memory_space<vmem>>, vector<128x3xf32>
    %6 = vector.broadcast %4 : vector<128x1xf32> to vector<128x3xf32>
    %7 = arith.mulf %5, %6 : vector<128x3xf32>
    %c0_4 = arith.constant 0 : index
    %c0_5 = arith.constant 0 : index
    %8 = vector.load %arg8[%c0_4, %c0_5] : memref<1x8xf32, #tpu.memory_space<vmem>>, vector<1x8xf32>
    %9 = vector.broadcast %3 : vector<128x1xf32> to vector<128x8xf32>
    %10 = vector.broadcast %8 : vector<1x8xf32> to vector<128x8xf32>
    %11 = arith.mulf %9, %10 : vector<128x8xf32>
    %12 = math.sin %11 : vector<128x8xf32>
    %cst = arith.constant 0.632455527 : f32
    %13 = vector.broadcast %cst : f32 to vector<128x8xf32>
    %14 = arith.mulf %13, %12 : vector<128x8xf32>
    %15 = vector.broadcast %4 : vector<128x1xf32> to vector<128x8xf32>
    %16 = arith.mulf %14, %15 : vector<128x8xf32>
    %17 = arith.truncf %16 : vector<128x8xf32> to vector<128x8xbf16>
    %c0_6 = arith.constant 0 : index
    %c0_7 = arith.constant 0 : index
    %18 = vector.load %arg9[%c0_6, %c0_7] : memref<8x384xbf16, #tpu.memory_space<vmem>>, vector<8x384xbf16>
    %cst_8 = arith.constant dense<0.000000e+00> : vector<128x384xf32>
    %19 = tpu.matmul %17, %18, %cst_8 {dimension_numbers = #tpu.dot_dimension_numbers<[1], [0], [0], [1], [0, 0, 1, 1], [], []>} : vector<128x8xbf16>, vector<8x384xbf16>, vector<128x384xf32> -> vector<128x384xf32>
    %c0_9 = arith.constant 0 : index
    %c0_10 = arith.constant 0 : index
    %20 = vector.load %arg10[%c0_9, %c0_10] : memref<1x384xf32, #tpu.memory_space<vmem>>, vector<1x384xf32>
    %21 = vector.broadcast %20 : vector<1x384xf32> to vector<128x384xf32>
    %22 = arith.addf %19, %21 : vector<128x384xf32>
    %cst_11 = arith.constant 2.000000e-01 : f32
    %23 = vector.broadcast %cst_11 : f32 to vector<128x1xf32>
    %24 = arith.mulf %3, %23 : vector<128x1xf32>
    %25 = arith.mulf %24, %24 : vector<128x1xf32>
    %26 = arith.mulf %25, %25 : vector<128x1xf32>
    %27 = arith.mulf %26, %25 : vector<128x1xf32>
    %cst_12 = arith.constant 2.800000e+01 : f32
    %28 = vector.broadcast %cst_12 : f32 to vector<128x1xf32>
    %29 = arith.mulf %28, %27 : vector<128x1xf32>
    %cst_13 = arith.constant 1.000000e+00 : f32
    %30 = vector.broadcast %cst_13 : f32 to vector<128x1xf32>
    %31 = arith.subf %30, %29 : vector<128x1xf32>
    %cst_14 = arith.constant 4.800000e+01 : f32
    %32 = vector.broadcast %cst_14 : f32 to vector<128x1xf32>
    %33 = arith.mulf %32, %27 : vector<128x1xf32>
    %34 = arith.mulf %33, %24 : vector<128x1xf32>
    %35 = arith.addf %31, %34 : vector<128x1xf32>
    %cst_15 = arith.constant 2.100000e+01 : f32
    %36 = vector.broadcast %cst_15 : f32 to vector<128x1xf32>
    %37 = arith.mulf %36, %27 : vector<128x1xf32>
    %38 = arith.mulf %37, %25 : vector<128x1xf32>
    %39 = arith.subf %35, %38 : vector<128x1xf32>
    %cst_16 = arith.constant 5.000000e+00 : f32
    %40 = vector.broadcast %cst_16 : f32 to vector<128x1xf32>
    %41 = arith.cmpf olt, %3, %40 : vector<128x1xf32>
    %42 = arith.extui %41 : vector<128x1xi1> to vector<128x1xi32>
    %43 = arith.sitofp %42 : vector<128x1xi32> to vector<128x1xf32>
    %44 = arith.mulf %39, %43 : vector<128x1xf32>
    %45 = vector.broadcast %44 : vector<128x1xf32> to vector<128x384xf32>
    %46 = arith.mulf %22, %45 : vector<128x384xf32>
    %c0_17 = arith.constant 0 : index
    %c0_18 = arith.constant 0 : index
    %47 = vector.load %arg5[%c0_17, %c0_18] : memref<128x1xi32, #tpu.memory_space<vmem>>, vector<128x1xi32>
    %48 = tpu.iota {dimensions = array<i32: 1>} : vector<128x8xi32>
    %49 = vector.broadcast %47 : vector<128x1xi32> to vector<128x8xi32>
    %50 = arith.cmpi eq, %49, %48 : vector<128x8xi32>
    %51 = arith.extui %50 : vector<128x8xi1> to vector<128x8xi32>
    %52 = arith.sitofp %51 : vector<128x8xi32> to vector<128x8xf32>
    %53 = arith.truncf %52 : vector<128x8xf32> to vector<128x8xbf16>
    %c0_19 = arith.constant 0 : index
    %c0_20 = arith.constant 0 : index
    %54 = vector.load %arg16[%c0_19, %c0_20] : memref<8x768xbf16, #tpu.memory_space<vmem>>, vector<8x768xbf16>
    %cst_21 = arith.constant dense<0.000000e+00> : vector<128x768xf32>
    %55 = tpu.matmul %53, %54, %cst_21 {dimension_numbers = #tpu.dot_dimension_numbers<[1], [0], [0], [1], [0, 0, 1, 1], [], []>} : vector<128x8xbf16>, vector<8x768xbf16>, vector<128x768xf32> -> vector<128x768xf32>
    %56 = vector.extract_strided_slice %55 {offsets = [0, 0], sizes = [128, 384], strides = [1, 1]} : vector<128x768xf32> to vector<128x384xf32>
    %57 = vector.extract_strided_slice %55 {offsets = [0, 384], sizes = [128, 384], strides = [1, 1]} : vector<128x768xf32> to vector<128x384xf32>
    %58 = arith.mulf %56, %46 : vector<128x384xf32>
    %59 = vector.extract_strided_slice %58 {offsets = [0, 0], sizes = [128, 128], strides = [1, 1]} : vector<128x384xf32> to vector<128x128xf32>
    %60 = vector.extract_strided_slice %58 {offsets = [0, 128], sizes = [128, 128], strides = [1, 1]} : vector<128x384xf32> to vector<128x128xf32>
    %61 = vector.extract_strided_slice %58 {offsets = [0, 256], sizes = [128, 128], strides = [1, 1]} : vector<128x384xf32> to vector<128x128xf32>
    %62 = vector.extract_strided_slice %7 {offsets = [0, 0], sizes = [128, 1], strides = [1, 1]} : vector<128x3xf32> to vector<128x1xf32>
    %63 = vector.broadcast %62 : vector<128x1xf32> to vector<128x128xf32>
    %64 = arith.mulf %60, %63 : vector<128x128xf32>
    %65 = vector.extract_strided_slice %57 {offsets = [0, 0], sizes = [128, 128], strides = [1, 1]} : vector<128x384xf32> to vector<128x128xf32>
    %66 = arith.mulf %61, %65 : vector<128x128xf32>
    %67 = arith.addf %64, %66 : vector<128x128xf32>
    %68 = vector.extract_strided_slice %7 {offsets = [0, 1], sizes = [128, 1], strides = [1, 1]} : vector<128x3xf32> to vector<128x1xf32>
    %69 = vector.broadcast %68 : vector<128x1xf32> to vector<128x128xf32>
    %70 = arith.mulf %60, %69 : vector<128x128xf32>
    %71 = vector.extract_strided_slice %57 {offsets = [0, 128], sizes = [128, 128], strides = [1, 1]} : vector<128x384xf32> to vector<128x128xf32>
    %72 = arith.mulf %61, %71 : vector<128x128xf32>
    %73 = arith.addf %70, %72 : vector<128x128xf32>
    %74 = vector.extract_strided_slice %7 {offsets = [0, 2], sizes = [128, 1], strides = [1, 1]} : vector<128x3xf32> to vector<128x1xf32>
    %75 = vector.broadcast %74 : vector<128x1xf32> to vector<128x128xf32>
    %76 = arith.mulf %60, %75 : vector<128x128xf32>
    %77 = vector.extract_strided_slice %57 {offsets = [0, 256], sizes = [128, 128], strides = [1, 1]} : vector<128x384xf32> to vector<128x128xf32>
    %78 = arith.mulf %61, %77 : vector<128x128xf32>
    %79 = arith.addf %76, %78 : vector<128x128xf32>
    %80 = tpu.concatenate %59, %67, %73, %79 in 1 : vector<128x128xf32>, vector<128x128xf32>, vector<128x128xf32>, vector<128x128xf32> -> vector<128x512xf32>
    %c8_i32 = arith.constant 8 : i32
    %81 = arith.muli %arg0, %c8_i32 : i32
    %c0_22 = arith.constant 0 : index
    %c0_23 = arith.constant 0 : index
    %82 = vector.load %arg4[%c0_22, %c0_23] : memref<128x1xi32, #tpu.memory_space<vmem>>, vector<128x1xi32>
    %83 = tpu.iota {dimensions = array<i32: 1>} : vector<128x8xi32>
    %84 = vector.broadcast %81 : i32 to vector<128x8xi32>
    %85 = arith.addi %83, %84 : vector<128x8xi32>
    %86 = vector.broadcast %82 : vector<128x1xi32> to vector<128x8xi32>
    %87 = arith.cmpi eq, %86, %85 : vector<128x8xi32>
    %c0_24 = arith.constant 0 : index
    %c0_25 = arith.constant 0 : index
    %88 = vector.load %arg15[%c0_24, %c0_25] : memref<8x512xf32, #tpu.memory_space<vmem>>, vector<8x512xf32>
    %89 = arith.extui %87 : vector<128x8xi1> to vector<128x8xi32>
    %90 = arith.sitofp %89 : vector<128x8xi32> to vector<128x8xf32>
    %91 = arith.truncf %90 : vector<128x8xf32> to vector<128x8xbf16>
    %92 = arith.truncf %80 : vector<128x512xf32> to vector<128x512xbf16>
    %cst_26 = arith.constant dense<0.000000e+00> : vector<8x512xf32>
    %93 = tpu.matmul %91, %92, %cst_26 {dimension_numbers = #tpu.dot_dimension_numbers<[0], [0], [1], [1], [0, 1, 1, 1], [], []>} : vector<128x8xbf16>, vector<128x512xbf16>, vector<8x512xf32> -> vector<8x512xf32>
    %94 = arith.addf %88, %93 : vector<8x512xf32>
    %c0_27 = arith.constant 0 : index
    %c0_28 = arith.constant 0 : index
    %95 = vector.load %arg15[%c0_27, %c0_28] : memref<8x512xf32, #tpu.memory_space<vmem>>, vector<8x512xf32>
    tpu.vector_store %arg15[%c0_27, %c0_28], %94 {strides = array<i32>} : memref<8x512xf32, #tpu.memory_space<vmem>>, vector<8x512xf32>,
    return
  }
  func.func @transform_0(%arg0: i32, %arg1: i32) -> (i32, i32) {
    %c0_i32 = arith.constant 0 : i32
    %c0_i32_0 = arith.constant 0 : i32
    return %arg1, %c0_i32 : i32, i32
  }
  func.func @transform_1(%arg0: i32, %arg1: i32) -> (i32, i32) {
    %c0_i32 = arith.constant 0 : i32
    %c0_i32_0 = arith.constant 0 : i32
    return %arg1, %c0_i32 : i32, i32
  }
  func.func @transform_2(%arg0: i32, %arg1: i32) -> (i32, i32) {
    %c0_i32 = arith.constant 0 : i32
    %c0_i32_0 = arith.constant 0 : i32
    return %arg1, %c0_i32 : i32, i32
  }
  func.func @transform_3(%arg0: i32, %arg1: i32) -> (i32, i32) {
    %c0_i32 = arith.constant 0 : i32
    %c0_i32_0 = arith.constant 0 : i32
    return %arg1, %c0_i32 : i32, i32
  }
  func.func @transform_4(%arg0: i32, %arg1: i32) -> (i32, i32) {
    %c0_i32 = arith.constant 0 : i32
    %c0_i32_0 = arith.constant 0 : i32
    %c0_i32_1 = arith.constant 0 : i32
    return %c0_i32, %c0_i32_0 : i32, i32
  }
  func.func @transform_5(%arg0: i32, %arg1: i32) -> (i32, i32) {
    %c0_i32 = arith.constant 0 : i32
    %c0_i32_0 = arith.constant 0 : i32
    %c0_i32_1 = arith.constant 0 : i32
    return %c0_i32, %c0_i32_0 : i32, i32
  }
  func.func @transform_6(%arg0: i32, %arg1: i32) -> (i32, i32) {
    %c0_i32 = arith.constant 0 : i32
    %c0_i32_0 = arith.constant 0 : i32
    %c0_i32_1 = arith.constant 0 : i32
    return %c0_i32, %c0_i32_0 : i32, i32
  }
  func.func @transform_7(%arg0: i32, %arg1: i32) -> (i32, i32) {
    %c0_i32 = arith.constant 0 : i32
    %c0_i32_0 = arith.constant 0 : i32
    %c0_i32_1 = arith.constant 0 : i32
    return %c0_i32, %c0_i32_0 : i32, i32
  }
  func.func @transform_8(%arg0: i32, %arg1: i32) -> (i32, i32) {
    %c0_i32 = arith.constant 0 : i32
    %c0_i32_0 = arith.constant 0 : i32
    %c0_i32_1 = arith.constant 0 : i32
    return %c0_i32, %c0_i32_0 : i32, i32
  }
  func.func @transform_9(%arg0: i32, %arg1: i32) -> (i32, i32) {
    %c0_i32 = arith.constant 0 : i32
    %c0_i32_0 = arith.constant 0 : i32
    %c0_i32_1 = arith.constant 0 : i32
    return %c0_i32, %c0_i32_0 : i32, i32
  }
  func.func @transform_10(%arg0: i32, %arg1: i32) -> (i32, i32) {
    %c0_i32 = arith.constant 0 : i32
    %c0_i32_0 = arith.constant 0 : i32
    %c0_i32_1 = arith.constant 0 : i32
    return %c0_i32, %c0_i32_0 : i32, i32
  }
  func.func @transform_11(%arg0: i32, %arg1: i32) -> (i32, i32) {
    %c0_i32 = arith.constant 0 : i32
    %c0_i32_0 = arith.constant 0 : i32
    %c0_i32_1 = arith.constant 0 : i32
    return %c0_i32, %c0_i32_0 : i32, i32
  }
  func.func @transform_12(%arg0: i32, %arg1: i32) -> (i32, i32) {
    %c0_i32 = arith.constant 0 : i32
    %c0_i32_0 = arith.constant 0 : i32
    %c0_i32_1 = arith.constant 0 : i32
    return %c0_i32, %c0_i32_0 : i32, i32
  }
  func.func @transform_13(%arg0: i32, %arg1: i32) -> (i32, i32) {
    %c0_i32 = arith.constant 0 : i32
    %c0_i32_0 = arith.constant 0 : i32
    return %arg0, %c0_i32 : i32, i32
  }
}

</mosaic_0001>

<llo_original>
// kernel: tpu_custom_call.1
$region0: #{tpu_custom_call.1}
  #allocation0 [shape = 'u32[]', space=smem, size = 0x4, offset = 0x4, fixed_abs, tag = 'smem constant byte address 0x4 - core index']
  #allocation1 [shape = 'u32[72,128]{1,0:T(1,128)}', space=vmem, size = 0x9000, scoped, tag = 'internal scratch']
  #allocation2 [shape = 'bf16[8,768]{1,0:T(8,128)(2,1)}', space=vmem, size = 0x3000, scoped, tag = 'scratch operand']
  %s0 = inlined_call_operand.vmem [shape: f32[128,1], index: 0, kind: input, shape index: {}]
  %s1 = inlined_call_operand.vmem [shape: f32[128,3], index: 1, kind: input, shape index: {}]
  %s2 = inlined_call_operand.vmem [shape: s32[128,1], index: 2, kind: input, shape index: {}]
  %s3 = inlined_call_operand.vmem [shape: s32[128,1], index: 3, kind: input, shape index: {}]
  %s4 = inlined_call_operand.vmem [shape: bf16[8,128], index: 4, kind: input, shape index: {}]
  %s5 = inlined_call_operand.vmem [shape: bf16[8,384], index: 5, kind: input, shape index: {}]
  %s6 = inlined_call_operand.vmem [shape: f32[1,8], index: 6, kind: input, shape index: {}]
  %s7 = inlined_call_operand.vmem [shape: bf16[8,384], index: 7, kind: input, shape index: {}]
  %s8 = inlined_call_operand.vmem [shape: f32[1,384], index: 8, kind: input, shape index: {}]
  %s9 = inlined_call_operand.vmem [shape: bf16[128,128], index: 9, kind: input, shape index: {}]
  %s10 = inlined_call_operand.vmem [shape: f32[1,128], index: 10, kind: input, shape index: {}]
  %s11 = inlined_call_operand.vmem [shape: bf16[128,384], index: 11, kind: input, shape index: {}]
  %s12 = inlined_call_operand.vmem [shape: f32[1,384], index: 12, kind: input, shape index: {}]
  %s13 = inlined_call_operand.hbm [shape: f32[8,512], index: 13, kind: output, shape index: {}]
  %s14 = sld [smem:[#allocation0]]
  $region66: #{tpu_custom_call.1} parent=0
    _
  %s16 = ssub.s32 1, %s14
  %s17 = scalar_select 0, %s16, %s14
  $region1: #{tpu_custom_call.1} parent=0
    #allocation3 [shape = 'u8[16384]{0}', space=vmem, size = 0x4000, scoped, tag = 'output window, operand 0, single buffered']
    #allocation4 [shape = 's32[1]{0}', space=sflag, size = 0x4, scoped, tag = 'scoped memory for tpu_custom_call.1']
    %18 = vsyncpa [#allocation4], 0
    // Predicated region
    $region2: #{tpu_custom_call.1} parent=1 // pred_check
      _
    $region3: #{tpu_custom_call.1} parent=1 // pred_check_branch
      %20 = sbr.rel (0) target = $region5
    $region4: #{tpu_custom_call.1} parent=1 // pred_region
      _
    $region5: #{tpu_custom_call.1} parent=1 // pred_fallthru
      _
    // Predicated region
    $region6: #{tpu_custom_call.1} parent=1 // pred_check
      _
    $region7: #{tpu_custom_call.1} parent=1 // pred_check_branch
      %22 = sbr.rel (0) target = $region9
    $region8: #{tpu_custom_call.1} parent=1 // pred_region
      _
    $region9: #{tpu_custom_call.1} parent=1 // pred_fallthru
      _
    // Predicated region
    $region10: #{tpu_custom_call.1} parent=1 // pred_check
      _
    $region11: #{tpu_custom_call.1} parent=1 // pred_check_branch
      %24 = sbr.rel (0) target = $region13
    $region12: #{tpu_custom_call.1} parent=1 // pred_region
      _
    $region13: #{tpu_custom_call.1} parent=1 // pred_fallthru
      _
    // Predicated region
    $region14: #{tpu_custom_call.1} parent=1 // pred_check
      _
    $region15: #{tpu_custom_call.1} parent=1 // pred_check_branch
      %26 = sbr.rel (0) target = $region17
    $region16: #{tpu_custom_call.1} parent=1 // pred_region
      _
    $region17: #{tpu_custom_call.1} parent=1 // pred_fallthru
      _
    // Predicated region
    $region18: #{tpu_custom_call.1} parent=1 // pred_check
      _
    $region19: #{tpu_custom_call.1} parent=1 // pred_check_branch
      %28 = sbr.rel (0) target = $region21
    $region20: #{tpu_custom_call.1} parent=1 // pred_region
      _
    $region21: #{tpu_custom_call.1} parent=1 // pred_fallthru
      _
    // Predicated region
    $region22: #{tpu_custom_call.1} parent=1 // pred_check
      _
    $region23: #{tpu_custom_call.1} parent=1 // pred_check_branch
      %30 = sbr.rel (0) target = $region25
    $region24: #{tpu_custom_call.1} parent=1 // pred_region
      _
    $region25: #{tpu_custom_call.1} parent=1 // pred_fallthru
      _
    // Predicated region
    $region26: #{tpu_custom_call.1} parent=1 // pred_check
      _
    $region27: #{tpu_custom_call.1} parent=1 // pred_check_branch
      %32 = sbr.rel (0) target = $region29
    $region28: #{tpu_custom_call.1} parent=1 // pred_region
      _
    $region29: #{tpu_custom_call.1} parent=1 // pred_fallthru
      _
    // Predicated region
    $region30: #{tpu_custom_call.1} parent=1 // pred_check
      _
    $region31: #{tpu_custom_call.1} parent=1 // pred_check_branch
      %34 = sbr.rel (0) target = $region33
    $region32: #{tpu_custom_call.1} parent=1 // pred_region
      _
    $region33: #{tpu_custom_call.1} parent=1 // pred_fallthru
      _
    // Predicated region
    $region34: #{tpu_custom_call.1} parent=1 // pred_check
      _
    $region35: #{tpu_custom_call.1} parent=1 // pred_check_branch
      %36 = sbr.rel (0) target = $region37
    $region36: #{tpu_custom_call.1} parent=1 // pred_region
      _
    $region37: #{tpu_custom_call.1} parent=1 // pred_fallthru
      _
    // Predicated region
    $region38: #{tpu_custom_call.1} parent=1 // pred_check
      _
    $region39: #{tpu_custom_call.1} parent=1 // pred_check_branch
      %38 = sbr.rel (0) target = $region41
    $region40: #{tpu_custom_call.1} parent=1 // pred_region
      _
    $region41: #{tpu_custom_call.1} parent=1 // pred_fallthru
      _
    // Predicated region
    $region42: #{tpu_custom_call.1} parent=1 // pred_check
      _
    $region43: #{tpu_custom_call.1} parent=1 // pred_check_branch
      %40 = sbr.rel (0) target = $region45
    $region44: #{tpu_custom_call.1} parent=1 // pred_region
      _
    $region45: #{tpu_custom_call.1} parent=1 // pred_fallthru
      _
    // Predicated region
    $region46: #{tpu_custom_call.1} parent=1 // pred_check
      _
    $region47: #{tpu_custom_call.1} parent=1 // pred_check_branch
      %42 = sbr.rel (0) target = $region49
    $region48: #{tpu_custom_call.1} parent=1 // pred_region
      _
    $region49: #{tpu_custom_call.1} parent=1 // pred_fallthru
      _
    // Predicated region
    $region50: #{tpu_custom_call.1} parent=1 // pred_check
      _
    $region51: #{tpu_custom_call.1} parent=1 // pred_check_branch
      %44 = sbr.rel (0) target = $region53
    $region52: #{tpu_custom_call.1} parent=1 // pred_region
      _
    $region53: #{tpu_custom_call.1} parent=1 // pred_fallthru
      _
    %p46 = scmp.eq.s32.totalorder 0, 0
    // Predicated region
    $region54: #{tpu_custom_call.1} parent=1 // pred_check
      %p47 = pneg %p46
    $region55: #{tpu_custom_call.1} parent=1 // pred_check_branch
      %49 = sbr.rel (%p47) target = $region57
    $region56: #{tpu_custom_call.1} parent=1 // pred_region
      %v50 = vld [vmem:[%s4] sm:$0xf]
      %v51 = vld [vmem:[%s9] sm:$0xf]
      %v52 = vld [vmem:[%s9 + $0x4] sm:$0xf]
      %v53 = vld [vmem:[%s9 + $0x8] sm:$0xf]
      %v54 = vld [vmem:[%s9 + $0xc] sm:$0xf]
      %v55 = vld [vmem:[%s9 + $0x10] sm:$0xf]
      %v56 = vld [vmem:[%s9 + $0x14] sm:$0xf]
      %v57 = vld [vmem:[%s9 + $0x18] sm:$0xf]
      %v58 = vld [vmem:[%s9 + $0x1c] sm:$0xf]
      %v59 = vld [vmem:[%s9 + $0x20] sm:$0xf]
      %v60 = vld [vmem:[%s9 + $0x24] sm:$0xf]
      %v61 = vld [vmem:[%s9 + $0x28] sm:$0xf]
      %v62 = vld [vmem:[%s9 + $0x2c] sm:$0xf]
      %v63 = vld [vmem:[%s9 + $0x30] sm:$0xf]
      %v64 = vld [vmem:[%s9 + $0x34] sm:$0xf]
      %v65 = vld [vmem:[%s9 + $0x38] sm:$0xf]
      %v66 = vld [vmem:[%s9 + $0x3c] sm:$0xf]
      %v67 = vld [vmem:[%s10] sm:$0x1]
      %v69 = vperm.slane %v67, 0
      %v87 = vunpack.c.l.b16 %v51
      %v88 = vunpack.c.l.b16 %v52
      %v89 = vunpack.c.l.b16 %v53
      %v90 = vunpack.c.l.b16 %v54
      %v91 = vunpack.c.l.b16 %v55
      %v92 = vunpack.c.l.b16 %v56
      %v93 = vunpack.c.l.b16 %v57
      %v94 = vunpack.c.l.b16 %v58
      %v95 = vunpack.c.l.b16 %v59
      %v96 = vunpack.c.l.b16 %v60
      %v97 = vunpack.c.l.b16 %v61
      %v98 = vunpack.c.l.b16 %v62
      %v99 = vunpack.c.l.b16 %v63
      %v100 = vunpack.c.l.b16 %v64
      %v101 = vunpack.c.l.b16 %v65
      %v102 = vunpack.c.l.b16 %v66
      %v103 = vpack.c.b16 %v88, %v87
      %v104 = vpack.c.b16 %v90, %v89
      %v105 = vpack.c.b16 %v92, %v91
      %v106 = vpack.c.b16 %v94, %v93
      %v107 = vpack.c.b16 %v96, %v95
      %v108 = vpack.c.b16 %v98, %v97
      %v109 = vpack.c.b16 %v100, %v99
      %v110 = vpack.c.b16 %v102, %v101
      %119 = vmatpush.bf16.msra.mxu0 %v110
      %120 = vmatpush.bf16.msra.mxu0 %v109
      %121 = vmatpush.bf16.msra.mxu0 %v108
      %122 = vmatpush.bf16.msra.mxu0 %v107
      %123 = vmatpush.bf16.msra.mxu0 %v106
      %124 = vmatpush.bf16.msra.mxu0 %v105
      %125 = vmatpush.bf16.msra.mxu0 %v104
      %126 = vmatpush.bf16.msra.mxu0 %v103
      %127 = vmatmul.bf16.gmra.mxu0 %v50
      %v128 = vpop.f32.mrf.mxu0
      %v129 = vadd.f32 %v69, %v128
      %v130 = vpop.f32.mrf.mxu0
      %131 = vdwg.mxu0
      %v132 = vxor.u32 %v129, 2147483648
      %v133 = vmul.f32 %v132, 1.442695
      %v134 = vpow.pop %v133
      %v135 = vadd.f32 %v134, 1.0
      %v136 = vrcp.pop %v135
      %v137 = vmul.f32 %v135, %v136
      %v138 = vsub.f32 1.0, %v137
      %v139 = vmul.f32 %v136, %v138
      %v140 = vadd.f32 %v136, %v139
      %vm141 = vweird.f32 %v135
      %vm142 = vweird.f32 %v136
      %vm143 = vmor %vm141, %vm142
      %v144 = vsel %vm143, %v136, %v140
      %v145 = vand.u32 2147483647, %v135
      %vm146 = vcmp.eq.f32.partialorder %v145, 8.507059e+37
      %v147 = vand.u32 %v135, 2147483648
      %v148 = vor.u32 1.1754944e-38, %v147
      %v149 = vsel %vm146, %v148, %v144
      %v150 = vmul.f32 1.0, %v149
      %v151 = vmul.f32 %v129, %v150
      %v152 = vpack.c.bf16 %v151, %v151
      %v153 = vld [vmem:[%s11] sm:$0xff]
      %v154 = vld [vmem:[%s11 + $0x8] sm:$0xf]
      %v155 = vld [vmem:[%s11 + $0xc] sm:$0xff]
      %v156 = vld [vmem:[%s11 + $0x14] sm:$0xf]
      %v157 = vld [vmem:[%s11 + $0x18] sm:$0xff]
      %v158 = vld [vmem:[%s11 + $0x20] sm:$0xf]
      %v159 = vld [vmem:[%s11 + $0x24] sm:$0xff]
      %v160 = vld [vmem:[%s11 + $0x2c] sm:$0xf]
      %v161 = vld [vmem:[%s11 + $0x30] sm:$0xff]
      %v162 = vld [vmem:[%s11 + $0x38] sm:$0xf]
      %v163 = vld [vmem:[%s11 + $0x3c] sm:$0xff]
      %v164 = vld [vmem:[%s11 + $0x44] sm:$0xf]
      %v165 = vld [vmem:[%s11 + $0x48] sm:$0xff]
      %v166 = vld [vmem:[%s11 + $0x50] sm:$0xf]
      %v167 = vld [vmem:[%s11 + $0x54] sm:$0xff]
      %v168 = vld [vmem:[%s11 + $0x5c] sm:$0xf]
      %v169 = vld [vmem:[%s11 + $0x60] sm:$0xff]
      %v170 = vld [vmem:[%s11 + $0x68] sm:$0xf]
      %v171 = vld [vmem:[%s11 + $0x6c] sm:$0xff]
      %v172 = vld [vmem:[%s11 + $0x74] sm:$0xf]
      %v173 = vld [vmem:[%s11 + $0x78] sm:$0xff]
      %v174 = vld [vmem:[%s11 + $0x80] sm:$0xf]
      %v175 = vld [vmem:[%s11 + $0x84] sm:$0xff]
      %v176 = vld [vmem:[%s11 + $0x8c] sm:$0xf]
      %v177 = vld [vmem:[%s11 + $0x90] sm:$0xff]
      %v178 = vld [vmem:[%s11 + $0x98] sm:$0xf]
      %v179 = vld [vmem:[%s11 + $0x9c] sm:$0xff]
      %v180 = vld [vmem:[%s11 + $0xa4] sm:$0xf]
      %v181 = vld [vmem:[%s11 + $0xa8] sm:$0xff]
      %v182 = vld [vmem:[%s11 + $0xb0] sm:$0xf]
      %v183 = vld [vmem:[%s11 + $0xb4] sm:$0xff]
      %v184 = vld [vmem:[%s11 + $0xbc] sm:$0xf]
      %v185 = vld [vmem:[%s12] sm:$0x7]
      %v187 = vperm.slane %v185, 0
      %v188 = vperm.slane %v185, 1
      %v189 = vperm.slane %v185, 2
      %v225 = vunpack.c.l.b16 %v153
      %v226 = vunpack.c.h.b16 %v153
      %v227 = vunpack.c.l.b16 %v154
      %v228 = vunpack.c.l.b16 %v155
      %v229 = vunpack.c.h.b16 %v155
      %v230 = vunpack.c.l.b16 %v156
      %v231 = vunpack.c.l.b16 %v157
      %v232 = vunpack.c.h.b16 %v157
      %v233 = vunpack.c.l.b16 %v158
      %v234 = vunpack.c.l.b16 %v159
      %v235 = vunpack.c.h.b16 %v159
      %v236 = vunpack.c.l.b16 %v160
      %v237 = vunpack.c.l.b16 %v161
      %v238 = vunpack.c.h.b16 %v161
      %v239 = vunpack.c.l.b16 %v162
      %v240 = vunpack.c.l.b16 %v163
      %v241 = vunpack.c.h.b16 %v163
      %v242 = vunpack.c.l.b16 %v164
      %v243 = vunpack.c.l.b16 %v165
      %v244 = vunpack.c.h.b16 %v165
      %v245 = vunpack.c.l.b16 %v166
      %v246 = vunpack.c.l.b16 %v167
      %v247 = vunpack.c.h.b16 %v167
      %v248 = vunpack.c.l.b16 %v168
      %v249 = vunpack.c.l.b16 %v169
      %v250 = vunpack.c.h.b16 %v169
      %v251 = vunpack.c.l.b16 %v170
      %v252 = vunpack.c.l.b16 %v171
      %v253 = vunpack.c.h.b16 %v171
      %v254 = vunpack.c.l.b16 %v172
      %v255 = vunpack.c.l.b16 %v173
      %v256 = vunpack.c.h.b16 %v173
      %v257 = vunpack.c.l.b16 %v174
      %v258 = vunpack.c.l.b16 %v175
      %v259 = vunpack.c.h.b16 %v175
      %v260 = vunpack.c.l.b16 %v176
      %v261 = vunpack.c.l.b16 %v177
      %v262 = vunpack.c.h.b16 %v177
      %v263 = vunpack.c.l.b16 %v178
      %v264 = vunpack.c.l.b16 %v179
      %v265 = vunpack.c.h.b16 %v179
      %v266 = vunpack.c.l.b16 %v180
      %v267 = vunpack.c.l.b16 %v181
      %v268 = vunpack.c.h.b16 %v181
      %v269 = vunpack.c.l.b16 %v182
      %v270 = vunpack.c.l.b16 %v183
      %v271 = vunpack.c.h.b16 %v183
      %v272 = vunpack.c.l.b16 %v184
      %v273 = vpack.c.b16 %v228, %v225
      %v274 = vpack.c.b16 %v229, %v226
      %v275 = vpack.c.b16 %v230, %v227
      %v276 = vpack.c.b16 %v234, %v231
      %v277 = vpack.c.b16 %v235, %v232
      %v278 = vpack.c.b16 %v236, %v233
      %v279 = vpack.c.b16 %v240, %v237
      %v280 = vpack.c.b16 %v241, %v238
      %v281 = vpack.c.b16 %v242, %v239
      %v282 = vpack.c.b16 %v246, %v243
      %v283 = vpack.c.b16 %v247, %v244
      %v284 = vpack.c.b16 %v248, %v245
      %v285 = vpack.c.b16 %v252, %v249
      %v286 = vpack.c.b16 %v253, %v250
      %v287 = vpack.c.b16 %v254, %v251
      %v288 = vpack.c.b16 %v258, %v255
      %v289 = vpack.c.b16 %v259, %v256
      %v290 = vpack.c.b16 %v260, %v257
      %v291 = vpack.c.b16 %v264, %v261
      %v292 = vpack.c.b16 %v265, %v262
      %v293 = vpack.c.b16 %v266, %v263
      %v294 = vpack.c.b16 %v270, %v267
      %v295 = vpack.c.b16 %v271, %v268
      %v296 = vpack.c.b16 %v272, %v269
      %321 = vmatpush.bf16.msra.mxu0 %v294
      %322 = vmatpush.bf16.msra.mxu0 %v291
      %323 = vmatpush.bf16.msra.mxu0 %v288
      %324 = vmatpush.bf16.msra.mxu0 %v285
      %325 = vmatpush.bf16.msra.mxu0 %v282
      %326 = vmatpush.bf16.msra.mxu0 %v279
      %327 = vmatpush.bf16.msra.mxu0 %v276
      %328 = vmatpush.bf16.msra.mxu0 %v273
      %329 = vmatmul.bf16.gmra.mxu0 %v152
      %v330 = vpop.f32.mrf.mxu0
      %v331 = vadd.f32 %v187, %v330
      %v332 = vpop.f32.mrf.mxu0
      %333 = vdwg.mxu0
      %334 = vmatpush.bf16.msra.mxu0 %v295
      %335 = vmatpush.bf16.msra.mxu0 %v292
      %336 = vmatpush.bf16.msra.mxu0 %v289
      %337 = vmatpush.bf16.msra.mxu0 %v286
      %338 = vmatpush.bf16.msra.mxu0 %v283
      %339 = vmatpush.bf16.msra.mxu0 %v280
      %340 = vmatpush.bf16.msra.mxu0 %v277
      %341 = vmatpush.bf16.msra.mxu0 %v274
      %342 = vmatmul.bf16.gmra.mxu0 %v152
      %v343 = vpop.f32.mrf.mxu0
      %v344 = vadd.f32 %v188, %v343
      %v345 = vpop.f32.mrf.mxu0
      %346 = vdwg.mxu0
      %347 = vmatpush.bf16.msra.mxu0 %v296
      %348 = vmatpush.bf16.msra.mxu0 %v293
      %349 = vmatpush.bf16.msra.mxu0 %v290
      %350 = vmatpush.bf16.msra.mxu0 %v287
      %351 = vmatpush.bf16.msra.mxu0 %v284
      %352 = vmatpush.bf16.msra.mxu0 %v281
      %353 = vmatpush.bf16.msra.mxu0 %v278
      %354 = vmatpush.bf16.msra.mxu0 %v275
      %355 = vmatmul.bf16.gmra.mxu0 %v152
      %v356 = vpop.f32.mrf.mxu0
      %v357 = vadd.f32 %v189, %v356
      %v358 = vpop.f32.mrf.mxu0
      %359 = vdwg.mxu0
      %v360 = vpack.c.bf16 %v344, %v331
      %v361 = vpack.c.bf16 %v357, %v357
      %362 = vst [vmem:[#allocation2] sm:$0xff] %v360
      %363 = vst [vmem:[#allocation2 + $0x8] sm:$0xf] %v361
      %v364 = vld [vmem:[%s5] sm:$0xff]
      %v365 = vld [vmem:[%s5 + $0x8] sm:$0xf]
      %366 = vst [vmem:[#allocation2 + $0xc] sm:$0xff] %v364
      %367 = vst [vmem:[#allocation2 + $0x14] sm:$0xf] %v365
      %368 = vst [vmem:[#allocation3] sm:$0xff] 0.0
      %369 = vst [vmem:[#allocation3 + $0x8] sm:$0xff] 0.0
      %370 = vst [vmem:[#allocation3 + $0x10] sm:$0xff] 0.0
      %371 = vst [vmem:[#allocation3 + $0x18] sm:$0xff] 0.0
    $region57: #{tpu_custom_call.1} parent=1 // pred_fallthru
      _
    %v372 = vld [vmem:[%s0] sm:$0xff]
    %v373 = vld [vmem:[%s0 + $0x8] sm:$0xff]
    %v374 = vld [vmem:[%s0 + $0x10] sm:$0xff]
    %v375 = vld [vmem:[%s0 + $0x18] sm:$0xff]
    %v376 = vld [vmem:[%s0 + $0x20] sm:$0xff]
    %v377 = vld [vmem:[%s0 + $0x28] sm:$0xff]
    %v378 = vld [vmem:[%s0 + $0x30] sm:$0xff]
    %v379 = vld [vmem:[%s0 + $0x38] sm:$0xff]
    %v380 = vld [vmem:[%s0 + $0x40] sm:$0xff]
    %v381 = vld [vmem:[%s0 + $0x48] sm:$0xff]
    %v382 = vld [vmem:[%s0 + $0x50] sm:$0xff]
    %v383 = vld [vmem:[%s0 + $0x58] sm:$0xff]
    %v384 = vld [vmem:[%s0 + $0x60] sm:$0xff]
    %v385 = vld [vmem:[%s0 + $0x68] sm:$0xff]
    %v386 = vld [vmem:[%s0 + $0x70] sm:$0xff]
    %v387 = vld [vmem:[%s0 + $0x78] sm:$0xff]
    %v388 = vrcp.pop %v372
    %v389 = vrcp.pop %v373
    %v390 = vrcp.pop %v374
    %v391 = vrcp.pop %v375
    %v392 = vrcp.pop %v376
    %v393 = vrcp.pop %v377
    %v394 = vrcp.pop %v378
    %v395 = vrcp.pop %v379
    %v396 = vrcp.pop %v380
    %v397 = vrcp.pop %v381
    %v398 = vrcp.pop %v382
    %v399 = vrcp.pop %v383
    %v400 = vrcp.pop %v384
    %v401 = vrcp.pop %v385
    %v402 = vrcp.pop %v386
    %v403 = vrcp.pop %v387
    %v404 = vld [vmem:[%s1] sm:$0xff]
    %v405 = vld [vmem:[%s1 + $0x8] sm:$0xff]
    %v406 = vld [vmem:[%s1 + $0x10] sm:$0xff]
    %v407 = vld [vmem:[%s1 + $0x18] sm:$0xff]
    %v408 = vld [vmem:[%s1 + $0x20] sm:$0xff]
    %v409 = vld [vmem:[%s1 + $0x28] sm:$0xff]
    %v410 = vld [vmem:[%s1 + $0x30] sm:$0xff]
    %v411 = vld [vmem:[%s1 + $0x38] sm:$0xff]
    %v412 = vld [vmem:[%s1 + $0x40] sm:$0xff]
    %v413 = vld [vmem:[%s1 + $0x48] sm:$0xff]
    %v414 = vld [vmem:[%s1 + $0x50] sm:$0xff]
    %v415 = vld [vmem:[%s1 + $0x58] sm:$0xff]
    %v416 = vld [vmem:[%s1 + $0x60] sm:$0xff]
    %v417 = vld [vmem:[%s1 + $0x68] sm:$0xff]
    %v418 = vld [vmem:[%s1 + $0x70] sm:$0xff]
    %v419 = vld [vmem:[%s1 + $0x78] sm:$0xff]
    %421 = vset.pattern.permute.xlu0 0
    %422 = vperm.xlu0 %421, %v388
    %v423 = vpop.permute.xlu0 %422
    %426 = vset.pattern.permute.xlu0 0
    %427 = vperm.xlu0 %426, %v389
    %v428 = vpop.permute.xlu0 %427
    %431 = vset.pattern.permute.xlu0 0
    %432 = vperm.xlu0 %431, %v390
    %v433 = vpop.permute.xlu0 %432
    %436 = vset.pattern.permute.xlu0 0
    %437 = vperm.xlu0 %436, %v391
    %v438 = vpop.permute.xlu0 %437
    %441 = vset.pattern.permute.xlu0 0
    %442 = vperm.xlu0 %441, %v392
    %v443 = vpop.permute.xlu0 %442
    %446 = vset.pattern.permute.xlu0 0
    %447 = vperm.xlu0 %446, %v393
    %v448 = vpop.permute.xlu0 %447
    %451 = vset.pattern.permute.xlu0 0
    %452 = vperm.xlu0 %451, %v394
    %v453 = vpop.permute.xlu0 %452
    %456 = vset.pattern.permute.xlu0 0
    %457 = vperm.xlu0 %456, %v395
    %v458 = vpop.permute.xlu0 %457
    %461 = vset.pattern.permute.xlu0 0
    %462 = vperm.xlu0 %461, %v396
    %v463 = vpop.permute.xlu0 %462
    %466 = vset.pattern.permute.xlu0 0
    %467 = vperm.xlu0 %466, %v397
    %v468 = vpop.permute.xlu0 %467
    %471 = vset.pattern.permute.xlu0 0
    %472 = vperm.xlu0 %471, %v398
    %v473 = vpop.permute.xlu0 %472
    %476 = vset.pattern.permute.xlu0 0
    %477 = vperm.xlu0 %476, %v399
    %v478 = vpop.permute.xlu0 %477
    %481 = vset.pattern.permute.xlu0 0
    %482 = vperm.xlu0 %481, %v400
    %v483 = vpop.permute.xlu0 %482
    %486 = vset.pattern.permute.xlu0 0
    %487 = vperm.xlu0 %486, %v401
    %v488 = vpop.permute.xlu0 %487
    %491 = vset.pattern.permute.xlu0 0
    %492 = vperm.xlu0 %491, %v402
    %v493 = vpop.permute.xlu0 %492
    %496 = vset.pattern.permute.xlu0 0
    %497 = vperm.xlu0 %496, %v403
    %v498 = vpop.permute.xlu0 %497
    %v500 = vmul.f32 %v404, %v423
    %v501 = vmul.f32 %v405, %v428
    %v502 = vmul.f32 %v406, %v433
    %v503 = vmul.f32 %v407, %v438
    %v504 = vmul.f32 %v408, %v443
    %v505 = vmul.f32 %v409, %v448
    %v506 = vmul.f32 %v410, %v453
    %v507 = vmul.f32 %v411, %v458
    %v508 = vmul.f32 %v412, %v463
    %v509 = vmul.f32 %v413, %v468
    %v510 = vmul.f32 %v414, %v473
    %v511 = vmul.f32 %v415, %v478
    %v512 = vmul.f32 %v416, %v483
    %v513 = vmul.f32 %v417, %v488
    %v514 = vmul.f32 %v418, %v493
    %v515 = vmul.f32 %v419, %v498
    %v516 = vld [vmem:[%s6] sm:$0x1]
    %518 = vset.pattern.permute.xlu0 0
    %519 = vperm.xlu0 %518, %v372
    %v520 = vpop.permute.xlu0 %519
    %523 = vset.pattern.permute.xlu0 0
    %524 = vperm.xlu0 %523, %v373
    %v525 = vpop.permute.xlu0 %524
    %528 = vset.pattern.permute.xlu0 0
    %529 = vperm.xlu0 %528, %v374
    %v530 = vpop.permute.xlu0 %529
    %533 = vset.pattern.permute.xlu0 0
    %534 = vperm.xlu0 %533, %v375
    %v535 = vpop.permute.xlu0 %534
    %538 = vset.pattern.permute.xlu0 0
    %539 = vperm.xlu0 %538, %v376
    %v540 = vpop.permute.xlu0 %539
    %543 = vset.pattern.permute.xlu0 0
    %544 = vperm.xlu0 %543, %v377
    %v545 = vpop.permute.xlu0 %544
    %548 = vset.pattern.permute.xlu0 0
    %549 = vperm.xlu0 %548, %v378
    %v550 = vpop.permute.xlu0 %549
    %553 = vset.pattern.permute.xlu0 0
    %554 = vperm.xlu0 %553, %v379
    %v555 = vpop.permute.xlu0 %554
    %558 = vset.pattern.permute.xlu0 0
    %559 = vperm.xlu0 %558, %v380
    %v560 = vpop.permute.xlu0 %559
    %563 = vset.pattern.permute.xlu0 0
    %564 = vperm.xlu0 %563, %v381
    %v565 = vpop.permute.xlu0 %564
    %568 = vset.pattern.permute.xlu0 0
    %569 = vperm.xlu0 %568, %v382
    %v570 = vpop.permute.xlu0 %569
    %573 = vset.pattern.permute.xlu0 0
    %574 = vperm.xlu0 %573, %v383
    %v575 = vpop.permute.xlu0 %574
    %578 = vset.pattern.permute.xlu0 0
    %579 = vperm.xlu0 %578, %v384
    %v580 = vpop.permute.xlu0 %579
    %583 = vset.pattern.permute.xlu0 0
    %584 = vperm.xlu0 %583, %v385
    %v585 = vpop.permute.xlu0 %584
    %588 = vset.pattern.permute.xlu0 0
    %589 = vperm.xlu0 %588, %v386
    %v590 = vpop.permute.xlu0 %589
    %593 = vset.pattern.permute.xlu0 0
    %594 = vperm.xlu0 %593, %v387
    %v595 = vpop.permute.xlu0 %594
    %v598 = vperm.slane %v516, 0
    %v600 = vmul.f32 %v520, %v598
    %v601 = vmul.f32 %v525, %v598
    %v602 = vmul.f32 %v530, %v598
    %v603 = vmul.f32 %v535, %v598
    %v604 = vmul.f32 %v540, %v598
    %v605 = vmul.f32 %v545, %v598
    %v606 = vmul.f32 %v550, %v598
    %v607 = vmul.f32 %v555, %v598
    %v608 = vmul.f32 %v560, %v598
    %v609 = vmul.f32 %v565, %v598
    %v610 = vmul.f32 %v570, %v598
    %v611 = vmul.f32 %v575, %v598
    %v612 = vmul.f32 %v580, %v598
    %v613 = vmul.f32 %v585, %v598
    %v614 = vmul.f32 %v590, %v598
    %v615 = vmul.f32 %v595, %v598
    %v616 = vand.u32 2147483647, %v600
    %vm617 = vcmp.le.f32.partialorder %v616, 0.7853982
    %vm618 = vcmp.lt.s32.totalorder %v600, 0
    %v619 = vand.u32 %v600, 2139095040
    %v620 = vshrl.u32 %v619, 23
    %v621 = vsub.s32 %v620, 127
    %v622 = vand.u32 2147483647, %v600
    %v623 = vand.u32 %v622, 8388607
    %v624 = vor.u32 %v623, 8388608
    %v625 = vsub.s32 0, %v624
    %v626 = vadd.s32 %v621, 1
    %vm627 = vcmp.gt.s32.totalorder %v626, 0
    %v628 = vsel %vm627, %v626, 0
    %v629 = vshrl.u32 %v628, 5
    %v630 = vand.u32 %v628, 31
    %v631 = vsub.s32 32, %v630
    %v632 = vshrl.u32 683565275, %v631
    %v633 = vshll.u32 683565275, %v630
    %v634 = vshrl.u32 2475754826, %v631
    %v635 = vor.u32 %v633, %v634
    %v636 = vshll.u32 2475754826, %v630
    %v637 = vshrl.u32 2131351028, %v631
    %v638 = vor.u32 %v636, %v637
    %v639 = vshll.u32 2131351028, %v630
    %v640 = vshrl.u32 2102212464, %v631
    %v641 = vor.u32 %v639, %v640
    %v642 = vshll.u32 2102212464, %v630
    %v643 = vshrl.u32 920167782, %v631
    %v644 = vor.u32 %v642, %v643
    %v645 = vshll.u32 920167782, %v630
    %v646 = vshrl.u32 1326507024, %v631
    %v647 = vor.u32 %v645, %v646
    %vm648 = vcmp.lt.s32.totalorder %v629, 1
    %vm649 = vcmp.lt.s32.totalorder %v629, 2
    %vm650 = vcmp.lt.s32.totalorder %v629, 3
    %vm651 = vcmp.lt.s32.totalorder %v629, 4
    %v652 = vsel %vm648, %v632, %v635
    %v653 = vsel %vm651, %v641, 2102212464
    %v654 = vsel %vm650, %v638, %v653
    %v655 = vsel %vm649, %v652, %v654
    %v656 = vsel %vm648, %v635, %v638
    %v657 = vsel %vm651, %v644, 920167782
    %v658 = vsel %vm650, %v641, %v657
    %v659 = vsel %vm649, %v656, %v658
    %v660 = vsel %vm648, %v638, %v641
    %v661 = vsel %vm651, %v647, 1326507024
    %v662 = vsel %vm650, %v644, %v661
    %v663 = vsel %vm649, %v660, %v662
    %v664 = vshll.u32 %v624, 8
    %v665 = vand.u32 %v664, 65535
    %v666 = vshrl.u32 %v664, 16
    %v667 = vand.u32 %v663, 65535
    %v668 = vshrl.u32 %v663, 16
    %v669 = vmul.u32 %v665, %v667
    %v670 = vmul.u32 %v665, %v668
    %v671 = vmul.u32 %v666, %v667
    %v672 = vmul.u32 %v666, %v668
    %v673 = vshll.u32 %v670, 16
    %v674 = vshrl.u32 %v670, 16
    %v675 = vshll.u32 %v671, 16
    %v676 = vshrl.u32 %v671, 16
    %vm677 = vc.u32 %v669, %v673
    %v678 = vsel %vm677, 1, 0
    %v679 = vadd.s32 %v669, %v673
    %v680 = vadd.s32 %v672, %v678
    %vm681 = vc.u32 %v679, %v675
    %v682 = vsel %vm681, 1, 0
    %v683 = vadd.s32 %v679, %v675
    %v684 = vadd.s32 %v680, %v682
    %v685 = vadd.s32 %v684, %v674
    %v686 = vadd.s32 %v685, %v676
    %v687 = vand.u32 %v664, 65535
    %v688 = vshrl.u32 %v664, 16
    %v689 = vand.u32 %v659, 65535
    %v690 = vshrl.u32 %v659, 16
    %v691 = vmul.u32 %v687, %v689
    %v692 = vmul.u32 %v687, %v690
    %v693 = vmul.u32 %v688, %v689
    %v694 = vmul.u32 %v688, %v690
    %v695 = vshll.u32 %v692, 16
    %v696 = vshrl.u32 %v692, 16
    %v697 = vshll.u32 %v693, 16
    %v698 = vshrl.u32 %v693, 16
    %vm699 = vc.u32 %v691, %v695
    %v700 = vsel %vm699, 1, 0
    %v701 = vadd.s32 %v691, %v695
    %v702 = vadd.s32 %v694, %v700
    %vm703 = vc.u32 %v701, %v697
    %v704 = vsel %vm703, 1, 0
    %v705 = vadd.s32 %v701, %v697
    %v706 = vadd.s32 %v702, %v704
    %v707 = vadd.s32 %v706, %v696
    %v708 = vadd.s32 %v707, %v698
    %v709 = vmul.u32 %v664, %v655
    %v710 = vadd.s32 %v686, %v705
    %vm711 = vc.u32 %v686, %v705
    %v712 = vadd.s32 %v708, 1
    %v713 = vsel %vm711, %v712, %v708
    %v714 = vadd.s32 %v709, %v713
    %v715 = vadd.s32 %v714, 536870912
    %v716 = vshrl.u32 %v715, 30
    %v717 = vshll.u32 %v716, 30
    %v718 = vsub.s32 %v714, %v717
    %vm719 = vcmp.lt.s32.totalorder %v718, 0
    %v720 = vsub.s32 0, %v718
    %v721 = vsel %vm719, %v720, %v718
    %v722 = vclz %v721
    %v723 = vsub.s32 %v722, 2
    %vm724 = vcmp.gt.s32.totalorder 0, %v723
    %v725 = vsel %vm724, 0, %v723
    %v726 = vsub.s32 32, %v725
    %v727 = vshll.u32 %v718, %v725
    %v728 = vshrl.u32 %v710, %v726
    %v729 = vor.u32 %v727, %v728
    %v730 = vsub.s32 4294967266, %v725
    %v731 = vadd.s32 %v730, 127
    %v732 = vshll.u32 %v731, 23
    %v733 = vor.u32 4788187, %v732
    %v734 = vand.u32 2147483647, %v733
    %v736 = vcvt.s32.f32 %v729
    %v737 = vmul.f32 %v736, %v734
    %v738 = vxor.u32 %v737, 2147483648
    %v739 = vsel %vm618, %v738, %v737
    %v740 = vsub.s32 4, %v716
    %v741 = vsel %vm618, %v740, %v716
    %v742 = vsel %vm617, %v600, %v739
    %v743 = vsel %vm617, 0, %v741
    %v744 = vmul.f32 %v742, %v742
    %v745 = vmul.f32 %v744, -0.001358992
    %v746 = vadd.f32 %v745, 0.041655596
    %v747 = vmul.f32 %v744, %v746
    %v748 = vadd.f32 %v747, -0.4999988
    %v749 = vmul.f32 %v744, %v748
    %v750 = vadd.f32 1.0, %v749
    %v751 = vmul.f32 %v742, %v742
    %v752 = vmul.f32 %v751, -0.00019511016
    %v753 = vadd.f32 %v752, 0.008332121
    %v754 = vmul.f32 %v751, %v753
    %v755 = vadd.f32 %v754, -0.16666654
    %v756 = vmul.f32 %v751, %v755
    %v757 = vadd.f32 %v756, 1.0
    %v758 = vmul.f32 %v757, %v742
    %vm759 = vweird.f32 %v600
    %v760 = vadd.s32 %v743, 3
    %v761 = vand.u32 %v760, 3
    %vm762 = vcmp.lt.s32.totalorder %v761, 2
    %vm763 = vcmp.eq.s32.totalorder %v761, 0
    %v764 = vxor.u32 %v758, 2147483648
    %v765 = vsel %vm763, %v750, %v764
    %vm766 = vcmp.eq.s32.totalorder %v761, 2
    %v767 = vxor.u32 %v750, 2147483648
    %v768 = vsel %vm766, %v767, %v758
    %v769 = vsel %vm762, %v765, %v768
    %v770 = vsel %vm759, nan, %v769
    %v771 = vand.u32 2147483647, %v601
    %vm772 = vcmp.le.f32.partialorder %v771, 0.7853982
    %vm773 = vcmp.lt.s32.totalorder %v601, 0
    %v774 = vand.u32 %v601, 2139095040
    %v775 = vshrl.u32 %v774, 23
    %v776 = vsub.s32 %v775, 127
    %v777 = vand.u32 2147483647, %v601
    %v778 = vand.u32 %v777, 8388607
    %v779 = vor.u32 %v778, 8388608
    %v780 = vsub.s32 0, %v779
    %v781 = vadd.s32 %v776, 1
    %vm782 = vcmp.gt.s32.totalorder %v781, 0
    %v783 = vsel %vm782, %v781, 0
    %v784 = vshrl.u32 %v783, 5
    %v785 = vand.u32 %v783, 31
    %v786 = vsub.s32 32, %v785
    %v787 = vshrl.u32 683565275, %v786
    %v788 = vshll.u32 683565275, %v785
    %v789 = vshrl.u32 2475754826, %v786
    %v790 = vor.u32 %v788, %v789
    %v791 = vshll.u32 2475754826, %v785
    %v792 = vshrl.u32 2131351028, %v786
    %v793 = vor.u32 %v791, %v792
    %v794 = vshll.u32 2131351028, %v785
    %v795 = vshrl.u32 2102212464, %v786
    %v796 = vor.u32 %v794, %v795
    %v797 = vshll.u32 2102212464, %v785
    %v798 = vshrl.u32 920167782, %v786
    %v799 = vor.u32 %v797, %v798
    %v800 = vshll.u32 920167782, %v785
    %v801 = vshrl.u32 1326507024, %v786
    %v802 = vor.u32 %v800, %v801
    %vm803 = vcmp.lt.s32.totalorder %v784, 1
    %vm804 = vcmp.lt.s32.totalorder %v784, 2
    %vm805 = vcmp.lt.s32.totalorder %v784, 3
    %vm806 = vcmp.lt.s32.totalorder %v784, 4
    %v807 = vsel %vm803, %v787, %v790
    %v808 = vsel %vm806, %v796, 2102212464
    %v809 = vsel %vm805, %v793, %v808
    %v810 = vsel %vm804, %v807, %v809
    %v811 = vsel %vm803, %v790, %v793
    %v812 = vsel %vm806, %v799, 920167782
    %v813 = vsel %vm805, %v796, %v812
    %v814 = vsel %vm804, %v811, %v813
    %v815 = vsel %vm803, %v793, %v796
    %v816 = vsel %vm806, %v802, 1326507024
    %v817 = vsel %vm805, %v799, %v816
    %v818 = vsel %vm804, %v815, %v817
    %v819 = vshll.u32 %v779, 8
    %v820 = vand.u32 %v819, 65535
    %v821 = vshrl.u32 %v819, 16
    %v822 = vand.u32 %v818, 65535
    %v823 = vshrl.u32 %v818, 16
    %v824 = vmul.u32 %v820, %v822
    %v825 = vmul.u32 %v820, %v823
    %v826 = vmul.u32 %v821, %v822
    %v827 = vmul.u32 %v821, %v823
    %v828 = vshll.u32 %v825, 16
    %v829 = vshrl.u32 %v825, 16
    %v830 = vshll.u32 %v826, 16
    %v831 = vshrl.u32 %v826, 16
    %vm832 = vc.u32 %v824, %v828
    %v833 = vsel %vm832, 1, 0
    %v834 = vadd.s32 %v824, %v828
    %v835 = vadd.s32 %v827, %v833
    %vm836 = vc.u32 %v834, %v830
    %v837 = vsel %vm836, 1, 0
    %v838 = vadd.s32 %v834, %v830
    %v839 = vadd.s32 %v835, %v837
    %v840 = vadd.s32 %v839, %v829
    %v841 = vadd.s32 %v840, %v831
    %v842 = vand.u32 %v819, 65535
    %v843 = vshrl.u32 %v819, 16
    %v844 = vand.u32 %v814, 65535
    %v845 = vshrl.u32 %v814, 16
    %v846 = vmul.u32 %v842, %v844
    %v847 = vmul.u32 %v842, %v845
    %v848 = vmul.u32 %v843, %v844
    %v849 = vmul.u32 %v843, %v845
    %v850 = vshll.u32 %v847, 16
    %v851 = vshrl.u32 %v847, 16
    %v852 = vshll.u32 %v848, 16
    %v853 = vshrl.u32 %v848, 16
    %vm854 = vc.u32 %v846, %v850
    %v855 = vsel %vm854, 1, 0
    %v856 = vadd.s32 %v846, %v850
    %v857 = vadd.s32 %v849, %v855
    %vm858 = vc.u32 %v856, %v852
    %v859 = vsel %vm858, 1, 0
    %v860 = vadd.s32 %v856, %v852
    %v861 = vadd.s32 %v857, %v859
    %v862 = vadd.s32 %v861, %v851
    %v863 = vadd.s32 %v862, %v853
    %v864 = vmul.u32 %v819, %v810
    %v865 = vadd.s32 %v841, %v860
    %vm866 = vc.u32 %v841, %v860
    %v867 = vadd.s32 %v863, 1
    %v868 = vsel %vm866, %v867, %v863
    %v869 = vadd.s32 %v864, %v868
    %v870 = vadd.s32 %v869, 536870912
    %v871 = vshrl.u32 %v870, 30
    %v872 = vshll.u32 %v871, 30
    %v873 = vsub.s32 %v869, %v872
    %vm874 = vcmp.lt.s32.totalorder %v873, 0
    %v875 = vsub.s32 0, %v873
    %v876 = vsel %vm874, %v875, %v873
    %v877 = vclz %v876
    %v878 = vsub.s32 %v877, 2
    %vm879 = vcmp.gt.s32.totalorder 0, %v878
    %v880 = vsel %vm879, 0, %v878
    %v881 = vsub.s32 32, %v880
    %v882 = vshll.u32 %v873, %v880
    %v883 = vshrl.u32 %v865, %v881
    %v884 = vor.u32 %v882, %v883
    %v885 = vsub.s32 4294967266, %v880
    %v886 = vadd.s32 %v885, 127
    %v887 = vshll.u32 %v886, 23
    %v888 = vor.u32 4788187, %v887
    %v889 = vand.u32 2147483647, %v888
    %v891 = vcvt.s32.f32 %v884
    %v892 = vmul.f32 %v891, %v889
    %v893 = vxor.u32 %v892, 2147483648
    %v894 = vsel %vm773, %v893, %v892
    %v895 = vsub.s32 4, %v871
    %v896 = vsel %vm773, %v895, %v871
    %v897 = vsel %vm772, %v601, %v894
    %v898 = vsel %vm772, 0, %v896
    %v899 = vmul.f32 %v897, %v897
    %v900 = vmul.f32 %v899, -0.001358992
    %v901 = vadd.f32 %v900, 0.041655596
    %v902 = vmul.f32 %v899, %v901
    %v903 = vadd.f32 %v902, -0.4999988
    %v904 = vmul.f32 %v899, %v903
    %v905 = vadd.f32 1.0, %v904
    %v906 = vmul.f32 %v897, %v897
    %v907 = vmul.f32 %v906, -0.00019511016
    %v908 = vadd.f32 %v907, 0.008332121
    %v909 = vmul.f32 %v906, %v908
    %v910 = vadd.f32 %v909, -0.16666654
    %v911 = vmul.f32 %v906, %v910
    %v912 = vadd.f32 %v911, 1.0
    %v913 = vmul.f32 %v912, %v897
    %vm914 = vweird.f32 %v601
    %v915 = vadd.s32 %v898, 3
    %v916 = vand.u32 %v915, 3
    %vm917 = vcmp.lt.s32.totalorder %v916, 2
    %vm918 = vcmp.eq.s32.totalorder %v916, 0
    %v919 = vxor.u32 %v913, 2147483648
    %v920 = vsel %vm918, %v905, %v919
    %vm921 = vcmp.eq.s32.totalorder %v916, 2
    %v922 = vxor.u32 %v905, 2147483648
    %v923 = vsel %vm921, %v922, %v913
    %v924 = vsel %vm917, %v920, %v923
    %v925 = vsel %vm914, nan, %v924
    %v926 = vand.u32 2147483647, %v602
    %vm927 = vcmp.le.f32.partialorder %v926, 0.7853982
    %vm928 = vcmp.lt.s32.totalorder %v602, 0
    %v929 = vand.u32 %v602, 2139095040
    %v930 = vshrl.u32 %v929, 23
    %v931 = vsub.s32 %v930, 127
    %v932 = vand.u32 2147483647, %v602
    %v933 = vand.u32 %v932, 8388607
    %v934 = vor.u32 %v933, 8388608
    %v935 = vsub.s32 0, %v934
    %v936 = vadd.s32 %v931, 1
    %vm937 = vcmp.gt.s32.totalorder %v936, 0
    %v938 = vsel %vm937, %v936, 0
    %v939 = vshrl.u32 %v938, 5
    %v940 = vand.u32 %v938, 31
    %v941 = vsub.s32 32, %v940
    %v942 = vshrl.u32 683565275, %v941
    %v943 = vshll.u32 683565275, %v940
    %v944 = vshrl.u32 2475754826, %v941
    %v945 = vor.u32 %v943, %v944
    %v946 = vshll.u32 2475754826, %v940
    %v947 = vshrl.u32 2131351028, %v941
    %v948 = vor.u32 %v946, %v947
    %v949 = vshll.u32 2131351028, %v940
    %v950 = vshrl.u32 2102212464, %v941
    %v951 = vor.u32 %v949, %v950
    %v952 = vshll.u32 2102212464, %v940
    %v953 = vshrl.u32 920167782, %v941
    %v954 = vor.u32 %v952, %v953
    %v955 = vshll.u32 920167782, %v940
    %v956 = vshrl.u32 1326507024, %v941
    %v957 = vor.u32 %v955, %v956
    %vm958 = vcmp.lt.s32.totalorder %v939, 1
    %vm959 = vcmp.lt.s32.totalorder %v939, 2
    %vm960 = vcmp.lt.s32.totalorder %v939, 3
    %vm961 = vcmp.lt.s32.totalorder %v939, 4
    %v962 = vsel %vm958, %v942, %v945
    %v963 = vsel %vm961, %v951, 2102212464
    %v964 = vsel %vm960, %v948, %v963
    %v965 = vsel %vm959, %v962, %v964
    %v966 = vsel %vm958, %v945, %v948
    %v967 = vsel %vm961, %v954, 920167782
    %v968 = vsel %vm960, %v951, %v967
    %v969 = vsel %vm959, %v966, %v968
    %v970 = vsel %vm958, %v948, %v951
    %v971 = vsel %vm961, %v957, 1326507024
    %v972 = vsel %vm960, %v954, %v971
    %v973 = vsel %vm959, %v970, %v972
    %v974 = vshll.u32 %v934, 8
    %v975 = vand.u32 %v974, 65535
    %v976 = vshrl.u32 %v974, 16
    %v977 = vand.u32 %v973, 65535
    %v978 = vshrl.u32 %v973, 16
    %v979 = vmul.u32 %v975, %v977
    %v980 = vmul.u32 %v975, %v978
    %v981 = vmul.u32 %v976, %v977
    %v982 = vmul.u32 %v976, %v978
    %v983 = vshll.u32 %v980, 16
    %v984 = vshrl.u32 %v980, 16
    %v985 = vshll.u32 %v981, 16
    %v986 = vshrl.u32 %v981, 16
    %vm987 = vc.u32 %v979, %v983
    %v988 = vsel %vm987, 1, 0
    %v989 = vadd.s32 %v979, %v983
    %v990 = vadd.s32 %v982, %v988
    %vm991 = vc.u32 %v989, %v985
    %v992 = vsel %vm991, 1, 0
    %v993 = vadd.s32 %v989, %v985
    %v994 = vadd.s32 %v990, %v992
    %v995 = vadd.s32 %v994, %v984
    %v996 = vadd.s32 %v995, %v986
    %v997 = vand.u32 %v974, 65535
    %v998 = vshrl.u32 %v974, 16
    %v999 = vand.u32 %v969, 65535
    %v1000 = vshrl.u32 %v969, 16
    %v1001 = vmul.u32 %v997, %v999
    %v1002 = vmul.u32 %v997, %v1000
    %v1003 = vmul.u32 %v998, %v999
    %v1004 = vmul.u32 %v998, %v1000
    %v1005 = vshll.u32 %v1002, 16
    %v1006 = vshrl.u32 %v1002, 16
    %v1007 = vshll.u32 %v1003, 16
    %v1008 = vshrl.u32 %v1003, 16
    %vm1009 = vc.u32 %v1001, %v1005
    %v1010 = vsel %vm1009, 1, 0
    %v1011 = vadd.s32 %v1001, %v1005
    %v1012 = vadd.s32 %v1004, %v1010
    %vm1013 = vc.u32 %v1011, %v1007
    %v1014 = vsel %vm1013, 1, 0
    %v1015 = vadd.s32 %v1011, %v1007
    %v1016 = vadd.s32 %v1012, %v1014
    %v1017 = vadd.s32 %v1016, %v1006
    %v1018 = vadd.s32 %v1017, %v1008
    %v1019 = vmul.u32 %v974, %v965
    %v1020 = vadd.s32 %v996, %v1015
    %vm1021 = vc.u32 %v996, %v1015
    %v1022 = vadd.s32 %v1018, 1
    %v1023 = vsel %vm1021, %v1022, %v1018
    %v1024 = vadd.s32 %v1019, %v1023
    %v1025 = vadd.s32 %v1024, 536870912
    %v1026 = vshrl.u32 %v1025, 30
    %v1027 = vshll.u32 %v1026, 30
    %v1028 = vsub.s32 %v1024, %v1027
    %vm1029 = vcmp.lt.s32.totalorder %v1028, 0
    %v1030 = vsub.s32 0, %v1028
    %v1031 = vsel %vm1029, %v1030, %v1028
    %v1032 = vclz %v1031
    %v1033 = vsub.s32 %v1032, 2
    %vm1034 = vcmp.gt.s32.totalorder 0, %v1033
    %v1035 = vsel %vm1034, 0, %v1033
    %v1036 = vsub.s32 32, %v1035
    %v1037 = vshll.u32 %v1028, %v1035
    %v1038 = vshrl.u32 %v1020, %v1036
    %v1039 = vor.u32 %v1037, %v1038
    %v1040 = vsub.s32 4294967266, %v1035
    %v1041 = vadd.s32 %v1040, 127
    %v1042 = vshll.u32 %v1041, 23
    %v1043 = vor.u32 4788187, %v1042
    %v1044 = vand.u32 2147483647, %v1043
    %v1046 = vcvt.s32.f32 %v1039
    %v1047 = vmul.f32 %v1046, %v1044
    %v1048 = vxor.u32 %v1047, 2147483648
    %v1049 = vsel %vm928, %v1048, %v1047
    %v1050 = vsub.s32 4, %v1026
    %v1051 = vsel %vm928, %v1050, %v1026
    %v1052 = vsel %vm927, %v602, %v1049
    %v1053 = vsel %vm927, 0, %v1051
    %v1054 = vmul.f32 %v1052, %v1052
    %v1055 = vmul.f32 %v1054, -0.001358992
    %v1056 = vadd.f32 %v1055, 0.041655596
    %v1057 = vmul.f32 %v1054, %v1056
    %v1058 = vadd.f32 %v1057, -0.4999988
    %v1059 = vmul.f32 %v1054, %v1058
    %v1060 = vadd.f32 1.0, %v1059
    %v1061 = vmul.f32 %v1052, %v1052
    %v1062 = vmul.f32 %v1061, -0.00019511016
    %v1063 = vadd.f32 %v1062, 0.008332121
    %v1064 = vmul.f32 %v1061, %v1063
    %v1065 = vadd.f32 %v1064, -0.16666654
    %v1066 = vmul.f32 %v1061, %v1065
    %v1067 = vadd.f32 %v1066, 1.0
    %v1068 = vmul.f32 %v1067, %v1052
    %vm1069 = vweird.f32 %v602
    %v1070 = vadd.s32 %v1053, 3
    %v1071 = vand.u32 %v1070, 3
    %vm1072 = vcmp.lt.s32.totalorder %v1071, 2
    %vm1073 = vcmp.eq.s32.totalorder %v1071, 0
    %v1074 = vxor.u32 %v1068, 2147483648
    %v1075 = vsel %vm1073, %v1060, %v1074
    %vm1076 = vcmp.eq.s32.totalorder %v1071, 2
    %v1077 = vxor.u32 %v1060, 2147483648
    %v1078 = vsel %vm1076, %v1077, %v1068
    %v1079 = vsel %vm1072, %v1075, %v1078
    %v1080 = vsel %vm1069, nan, %v1079
    %v1081 = vand.u32 2147483647, %v603
    %vm1082 = vcmp.le.f32.partialorder %v1081, 0.7853982
    %vm1083 = vcmp.lt.s32.totalorder %v603, 0
    %v1084 = vand.u32 %v603, 2139095040
    %v1085 = vshrl.u32 %v1084, 23
    %v1086 = vsub.s32 %v1085, 127
    %v1087 = vand.u32 2147483647, %v603
    %v1088 = vand.u32 %v1087, 8388607
    %v1089 = vor.u32 %v1088, 8388608
    %v1090 = vsub.s32 0, %v1089
    %v1091 = vadd.s32 %v1086, 1
    %vm1092 = vcmp.gt.s32.totalorder %v1091, 0
    %v1093 = vsel %vm1092, %v1091, 0
    %v1094 = vshrl.u32 %v1093, 5
    %v1095 = vand.u32 %v1093, 31
    %v1096 = vsub.s32 32, %v1095
    %v1097 = vshrl.u32 683565275, %v1096
    %v1098 = vshll.u32 683565275, %v1095
    %v1099 = vshrl.u32 2475754826, %v1096
    %v1100 = vor.u32 %v1098, %v1099
    %v1101 = vshll.u32 2475754826, %v1095
    %v1102 = vshrl.u32 2131351028, %v1096
    %v1103 = vor.u32 %v1101, %v1102
    %v1104 = vshll.u32 2131351028, %v1095
    %v1105 = vshrl.u32 2102212464, %v1096
    %v1106 = vor.u32 %v1104, %v1105
    %v1107 = vshll.u32 2102212464, %v1095
    %v1108 = vshrl.u32 920167782, %v1096
    %v1109 = vor.u32 %v1107, %v1108
    %v1110 = vshll.u32 920167782, %v1095
    %v1111 = vshrl.u32 1326507024, %v1096
    %v1112 = vor.u32 %v1110, %v1111
    %vm1113 = vcmp.lt.s32.totalorder %v1094, 1
    %vm1114 = vcmp.lt.s32.totalorder %v1094, 2
    %vm1115 = vcmp.lt.s32.totalorder %v1094, 3
    %vm1116 = vcmp.lt.s32.totalorder %v1094, 4
    %v1117 = vsel %vm1113, %v1097, %v1100
    %v1118 = vsel %vm1116, %v1106, 2102212464
    %v1119 = vsel %vm1115, %v1103, %v1118
    %v1120 = vsel %vm1114, %v1117, %v1119
    %v1121 = vsel %vm1113, %v1100, %v1103
    %v1122 = vsel %vm1116, %v1109, 920167782
    %v1123 = vsel %vm1115, %v1106, %v1122
    %v1124 = vsel %vm1114, %v1121, %v1123
    %v1125 = vsel %vm1113, %v1103, %v1106
    %v1126 = vsel %vm1116, %v1112, 1326507024
    %v1127 = vsel %vm1115, %v1109, %v1126
    %v1128 = vsel %vm1114, %v1125, %v1127
    %v1129 = vshll.u32 %v1089, 8
    %v1130 = vand.u32 %v1129, 65535
    %v1131 = vshrl.u32 %v1129, 16
    %v1132 = vand.u32 %v1128, 65535
    %v1133 = vshrl.u32 %v1128, 16
    %v1134 = vmul.u32 %v1130, %v1132
    %v1135 = vmul.u32 %v1130, %v1133
    %v1136 = vmul.u32 %v1131, %v1132
    %v1137 = vmul.u32 %v1131, %v1133
    %v1138 = vshll.u32 %v1135, 16
    %v1139 = vshrl.u32 %v1135, 16
    %v1140 = vshll.u32 %v1136, 16
    %v1141 = vshrl.u32 %v1136, 16
    %vm1142 = vc.u32 %v1134, %v1138
    %v1143 = vsel %vm1142, 1, 0
    %v1144 = vadd.s32 %v1134, %v1138
    %v1145 = vadd.s32 %v1137, %v1143
    %vm1146 = vc.u32 %v1144, %v1140
    %v1147 = vsel %vm1146, 1, 0
    %v1148 = vadd.s32 %v1144, %v1140
    %v1149 = vadd.s32 %v1145, %v1147
    %v1150 = vadd.s32 %v1149, %v1139
    %v1151 = vadd.s32 %v1150, %v1141
    %v1152 = vand.u32 %v1129, 65535
    %v1153 = vshrl.u32 %v1129, 16
    %v1154 = vand.u32 %v1124, 65535
    %v1155 = vshrl.u32 %v1124, 16
    %v1156 = vmul.u32 %v1152, %v1154
    %v1157 = vmul.u32 %v1152, %v1155
    %v1158 = vmul.u32 %v1153, %v1154
    %v1159 = vmul.u32 %v1153, %v1155
    %v1160 = vshll.u32 %v1157, 16
    %v1161 = vshrl.u32 %v1157, 16
    %v1162 = vshll.u32 %v1158, 16
    %v1163 = vshrl.u32 %v1158, 16
    %vm1164 = vc.u32 %v1156, %v1160
    %v1165 = vsel %vm1164, 1, 0
    %v1166 = vadd.s32 %v1156, %v1160
    %v1167 = vadd.s32 %v1159, %v1165
    %vm1168 = vc.u32 %v1166, %v1162
    %v1169 = vsel %vm1168, 1, 0
    %v1170 = vadd.s32 %v1166, %v1162
    %v1171 = vadd.s32 %v1167, %v1169
    %v1172 = vadd.s32 %v1171, %v1161
    %v1173 = vadd.s32 %v1172, %v1163
    %v1174 = vmul.u32 %v1129, %v1120
    %v1175 = vadd.s32 %v1151, %v1170
    %vm1176 = vc.u32 %v1151, %v1170
    %v1177 = vadd.s32 %v1173, 1
    %v1178 = vsel %vm1176, %v1177, %v1173
    %v1179 = vadd.s32 %v1174, %v1178
    %v1180 = vadd.s32 %v1179, 536870912
    %v1181 = vshrl.u32 %v1180, 30
    %v1182 = vshll.u32 %v1181, 30
    %v1183 = vsub.s32 %v1179, %v1182
    %vm1184 = vcmp.lt.s32.totalorder %v1183, 0
    %v1185 = vsub.s32 0, %v1183
    %v1186 = vsel %vm1184, %v1185, %v1183
    %v1187 = vclz %v1186
    %v1188 = vsub.s32 %v1187, 2
    %vm1189 = vcmp.gt.s32.totalorder 0, %v1188
    %v1190 = vsel %vm1189, 0, %v1188
    %v1191 = vsub.s32 32, %v1190
    %v1192 = vshll.u32 %v1183, %v1190
    %v1193 = vshrl.u32 %v1175, %v1191
    %v1194 = vor.u32 %v1192, %v1193
    %v1195 = vsub.s32 4294967266, %v1190
    %v1196 = vadd.s32 %v1195, 127
    %v1197 = vshll.u32 %v1196, 23
    %v1198 = vor.u32 4788187, %v1197
    %v1199 = vand.u32 2147483647, %v1198
    %v1201 = vcvt.s32.f32 %v1194
    %v1202 = vmul.f32 %v1201, %v1199
    %v1203 = vxor.u32 %v1202, 2147483648
    %v1204 = vsel %vm1083, %v1203, %v1202
    %v1205 = vsub.s32 4, %v1181
    %v1206 = vsel %vm1083, %v1205, %v1181
    %v1207 = vsel %vm1082, %v603, %v1204
    %v1208 = vsel %vm1082, 0, %v1206
    %v1209 = vmul.f32 %v1207, %v1207
    %v1210 = vmul.f32 %v1209, -0.001358992
    %v1211 = vadd.f32 %v1210, 0.041655596
    %v1212 = vmul.f32 %v1209, %v1211
    %v1213 = vadd.f32 %v1212, -0.4999988
    %v1214 = vmul.f32 %v1209, %v1213
    %v1215 = vadd.f32 1.0, %v1214
    %v1216 = vmul.f32 %v1207, %v1207
    %v1217 = vmul.f32 %v1216, -0.00019511016
    %v1218 = vadd.f32 %v1217, 0.008332121
    %v1219 = vmul.f32 %v1216, %v1218
    %v1220 = vadd.f32 %v1219, -0.16666654
    %v1221 = vmul.f32 %v1216, %v1220
    %v1222 = vadd.f32 %v1221, 1.0
    %v1223 = vmul.f32 %v1222, %v1207
    %vm1224 = vweird.f32 %v603
    %v1225 = vadd.s32 %v1208, 3
    %v1226 = vand.u32 %v1225, 3
    %vm1227 = vcmp.lt.s32.totalorder %v1226, 2
    %vm1228 = vcmp.eq.s32.totalorder %v1226, 0
    %v1229 = vxor.u32 %v1223, 2147483648
    %v1230 = vsel %vm1228, %v1215, %v1229
    %vm1231 = vcmp.eq.s32.totalorder %v1226, 2
    %v1232 = vxor.u32 %v1215, 2147483648
    %v1233 = vsel %vm1231, %v1232, %v1223
    %v1234 = vsel %vm1227, %v1230, %v1233
    %v1235 = vsel %vm1224, nan, %v1234
    %v1236 = vand.u32 2147483647, %v604
    %vm1237 = vcmp.le.f32.partialorder %v1236, 0.7853982
    %vm1238 = vcmp.lt.s32.totalorder %v604, 0
    %v1239 = vand.u32 %v604, 2139095040
    %v1240 = vshrl.u32 %v1239, 23
    %v1241 = vsub.s32 %v1240, 127
    %v1242 = vand.u32 2147483647, %v604
    %v1243 = vand.u32 %v1242, 8388607
    %v1244 = vor.u32 %v1243, 8388608
    %v1245 = vsub.s32 0, %v1244
    %v1246 = vadd.s32 %v1241, 1
    %vm1247 = vcmp.gt.s32.totalorder %v1246, 0
    %v1248 = vsel %vm1247, %v1246, 0
    %v1249 = vshrl.u32 %v1248, 5
    %v1250 = vand.u32 %v1248, 31
    %v1251 = vsub.s32 32, %v1250
    %v1252 = vshrl.u32 683565275, %v1251
    %v1253 = vshll.u32 683565275, %v1250
    %v1254 = vshrl.u32 2475754826, %v1251
    %v1255 = vor.u32 %v1253, %v1254
    %v1256 = vshll.u32 2475754826, %v1250
    %v1257 = vshrl.u32 2131351028, %v1251
    %v1258 = vor.u32 %v1256, %v1257
    %v1259 = vshll.u32 2131351028, %v1250
    %v1260 = vshrl.u32 2102212464, %v1251
    %v1261 = vor.u32 %v1259, %v1260
    %v1262 = vshll.u32 2102212464, %v1250
    %v1263 = vshrl.u32 920167782, %v1251
    %v1264 = vor.u32 %v1262, %v1263
    %v1265 = vshll.u32 920167782, %v1250
    %v1266 = vshrl.u32 1326507024, %v1251
    %v1267 = vor.u32 %v1265, %v1266
    %vm1268 = vcmp.lt.s32.totalorder %v1249, 1
    %vm1269 = vcmp.lt.s32.totalorder %v1249, 2
    %vm1270 = vcmp.lt.s32.totalorder %v1249, 3
    %vm1271 = vcmp.lt.s32.totalorder %v1249, 4
    %v1272 = vsel %vm1268, %v1252, %v1255
    %v1273 = vsel %vm1271, %v1261, 2102212464
    %v1274 = vsel %vm1270, %v1258, %v1273
    %v1275 = vsel %vm1269, %v1272, %v1274
    %v1276 = vsel %vm1268, %v1255, %v1258
    %v1277 = vsel %vm1271, %v1264, 920167782
    %v1278 = vsel %vm1270, %v1261, %v1277
    %v1279 = vsel %vm1269, %v1276, %v1278
    %v1280 = vsel %vm1268, %v1258, %v1261
    %v1281 = vsel %vm1271, %v1267, 1326507024
    %v1282 = vsel %vm1270, %v1264, %v1281
    %v1283 = vsel %vm1269, %v1280, %v1282
    %v1284 = vshll.u32 %v1244, 8
    %v1285 = vand.u32 %v1284, 65535
    %v1286 = vshrl.u32 %v1284, 16
    %v1287 = vand.u32 %v1283, 65535
    %v1288 = vshrl.u32 %v1283, 16
    %v1289 = vmul.u32 %v1285, %v1287
    %v1290 = vmul.u32 %v1285, %v1288
    %v1291 = vmul.u32 %v1286, %v1287
    %v1292 = vmul.u32 %v1286, %v1288
    %v1293 = vshll.u32 %v1290, 16
    %v1294 = vshrl.u32 %v1290, 16
    %v1295 = vshll.u32 %v1291, 16
    %v1296 = vshrl.u32 %v1291, 16
    %vm1297 = vc.u32 %v1289, %v1293
    %v1298 = vsel %vm1297, 1, 0
    %v1299 = vadd.s32 %v1289, %v1293
    %v1300 = vadd.s32 %v1292, %v1298
    %vm1301 = vc.u32 %v1299, %v1295
    %v1302 = vsel %vm1301, 1, 0
    %v1303 = vadd.s32 %v1299, %v1295
    %v1304 = vadd.s32 %v1300, %v1302
    %v1305 = vadd.s32 %v1304, %v1294
    %v1306 = vadd.s32 %v1305, %v1296
    %v1307 = vand.u32 %v1284, 65535
    %v1308 = vshrl.u32 %v1284, 16
    %v1309 = vand.u32 %v1279, 65535
    %v1310 = vshrl.u32 %v1279, 16
    %v1311 = vmul.u32 %v1307, %v1309
    %v1312 = vmul.u32 %v1307, %v1310
    %v1313 = vmul.u32 %v1308, %v1309
    %v1314 = vmul.u32 %v1308, %v1310
    %v1315 = vshll.u32 %v1312, 16
    %v1316 = vshrl.u32 %v1312, 16
    %v1317 = vshll.u32 %v1313, 16
    %v1318 = vshrl.u32 %v1313, 16
    %vm1319 = vc.u32 %v1311, %v1315
    %v1320 = vsel %vm1319, 1, 0
    %v1321 = vadd.s32 %v1311, %v1315
    %v1322 = vadd.s32 %v1314, %v1320
    %vm1323 = vc.u32 %v1321, %v1317
    %v1324 = vsel %vm1323, 1, 0
    %v1325 = vadd.s32 %v1321, %v1317
    %v1326 = vadd.s32 %v1322, %v1324
    %v1327 = vadd.s32 %v1326, %v1316
    %v1328 = vadd.s32 %v1327, %v1318
    %v1329 = vmul.u32 %v1284, %v1275
    %v1330 = vadd.s32 %v1306, %v1325
    %vm1331 = vc.u32 %v1306, %v1325
    %v1332 = vadd.s32 %v1328, 1
    %v1333 = vsel %vm1331, %v1332, %v1328
    %v1334 = vadd.s32 %v1329, %v1333
    %v1335 = vadd.s32 %v1334, 536870912
    %v1336 = vshrl.u32 %v1335, 30
    %v1337 = vshll.u32 %v1336, 30
    %v1338 = vsub.s32 %v1334, %v1337
    %vm1339 = vcmp.lt.s32.totalorder %v1338, 0
    %v1340 = vsub.s32 0, %v1338
    %v1341 = vsel %vm1339, %v1340, %v1338
    %v1342 = vclz %v1341
    %v1343 = vsub.s32 %v1342, 2
    %vm1344 = vcmp.gt.s32.totalorder 0, %v1343
    %v1345 = vsel %vm1344, 0, %v1343
    %v1346 = vsub.s32 32, %v1345
    %v1347 = vshll.u32 %v1338, %v1345
    %v1348 = vshrl.u32 %v1330, %v1346
    %v1349 = vor.u32 %v1347, %v1348
    %v1350 = vsub.s32 4294967266, %v1345
    %v1351 = vadd.s32 %v1350, 127
    %v1352 = vshll.u32 %v1351, 23
    %v1353 = vor.u32 4788187, %v1352
    %v1354 = vand.u32 2147483647, %v1353
    %v1356 = vcvt.s32.f32 %v1349
    %v1357 = vmul.f32 %v1356, %v1354
    %v1358 = vxor.u32 %v1357, 2147483648
    %v1359 = vsel %vm1238, %v1358, %v1357
    %v1360 = vsub.s32 4, %v1336
    %v1361 = vsel %vm1238, %v1360, %v1336
    %v1362 = vsel %vm1237, %v604, %v1359
    %v1363 = vsel %vm1237, 0, %v1361
    %v1364 = vmul.f32 %v1362, %v1362
    %v1365 = vmul.f32 %v1364, -0.001358992
    %v1366 = vadd.f32 %v1365, 0.041655596
    %v1367 = vmul.f32 %v1364, %v1366
    %v1368 = vadd.f32 %v1367, -0.4999988
    %v1369 = vmul.f32 %v1364, %v1368
    %v1370 = vadd.f32 1.0, %v1369
    %v1371 = vmul.f32 %v1362, %v1362
    %v1372 = vmul.f32 %v1371, -0.00019511016
    %v1373 = vadd.f32 %v1372, 0.008332121
    %v1374 = vmul.f32 %v1371, %v1373
    %v1375 = vadd.f32 %v1374, -0.16666654
    %v1376 = vmul.f32 %v1371, %v1375
    %v1377 = vadd.f32 %v1376, 1.0
    %v1378 = vmul.f32 %v1377, %v1362
    %vm1379 = vweird.f32 %v604
    %v1380 = vadd.s32 %v1363, 3
    %v1381 = vand.u32 %v1380, 3
    %vm1382 = vcmp.lt.s32.totalorder %v1381, 2
    %vm1383 = vcmp.eq.s32.totalorder %v1381, 0
    %v1384 = vxor.u32 %v1378, 2147483648
    %v1385 = vsel %vm1383, %v1370, %v1384
    %vm1386 = vcmp.eq.s32.totalorder %v1381, 2
    %v1387 = vxor.u32 %v1370, 2147483648
    %v1388 = vsel %vm1386, %v1387, %v1378
    %v1389 = vsel %vm1382, %v1385, %v1388
    %v1390 = vsel %vm1379, nan, %v1389
    %v1391 = vand.u32 2147483647, %v605
    %vm1392 = vcmp.le.f32.partialorder %v1391, 0.7853982
    %vm1393 = vcmp.lt.s32.totalorder %v605, 0
    %v1394 = vand.u32 %v605, 2139095040
    %v1395 = vshrl.u32 %v1394, 23
    %v1396 = vsub.s32 %v1395, 127
    %v1397 = vand.u32 2147483647, %v605
    %v1398 = vand.u32 %v1397, 8388607
    %v1399 = vor.u32 %v1398, 8388608
    %v1400 = vsub.s32 0, %v1399
    %v1401 = vadd.s32 %v1396, 1
    %vm1402 = vcmp.gt.s32.totalorder %v1401, 0
    %v1403 = vsel %vm1402, %v1401, 0
    %v1404 = vshrl.u32 %v1403, 5
    %v1405 = vand.u32 %v1403, 31
    %v1406 = vsub.s32 32, %v1405
    %v1407 = vshrl.u32 683565275, %v1406
    %v1408 = vshll.u32 683565275, %v1405
    %v1409 = vshrl.u32 2475754826, %v1406
    %v1410 = vor.u32 %v1408, %v1409
    %v1411 = vshll.u32 2475754826, %v1405
    %v1412 = vshrl.u32 2131351028, %v1406
    %v1413 = vor.u32 %v1411, %v1412
    %v1414 = vshll.u32 2131351028, %v1405
    %v1415 = vshrl.u32 2102212464, %v1406
    %v1416 = vor.u32 %v1414, %v1415
    %v1417 = vshll.u32 2102212464, %v1405
    %v1418 = vshrl.u32 920167782, %v1406
    %v1419 = vor.u32 %v1417, %v1418
    %v1420 = vshll.u32 920167782, %v1405
    %v1421 = vshrl.u32 1326507024, %v1406
    %v1422 = vor.u32 %v1420, %v1421
    %vm1423 = vcmp.lt.s32.totalorder %v1404, 1
    %vm1424 = vcmp.lt.s32.totalorder %v1404, 2
    %vm1425 = vcmp.lt.s32.totalorder %v1404, 3
    %vm1426 = vcmp.lt.s32.totalorder %v1404, 4
    %v1427 = vsel %vm1423, %v1407, %v1410
    %v1428 = vsel %vm1426, %v1416, 2102212464
    %v1429 = vsel %vm1425, %v1413, %v1428
    %v1430 = vsel %vm1424, %v1427, %v1429
    %v1431 = vsel %vm1423, %v1410, %v1413
    %v1432 = vsel %vm1426, %v1419, 920167782
    %v1433 = vsel %vm1425, %v1416, %v1432
    %v1434 = vsel %vm1424, %v1431, %v1433
    %v1435 = vsel %vm1423, %v1413, %v1416
    %v1436 = vsel %vm1426, %v1422, 1326507024
    %v1437 = vsel %vm1425, %v1419, %v1436
    %v1438 = vsel %vm1424, %v1435, %v1437
    %v1439 = vshll.u32 %v1399, 8
    %v1440 = vand.u32 %v1439, 65535
    %v1441 = vshrl.u32 %v1439, 16
    %v1442 = vand.u32 %v1438, 65535
    %v1443 = vshrl.u32 %v1438, 16
    %v1444 = vmul.u32 %v1440, %v1442
    %v1445 = vmul.u32 %v1440, %v1443
    %v1446 = vmul.u32 %v1441, %v1442
    %v1447 = vmul.u32 %v1441, %v1443
    %v1448 = vshll.u32 %v1445, 16
    %v1449 = vshrl.u32 %v1445, 16
    %v1450 = vshll.u32 %v1446, 16
    %v1451 = vshrl.u32 %v1446, 16
    %vm1452 = vc.u32 %v1444, %v1448
    %v1453 = vsel %vm1452, 1, 0
    %v1454 = vadd.s32 %v1444, %v1448
    %v1455 = vadd.s32 %v1447, %v1453
    %vm1456 = vc.u32 %v1454, %v1450
    %v1457 = vsel %vm1456, 1, 0
    %v1458 = vadd.s32 %v1454, %v1450
    %v1459 = vadd.s32 %v1455, %v1457
    %v1460 = vadd.s32 %v1459, %v1449
    %v1461 = vadd.s32 %v1460, %v1451
    %v1462 = vand.u32 %v1439, 65535
    %v1463 = vshrl.u32 %v1439, 16
    %v1464 = vand.u32 %v1434, 65535
    %v1465 = vshrl.u32 %v1434, 16
    %v1466 = vmul.u32 %v1462, %v1464
    %v1467 = vmul.u32 %v1462, %v1465
    %v1468 = vmul.u32 %v1463, %v1464
    %v1469 = vmul.u32 %v1463, %v1465
    %v1470 = vshll.u32 %v1467, 16
    %v1471 = vshrl.u32 %v1467, 16
    %v1472 = vshll.u32 %v1468, 16
    %v1473 = vshrl.u32 %v1468, 16
    %vm1474 = vc.u32 %v1466, %v1470
    %v1475 = vsel %vm1474, 1, 0
    %v1476 = vadd.s32 %v1466, %v1470
    %v1477 = vadd.s32 %v1469, %v1475
    %vm1478 = vc.u32 %v1476, %v1472
    %v1479 = vsel %vm1478, 1, 0
    %v1480 = vadd.s32 %v1476, %v1472
    %v1481 = vadd.s32 %v1477, %v1479
    %v1482 = vadd.s32 %v1481, %v1471
    %v1483 = vadd.s32 %v1482, %v1473
    %v1484 = vmul.u32 %v1439, %v1430
    %v1485 = vadd.s32 %v1461, %v1480
    %vm1486 = vc.u32 %v1461, %v1480
    %v1487 = vadd.s32 %v1483, 1
    %v1488 = vsel %vm1486, %v1487, %v1483
    %v1489 = vadd.s32 %v1484, %v1488
    %v1490 = vadd.s32 %v1489, 536870912
    %v1491 = vshrl.u32 %v1490, 30
    %v1492 = vshll.u32 %v1491, 30
    %v1493 = vsub.s32 %v1489, %v1492
    %vm1494 = vcmp.lt.s32.totalorder %v1493, 0
    %v1495 = vsub.s32 0, %v1493
    %v1496 = vsel %vm1494, %v1495, %v1493
    %v1497 = vclz %v1496
    %v1498 = vsub.s32 %v1497, 2
    %vm1499 = vcmp.gt.s32.totalorder 0, %v1498
    %v1500 = vsel %vm1499, 0, %v1498
    %v1501 = vsub.s32 32, %v1500
    %v1502 = vshll.u32 %v1493, %v1500
    %v1503 = vshrl.u32 %v1485, %v1501
    %v1504 = vor.u32 %v1502, %v1503
    %v1505 = vsub.s32 4294967266, %v1500
    %v1506 = vadd.s32 %v1505, 127
    %v1507 = vshll.u32 %v1506, 23
    %v1508 = vor.u32 4788187, %v1507
    %v1509 = vand.u32 2147483647, %v1508
    %v1511 = vcvt.s32.f32 %v1504
    %v1512 = vmul.f32 %v1511, %v1509
    %v1513 = vxor.u32 %v1512, 2147483648
    %v1514 = vsel %vm1393, %v1513, %v1512
    %v1515 = vsub.s32 4, %v1491
    %v1516 = vsel %vm1393, %v1515, %v1491
    %v1517 = vsel %vm1392, %v605, %v1514
    %v1518 = vsel %vm1392, 0, %v1516
    %v1519 = vmul.f32 %v1517, %v1517
    %v1520 = vmul.f32 %v1519, -0.001358992
    %v1521 = vadd.f32 %v1520, 0.041655596
    %v1522 = vmul.f32 %v1519, %v1521
    %v1523 = vadd.f32 %v1522, -0.4999988
    %v1524 = vmul.f32 %v1519, %v1523
    %v1525 = vadd.f32 1.0, %v1524
    %v1526 = vmul.f32 %v1517, %v1517
    %v1527 = vmul.f32 %v1526, -0.00019511016
    %v1528 = vadd.f32 %v1527, 0.008332121
    %v1529 = vmul.f32 %v1526, %v1528
    %v1530 = vadd.f32 %v1529, -0.16666654
    %v1531 = vmul.f32 %v1526, %v1530
    %v1532 = vadd.f32 %v1531, 1.0
    %v1533 = vmul.f32 %v1532, %v1517
    %vm1534 = vweird.f32 %v605
    %v1535 = vadd.s32 %v1518, 3
    %v1536 = vand.u32 %v1535, 3
    %vm1537 = vcmp.lt.s32.totalorder %v1536, 2
    %vm1538 = vcmp.eq.s32.totalorder %v1536, 0
    %v1539 = vxor.u32 %v1533, 2147483648
    %v1540 = vsel %vm1538, %v1525, %v1539
    %vm1541 = vcmp.eq.s32.totalorder %v1536, 2
    %v1542 = vxor.u32 %v1525, 2147483648
    %v1543 = vsel %vm1541, %v1542, %v1533
    %v1544 = vsel %vm1537, %v1540, %v1543
    %v1545 = vsel %vm1534, nan, %v1544
    %v1546 = vand.u32 2147483647, %v606
    %vm1547 = vcmp.le.f32.partialorder %v1546, 0.7853982
    %vm1548 = vcmp.lt.s32.totalorder %v606, 0
    %v1549 = vand.u32 %v606, 2139095040
    %v1550 = vshrl.u32 %v1549, 23
    %v1551 = vsub.s32 %v1550, 127
    %v1552 = vand.u32 2147483647, %v606
    %v1553 = vand.u32 %v1552, 8388607
    %v1554 = vor.u32 %v1553, 8388608
    %v1555 = vsub.s32 0, %v1554
    %v1556 = vadd.s32 %v1551, 1
    %vm1557 = vcmp.gt.s32.totalorder %v1556, 0
    %v1558 = vsel %vm1557, %v1556, 0
    %v1559 = vshrl.u32 %v1558, 5
    %v1560 = vand.u32 %v1558, 31
    %v1561 = vsub.s32 32, %v1560
    %v1562 = vshrl.u32 683565275, %v1561
    %v1563 = vshll.u32 683565275, %v1560
    %v1564 = vshrl.u32 2475754826, %v1561
    %v1565 = vor.u32 %v1563, %v1564
    %v1566 = vshll.u32 2475754826, %v1560
    %v1567 = vshrl.u32 2131351028, %v1561
    %v1568 = vor.u32 %v1566, %v1567
    %v1569 = vshll.u32 2131351028, %v1560
    %v1570 = vshrl.u32 2102212464, %v1561
    %v1571 = vor.u32 %v1569, %v1570
    %v1572 = vshll.u32 2102212464, %v1560
    %v1573 = vshrl.u32 920167782, %v1561
    %v1574 = vor.u32 %v1572, %v1573
    %v1575 = vshll.u32 920167782, %v1560
    %v1576 = vshrl.u32 1326507024, %v1561
    %v1577 = vor.u32 %v1575, %v1576
    %vm1578 = vcmp.lt.s32.totalorder %v1559, 1
    %vm1579 = vcmp.lt.s32.totalorder %v1559, 2
    %vm1580 = vcmp.lt.s32.totalorder %v1559, 3
    %vm1581 = vcmp.lt.s32.totalorder %v1559, 4
    %v1582 = vsel %vm1578, %v1562, %v1565
    %v1583 = vsel %vm1581, %v1571, 2102212464
    %v1584 = vsel %vm1580, %v1568, %v1583
    %v1585 = vsel %vm1579, %v1582, %v1584
    %v1586 = vsel %vm1578, %v1565, %v1568
    %v1587 = vsel %vm1581, %v1574, 920167782
    %v1588 = vsel %vm1580, %v1571, %v1587
    %v1589 = vsel %vm1579, %v1586, %v1588
    %v1590 = vsel %vm1578, %v1568, %v1571
    %v1591 = vsel %vm1581, %v1577, 1326507024
    %v1592 = vsel %vm1580, %v1574, %v1591
    %v1593 = vsel %vm1579, %v1590, %v1592
    %v1594 = vshll.u32 %v1554, 8
    %v1595 = vand.u32 %v1594, 65535
    %v1596 = vshrl.u32 %v1594, 16
    %v1597 = vand.u32 %v1593, 65535
    %v1598 = vshrl.u32 %v1593, 16
    %v1599 = vmul.u32 %v1595, %v1597
    %v1600 = vmul.u32 %v1595, %v1598
    %v1601 = vmul.u32 %v1596, %v1597
    %v1602 = vmul.u32 %v1596, %v1598
    %v1603 = vshll.u32 %v1600, 16
    %v1604 = vshrl.u32 %v1600, 16
    %v1605 = vshll.u32 %v1601, 16
    %v1606 = vshrl.u32 %v1601, 16
    %vm1607 = vc.u32 %v1599, %v1603
    %v1608 = vsel %vm1607, 1, 0
    %v1609 = vadd.s32 %v1599, %v1603
    %v1610 = vadd.s32 %v1602, %v1608
    %vm1611 = vc.u32 %v1609, %v1605
    %v1612 = vsel %vm1611, 1, 0
    %v1613 = vadd.s32 %v1609, %v1605
    %v1614 = vadd.s32 %v1610, %v1612
    %v1615 = vadd.s32 %v1614, %v1604
    %v1616 = vadd.s32 %v1615, %v1606
    %v1617 = vand.u32 %v1594, 65535
    %v1618 = vshrl.u32 %v1594, 16
    %v1619 = vand.u32 %v1589, 65535
    %v1620 = vshrl.u32 %v1589, 16
    %v1621 = vmul.u32 %v1617, %v1619
    %v1622 = vmul.u32 %v1617, %v1620
    %v1623 = vmul.u32 %v1618, %v1619
    %v1624 = vmul.u32 %v1618, %v1620
    %v1625 = vshll.u32 %v1622, 16
    %v1626 = vshrl.u32 %v1622, 16
    %v1627 = vshll.u32 %v1623, 16
    %v1628 = vshrl.u32 %v1623, 16
    %vm1629 = vc.u32 %v1621, %v1625
    %v1630 = vsel %vm1629, 1, 0
    %v1631 = vadd.s32 %v1621, %v1625
    %v1632 = vadd.s32 %v1624, %v1630
    %vm1633 = vc.u32 %v1631, %v1627
    %v1634 = vsel %vm1633, 1, 0
    %v1635 = vadd.s32 %v1631, %v1627
    %v1636 = vadd.s32 %v1632, %v1634
    %v1637 = vadd.s32 %v1636, %v1626
    %v1638 = vadd.s32 %v1637, %v1628
    %v1639 = vmul.u32 %v1594, %v1585
    %v1640 = vadd.s32 %v1616, %v1635
    %vm1641 = vc.u32 %v1616, %v1635
    %v1642 = vadd.s32 %v1638, 1
    %v1643 = vsel %vm1641, %v1642, %v1638
    %v1644 = vadd.s32 %v1639, %v1643
    %v1645 = vadd.s32 %v1644, 536870912
    %v1646 = vshrl.u32 %v1645, 30
    %v1647 = vshll.u32 %v1646, 30
    %v1648 = vsub.s32 %v1644, %v1647
    %vm1649 = vcmp.lt.s32.totalorder %v1648, 0
    %v1650 = vsub.s32 0, %v1648
    %v1651 = vsel %vm1649, %v1650, %v1648
    %v1652 = vclz %v1651
    %v1653 = vsub.s32 %v1652, 2
    %vm1654 = vcmp.gt.s32.totalorder 0, %v1653
    %v1655 = vsel %vm1654, 0, %v1653
    %v1656 = vsub.s32 32, %v1655
    %v1657 = vshll.u32 %v1648, %v1655
    %v1658 = vshrl.u32 %v1640, %v1656
    %v1659 = vor.u32 %v1657, %v1658
    %v1660 = vsub.s32 4294967266, %v1655
    %v1661 = vadd.s32 %v1660, 127
    %v1662 = vshll.u32 %v1661, 23
    %v1663 = vor.u32 4788187, %v1662
    %v1664 = vand.u32 2147483647, %v1663
    %v1666 = vcvt.s32.f32 %v1659
    %v1667 = vmul.f32 %v1666, %v1664
    %v1668 = vxor.u32 %v1667, 2147483648
    %v1669 = vsel %vm1548, %v1668, %v1667
    %v1670 = vsub.s32 4, %v1646
    %v1671 = vsel %vm1548, %v1670, %v1646
    %v1672 = vsel %vm1547, %v606, %v1669
    %v1673 = vsel %vm1547, 0, %v1671
    %v1674 = vmul.f32 %v1672, %v1672
    %v1675 = vmul.f32 %v1674, -0.001358992
    %v1676 = vadd.f32 %v1675, 0.041655596
    %v1677 = vmul.f32 %v1674, %v1676
    %v1678 = vadd.f32 %v1677, -0.4999988
    %v1679 = vmul.f32 %v1674, %v1678
    %v1680 = vadd.f32 1.0, %v1679
    %v1681 = vmul.f32 %v1672, %v1672
    %v1682 = vmul.f32 %v1681, -0.00019511016
    %v1683 = vadd.f32 %v1682, 0.008332121
    %v1684 = vmul.f32 %v1681, %v1683
    %v1685 = vadd.f32 %v1684, -0.16666654
    %v1686 = vmul.f32 %v1681, %v1685
    %v1687 = vadd.f32 %v1686, 1.0
    %v1688 = vmul.f32 %v1687, %v1672
    %vm1689 = vweird.f32 %v606
    %v1690 = vadd.s32 %v1673, 3
    %v1691 = vand.u32 %v1690, 3
    %vm1692 = vcmp.lt.s32.totalorder %v1691, 2
    %vm1693 = vcmp.eq.s32.totalorder %v1691, 0
    %v1694 = vxor.u32 %v1688, 2147483648
    %v1695 = vsel %vm1693, %v1680, %v1694
    %vm1696 = vcmp.eq.s32.totalorder %v1691, 2
    %v1697 = vxor.u32 %v1680, 2147483648
    %v1698 = vsel %vm1696, %v1697, %v1688
    %v1699 = vsel %vm1692, %v1695, %v1698
    %v1700 = vsel %vm1689, nan, %v1699
    %v1701 = vand.u32 2147483647, %v607
    %vm1702 = vcmp.le.f32.partialorder %v1701, 0.7853982
    %vm1703 = vcmp.lt.s32.totalorder %v607, 0
    %v1704 = vand.u32 %v607, 2139095040
    %v1705 = vshrl.u32 %v1704, 23
    %v1706 = vsub.s32 %v1705, 127
    %v1707 = vand.u32 2147483647, %v607
    %v1708 = vand.u32 %v1707, 8388607
    %v1709 = vor.u32 %v1708, 8388608
    %v1710 = vsub.s32 0, %v1709
    %v1711 = vadd.s32 %v1706, 1
    %vm1712 = vcmp.gt.s32.totalorder %v1711, 0
    %v1713 = vsel %vm1712, %v1711, 0
    %v1714 = vshrl.u32 %v1713, 5
    %v1715 = vand.u32 %v1713, 31
    %v1716 = vsub.s32 32, %v1715
    %v1717 = vshrl.u32 683565275, %v1716
    %v1718 = vshll.u32 683565275, %v1715
    %v1719 = vshrl.u32 2475754826, %v1716
    %v1720 = vor.u32 %v1718, %v1719
    %v1721 = vshll.u32 2475754826, %v1715
    %v1722 = vshrl.u32 2131351028, %v1716
    %v1723 = vor.u32 %v1721, %v1722
    %v1724 = vshll.u32 2131351028, %v1715
    %v1725 = vshrl.u32 2102212464, %v1716
    %v1726 = vor.u32 %v1724, %v1725
    %v1727 = vshll.u32 2102212464, %v1715
    %v1728 = vshrl.u32 920167782, %v1716
    %v1729 = vor.u32 %v1727, %v1728
    %v1730 = vshll.u32 920167782, %v1715
    %v1731 = vshrl.u32 1326507024, %v1716
    %v1732 = vor.u32 %v1730, %v1731
    %vm1733 = vcmp.lt.s32.totalorder %v1714, 1
    %vm1734 = vcmp.lt.s32.totalorder %v1714, 2
    %vm1735 = vcmp.lt.s32.totalorder %v1714, 3
    %vm1736 = vcmp.lt.s32.totalorder %v1714, 4
    %v1737 = vsel %vm1733, %v1717, %v1720
    %v1738 = vsel %vm1736, %v1726, 2102212464
    %v1739 = vsel %vm1735, %v1723, %v1738
    %v1740 = vsel %vm1734, %v1737, %v1739
    %v1741 = vsel %vm1733, %v1720, %v1723
    %v1742 = vsel %vm1736, %v1729, 920167782
    %v1743 = vsel %vm1735, %v1726, %v1742
    %v1744 = vsel %vm1734, %v1741, %v1743
    %v1745 = vsel %vm1733, %v1723, %v1726
    %v1746 = vsel %vm1736, %v1732, 1326507024
    %v1747 = vsel %vm1735, %v1729, %v1746
    %v1748 = vsel %vm1734, %v1745, %v1747
    %v1749 = vshll.u32 %v1709, 8
    %v1750 = vand.u32 %v1749, 65535
    %v1751 = vshrl.u32 %v1749, 16
    %v1752 = vand.u32 %v1748, 65535
    %v1753 = vshrl.u32 %v1748, 16
    %v1754 = vmul.u32 %v1750, %v1752
    %v1755 = vmul.u32 %v1750, %v1753
    %v1756 = vmul.u32 %v1751, %v1752
    %v1757 = vmul.u32 %v1751, %v1753
    %v1758 = vshll.u32 %v1755, 16
    %v1759 = vshrl.u32 %v1755, 16
    %v1760 = vshll.u32 %v1756, 16
    %v1761 = vshrl.u32 %v1756, 16
    %vm1762 = vc.u32 %v1754, %v1758
    %v1763 = vsel %vm1762, 1, 0
    %v1764 = vadd.s32 %v1754, %v1758
    %v1765 = vadd.s32 %v1757, %v1763
    %vm1766 = vc.u32 %v1764, %v1760
    %v1767 = vsel %vm1766, 1, 0
    %v1768 = vadd.s32 %v1764, %v1760
    %v1769 = vadd.s32 %v1765, %v1767
    %v1770 = vadd.s32 %v1769, %v1759
    %v1771 = vadd.s32 %v1770, %v1761
    %v1772 = vand.u32 %v1749, 65535
    %v1773 = vshrl.u32 %v1749, 16
    %v1774 = vand.u32 %v1744, 65535
    %v1775 = vshrl.u32 %v1744, 16
    %v1776 = vmul.u32 %v1772, %v1774
    %v1777 = vmul.u32 %v1772, %v1775
    %v1778 = vmul.u32 %v1773, %v1774
    %v1779 = vmul.u32 %v1773, %v1775
    %v1780 = vshll.u32 %v1777, 16
    %v1781 = vshrl.u32 %v1777, 16
    %v1782 = vshll.u32 %v1778, 16
    %v1783 = vshrl.u32 %v1778, 16
    %vm1784 = vc.u32 %v1776, %v1780
    %v1785 = vsel %vm1784, 1, 0
    %v1786 = vadd.s32 %v1776, %v1780
    %v1787 = vadd.s32 %v1779, %v1785
    %vm1788 = vc.u32 %v1786, %v1782
    %v1789 = vsel %vm1788, 1, 0
    %v1790 = vadd.s32 %v1786, %v1782
    %v1791 = vadd.s32 %v1787, %v1789
    %v1792 = vadd.s32 %v1791, %v1781
    %v1793 = vadd.s32 %v1792, %v1783
    %v1794 = vmul.u32 %v1749, %v1740
    %v1795 = vadd.s32 %v1771, %v1790
    %vm1796 = vc.u32 %v1771, %v1790
    %v1797 = vadd.s32 %v1793, 1
    %v1798 = vsel %vm1796, %v1797, %v1793
    %v1799 = vadd.s32 %v1794, %v1798
    %v1800 = vadd.s32 %v1799, 536870912
    %v1801 = vshrl.u32 %v1800, 30
    %v1802 = vshll.u32 %v1801, 30
    %v1803 = vsub.s32 %v1799, %v1802
    %vm1804 = vcmp.lt.s32.totalorder %v1803, 0
    %v1805 = vsub.s32 0, %v1803
    %v1806 = vsel %vm1804, %v1805, %v1803
    %v1807 = vclz %v1806
    %v1808 = vsub.s32 %v1807, 2
    %vm1809 = vcmp.gt.s32.totalorder 0, %v1808
    %v1810 = vsel %vm1809, 0, %v1808
    %v1811 = vsub.s32 32, %v1810
    %v1812 = vshll.u32 %v1803, %v1810
    %v1813 = vshrl.u32 %v1795, %v1811
    %v1814 = vor.u32 %v1812, %v1813
    %v1815 = vsub.s32 4294967266, %v1810
    %v1816 = vadd.s32 %v1815, 127
    %v1817 = vshll.u32 %v1816, 23
    %v1818 = vor.u32 4788187, %v1817
    %v1819 = vand.u32 2147483647, %v1818
    %v1821 = vcvt.s32.f32 %v1814
    %v1822 = vmul.f32 %v1821, %v1819
    %v1823 = vxor.u32 %v1822, 2147483648
    %v1824 = vsel %vm1703, %v1823, %v1822
    %v1825 = vsub.s32 4, %v1801
    %v1826 = vsel %vm1703, %v1825, %v1801
    %v1827 = vsel %vm1702, %v607, %v1824
    %v1828 = vsel %vm1702, 0, %v1826
    %v1829 = vmul.f32 %v1827, %v1827
    %v1830 = vmul.f32 %v1829, -0.001358992
    %v1831 = vadd.f32 %v1830, 0.041655596
    %v1832 = vmul.f32 %v1829, %v1831
    %v1833 = vadd.f32 %v1832, -0.4999988
    %v1834 = vmul.f32 %v1829, %v1833
    %v1835 = vadd.f32 1.0, %v1834
    %v1836 = vmul.f32 %v1827, %v1827
    %v1837 = vmul.f32 %v1836, -0.00019511016
    %v1838 = vadd.f32 %v1837, 0.008332121
    %v1839 = vmul.f32 %v1836, %v1838
    %v1840 = vadd.f32 %v1839, -0.16666654
    %v1841 = vmul.f32 %v1836, %v1840
    %v1842 = vadd.f32 %v1841, 1.0
    %v1843 = vmul.f32 %v1842, %v1827
    %vm1844 = vweird.f32 %v607
    %v1845 = vadd.s32 %v1828, 3
    %v1846 = vand.u32 %v1845, 3
    %vm1847 = vcmp.lt.s32.totalorder %v1846, 2
    %vm1848 = vcmp.eq.s32.totalorder %v1846, 0
    %v1849 = vxor.u32 %v1843, 2147483648
    %v1850 = vsel %vm1848, %v1835, %v1849
    %vm1851 = vcmp.eq.s32.totalorder %v1846, 2
    %v1852 = vxor.u32 %v1835, 2147483648
    %v1853 = vsel %vm1851, %v1852, %v1843
    %v1854 = vsel %vm1847, %v1850, %v1853
    %v1855 = vsel %vm1844, nan, %v1854
    %v1856 = vand.u32 2147483647, %v608
    %vm1857 = vcmp.le.f32.partialorder %v1856, 0.7853982
    %vm1858 = vcmp.lt.s32.totalorder %v608, 0
    %v1859 = vand.u32 %v608, 2139095040
    %v1860 = vshrl.u32 %v1859, 23
    %v1861 = vsub.s32 %v1860, 127
    %v1862 = vand.u32 2147483647, %v608
    %v1863 = vand.u32 %v1862, 8388607
    %v1864 = vor.u32 %v1863, 8388608
    %v1865 = vsub.s32 0, %v1864
    %v1866 = vadd.s32 %v1861, 1
    %vm1867 = vcmp.gt.s32.totalorder %v1866, 0
    %v1868 = vsel %vm1867, %v1866, 0
    %v1869 = vshrl.u32 %v1868, 5
    %v1870 = vand.u32 %v1868, 31
    %v1871 = vsub.s32 32, %v1870
    %v1872 = vshrl.u32 683565275, %v1871
    %v1873 = vshll.u32 683565275, %v1870
    %v1874 = vshrl.u32 2475754826, %v1871
    %v1875 = vor.u32 %v1873, %v1874
    %v1876 = vshll.u32 2475754826, %v1870
    %v1877 = vshrl.u32 2131351028, %v1871
    %v1878 = vor.u32 %v1876, %v1877
    %v1879 = vshll.u32 2131351028, %v1870
    %v1880 = vshrl.u32 2102212464, %v1871
    %v1881 = vor.u32 %v1879, %v1880
    %v1882 = vshll.u32 2102212464, %v1870
    %v1883 = vshrl.u32 920167782, %v1871
    %v1884 = vor.u32 %v1882, %v1883
    %v1885 = vshll.u32 920167782, %v1870
    %v1886 = vshrl.u32 1326507024, %v1871
    %v1887 = vor.u32 %v1885, %v1886
    %vm1888 = vcmp.lt.s32.totalorder %v1869, 1
    %vm1889 = vcmp.lt.s32.totalorder %v1869, 2
    %vm1890 = vcmp.lt.s32.totalorder %v1869, 3
    %vm1891 = vcmp.lt.s32.totalorder %v1869, 4
    %v1892 = vsel %vm1888, %v1872, %v1875
    %v1893 = vsel %vm1891, %v1881, 2102212464
    %v1894 = vsel %vm1890, %v1878, %v1893
    %v1895 = vsel %vm1889, %v1892, %v1894
    %v1896 = vsel %vm1888, %v1875, %v1878
    %v1897 = vsel %vm1891, %v1884, 920167782
    %v1898 = vsel %vm1890, %v1881, %v1897
    %v1899 = vsel %vm1889, %v1896, %v1898
    %v1900 = vsel %vm1888, %v1878, %v1881
    %v1901 = vsel %vm1891, %v1887, 1326507024
    %v1902 = vsel %vm1890, %v1884, %v1901
    %v1903 = vsel %vm1889, %v1900, %v1902
    %v1904 = vshll.u32 %v1864, 8
    %v1905 = vand.u32 %v1904, 65535
    %v1906 = vshrl.u32 %v1904, 16
    %v1907 = vand.u32 %v1903, 65535
    %v1908 = vshrl.u32 %v1903, 16
    %v1909 = vmul.u32 %v1905, %v1907
    %v1910 = vmul.u32 %v1905, %v1908
    %v1911 = vmul.u32 %v1906, %v1907
    %v1912 = vmul.u32 %v1906, %v1908
    %v1913 = vshll.u32 %v1910, 16
    %v1914 = vshrl.u32 %v1910, 16
    %v1915 = vshll.u32 %v1911, 16
    %v1916 = vshrl.u32 %v1911, 16
    %vm1917 = vc.u32 %v1909, %v1913
    %v1918 = vsel %vm1917, 1, 0
    %v1919 = vadd.s32 %v1909, %v1913
    %v1920 = vadd.s32 %v1912, %v1918
    %vm1921 = vc.u32 %v1919, %v1915
    %v1922 = vsel %vm1921, 1, 0
    %v1923 = vadd.s32 %v1919, %v1915
    %v1924 = vadd.s32 %v1920, %v1922
    %v1925 = vadd.s32 %v1924, %v1914
    %v1926 = vadd.s32 %v1925, %v1916
    %v1927 = vand.u32 %v1904, 65535
    %v1928 = vshrl.u32 %v1904, 16
    %v1929 = vand.u32 %v1899, 65535
    %v1930 = vshrl.u32 %v1899, 16
    %v1931 = vmul.u32 %v1927, %v1929
    %v1932 = vmul.u32 %v1927, %v1930
    %v1933 = vmul.u32 %v1928, %v1929
    %v1934 = vmul.u32 %v1928, %v1930
    %v1935 = vshll.u32 %v1932, 16
    %v1936 = vshrl.u32 %v1932, 16
    %v1937 = vshll.u32 %v1933, 16
    %v1938 = vshrl.u32 %v1933, 16
    %vm1939 = vc.u32 %v1931, %v1935
    %v1940 = vsel %vm1939, 1, 0
    %v1941 = vadd.s32 %v1931, %v1935
    %v1942 = vadd.s32 %v1934, %v1940
    %vm1943 = vc.u32 %v1941, %v1937
    %v1944 = vsel %vm1943, 1, 0
    %v1945 = vadd.s32 %v1941, %v1937
    %v1946 = vadd.s32 %v1942, %v1944
    %v1947 = vadd.s32 %v1946, %v1936
    %v1948 = vadd.s32 %v1947, %v1938
    %v1949 = vmul.u32 %v1904, %v1895
    %v1950 = vadd.s32 %v1926, %v1945
    %vm1951 = vc.u32 %v1926, %v1945
    %v1952 = vadd.s32 %v1948, 1
    %v1953 = vsel %vm1951, %v1952, %v1948
    %v1954 = vadd.s32 %v1949, %v1953
    %v1955 = vadd.s32 %v1954, 536870912
    %v1956 = vshrl.u32 %v1955, 30
    %v1957 = vshll.u32 %v1956, 30
    %v1958 = vsub.s32 %v1954, %v1957
    %vm1959 = vcmp.lt.s32.totalorder %v1958, 0
    %v1960 = vsub.s32 0, %v1958
    %v1961 = vsel %vm1959, %v1960, %v1958
    %v1962 = vclz %v1961
    %v1963 = vsub.s32 %v1962, 2
    %vm1964 = vcmp.gt.s32.totalorder 0, %v1963
    %v1965 = vsel %vm1964, 0, %v1963
    %v1966 = vsub.s32 32, %v1965
    %v1967 = vshll.u32 %v1958, %v1965
    %v1968 = vshrl.u32 %v1950, %v1966
    %v1969 = vor.u32 %v1967, %v1968
    %v1970 = vsub.s32 4294967266, %v1965
    %v1971 = vadd.s32 %v1970, 127
    %v1972 = vshll.u32 %v1971, 23
    %v1973 = vor.u32 4788187, %v1972
    %v1974 = vand.u32 2147483647, %v1973
    %v1976 = vcvt.s32.f32 %v1969
    %v1977 = vmul.f32 %v1976, %v1974
    %v1978 = vxor.u32 %v1977, 2147483648
    %v1979 = vsel %vm1858, %v1978, %v1977
    %v1980 = vsub.s32 4, %v1956
    %v1981 = vsel %vm1858, %v1980, %v1956
    %v1982 = vsel %vm1857, %v608, %v1979
    %v1983 = vsel %vm1857, 0, %v1981
    %v1984 = vmul.f32 %v1982, %v1982
    %v1985 = vmul.f32 %v1984, -0.001358992
    %v1986 = vadd.f32 %v1985, 0.041655596
    %v1987 = vmul.f32 %v1984, %v1986
    %v1988 = vadd.f32 %v1987, -0.4999988
    %v1989 = vmul.f32 %v1984, %v1988
    %v1990 = vadd.f32 1.0, %v1989
    %v1991 = vmul.f32 %v1982, %v1982
    %v1992 = vmul.f32 %v1991, -0.00019511016
    %v1993 = vadd.f32 %v1992, 0.008332121
    %v1994 = vmul.f32 %v1991, %v1993
    %v1995 = vadd.f32 %v1994, -0.16666654
    %v1996 = vmul.f32 %v1991, %v1995
    %v1997 = vadd.f32 %v1996, 1.0
    %v1998 = vmul.f32 %v1997, %v1982
    %vm1999 = vweird.f32 %v608
    %v2000 = vadd.s32 %v1983, 3
    %v2001 = vand.u32 %v2000, 3
    %vm2002 = vcmp.lt.s32.totalorder %v2001, 2
    %vm2003 = vcmp.eq.s32.totalorder %v2001, 0
    %v2004 = vxor.u32 %v1998, 2147483648
    %v2005 = vsel %vm2003, %v1990, %v2004
    %vm2006 = vcmp.eq.s32.totalorder %v2001, 2
    %v2007 = vxor.u32 %v1990, 2147483648
    %v2008 = vsel %vm2006, %v2007, %v1998
    %v2009 = vsel %vm2002, %v2005, %v2008
    %v2010 = vsel %vm1999, nan, %v2009
    %v2011 = vand.u32 2147483647, %v609
    %vm2012 = vcmp.le.f32.partialorder %v2011, 0.7853982
    %vm2013 = vcmp.lt.s32.totalorder %v609, 0
    %v2014 = vand.u32 %v609, 2139095040
    %v2015 = vshrl.u32 %v2014, 23
    %v2016 = vsub.s32 %v2015, 127
    %v2017 = vand.u32 2147483647, %v609
    %v2018 = vand.u32 %v2017, 8388607
    %v2019 = vor.u32 %v2018, 8388608
    %v2020 = vsub.s32 0, %v2019
    %v2021 = vadd.s32 %v2016, 1
    %vm2022 = vcmp.gt.s32.totalorder %v2021, 0
    %v2023 = vsel %vm2022, %v2021, 0
    %v2024 = vshrl.u32 %v2023, 5
    %v2025 = vand.u32 %v2023, 31
    %v2026 = vsub.s32 32, %v2025
    %v2027 = vshrl.u32 683565275, %v2026
    %v2028 = vshll.u32 683565275, %v2025
    %v2029 = vshrl.u32 2475754826, %v2026
    %v2030 = vor.u32 %v2028, %v2029
    %v2031 = vshll.u32 2475754826, %v2025
    %v2032 = vshrl.u32 2131351028, %v2026
    %v2033 = vor.u32 %v2031, %v2032
    %v2034 = vshll.u32 2131351028, %v2025
    %v2035 = vshrl.u32 2102212464, %v2026
    %v2036 = vor.u32 %v2034, %v2035
    %v2037 = vshll.u32 2102212464, %v2025
    %v2038 = vshrl.u32 920167782, %v2026
    %v2039 = vor.u32 %v2037, %v2038
    %v2040 = vshll.u32 920167782, %v2025
    %v2041 = vshrl.u32 1326507024, %v2026
    %v2042 = vor.u32 %v2040, %v2041
    %vm2043 = vcmp.lt.s32.totalorder %v2024, 1
    %vm2044 = vcmp.lt.s32.totalorder %v2024, 2
    %vm2045 = vcmp.lt.s32.totalorder %v2024, 3
    %vm2046 = vcmp.lt.s32.totalorder %v2024, 4
    %v2047 = vsel %vm2043, %v2027, %v2030
    %v2048 = vsel %vm2046, %v2036, 2102212464
    %v2049 = vsel %vm2045, %v2033, %v2048
    %v2050 = vsel %vm2044, %v2047, %v2049
    %v2051 = vsel %vm2043, %v2030, %v2033
    %v2052 = vsel %vm2046, %v2039, 920167782
    %v2053 = vsel %vm2045, %v2036, %v2052
    %v2054 = vsel %vm2044, %v2051, %v2053
    %v2055 = vsel %vm2043, %v2033, %v2036
    %v2056 = vsel %vm2046, %v2042, 1326507024
    %v2057 = vsel %vm2045, %v2039, %v2056
    %v2058 = vsel %vm2044, %v2055, %v2057
    %v2059 = vshll.u32 %v2019, 8
    %v2060 = vand.u32 %v2059, 65535
    %v2061 = vshrl.u32 %v2059, 16
    %v2062 = vand.u32 %v2058, 65535
    %v2063 = vshrl.u32 %v2058, 16
    %v2064 = vmul.u32 %v2060, %v2062
    %v2065 = vmul.u32 %v2060, %v2063
    %v2066 = vmul.u32 %v2061, %v2062
    %v2067 = vmul.u32 %v2061, %v2063
    %v2068 = vshll.u32 %v2065, 16
    %v2069 = vshrl.u32 %v2065, 16
    %v2070 = vshll.u32 %v2066, 16
    %v2071 = vshrl.u32 %v2066, 16
    %vm2072 = vc.u32 %v2064, %v2068
    %v2073 = vsel %vm2072, 1, 0
    %v2074 = vadd.s32 %v2064, %v2068
    %v2075 = vadd.s32 %v2067, %v2073
    %vm2076 = vc.u32 %v2074, %v2070
    %v2077 = vsel %vm2076, 1, 0
    %v2078 = vadd.s32 %v2074, %v2070
    %v2079 = vadd.s32 %v2075, %v2077
    %v2080 = vadd.s32 %v2079, %v2069
    %v2081 = vadd.s32 %v2080, %v2071
    %v2082 = vand.u32 %v2059, 65535
    %v2083 = vshrl.u32 %v2059, 16
    %v2084 = vand.u32 %v2054, 65535
    %v2085 = vshrl.u32 %v2054, 16
    %v2086 = vmul.u32 %v2082, %v2084
    %v2087 = vmul.u32 %v2082, %v2085
    %v2088 = vmul.u32 %v2083, %v2084
    %v2089 = vmul.u32 %v2083, %v2085
    %v2090 = vshll.u32 %v2087, 16
    %v2091 = vshrl.u32 %v2087, 16
    %v2092 = vshll.u32 %v2088, 16
    %v2093 = vshrl.u32 %v2088, 16
    %vm2094 = vc.u32 %v2086, %v2090
    %v2095 = vsel %vm2094, 1, 0
    %v2096 = vadd.s32 %v2086, %v2090
    %v2097 = vadd.s32 %v2089, %v2095
    %vm2098 = vc.u32 %v2096, %v2092
    %v2099 = vsel %vm2098, 1, 0
    %v2100 = vadd.s32 %v2096, %v2092
    %v2101 = vadd.s32 %v2097, %v2099
    %v2102 = vadd.s32 %v2101, %v2091
    %v2103 = vadd.s32 %v2102, %v2093
    %v2104 = vmul.u32 %v2059, %v2050
    %v2105 = vadd.s32 %v2081, %v2100
    %vm2106 = vc.u32 %v2081, %v2100
    %v2107 = vadd.s32 %v2103, 1
    %v2108 = vsel %vm2106, %v2107, %v2103
    %v2109 = vadd.s32 %v2104, %v2108
    %v2110 = vadd.s32 %v2109, 536870912
    %v2111 = vshrl.u32 %v2110, 30
    %v2112 = vshll.u32 %v2111, 30
    %v2113 = vsub.s32 %v2109, %v2112
    %vm2114 = vcmp.lt.s32.totalorder %v2113, 0
    %v2115 = vsub.s32 0, %v2113
    %v2116 = vsel %vm2114, %v2115, %v2113
    %v2117 = vclz %v2116
    %v2118 = vsub.s32 %v2117, 2
    %vm2119 = vcmp.gt.s32.totalorder 0, %v2118
    %v2120 = vsel %vm2119, 0, %v2118
    %v2121 = vsub.s32 32, %v2120
    %v2122 = vshll.u32 %v2113, %v2120
    %v2123 = vshrl.u32 %v2105, %v2121
    %v2124 = vor.u32 %v2122, %v2123
    %v2125 = vsub.s32 4294967266, %v2120
    %v2126 = vadd.s32 %v2125, 127
    %v2127 = vshll.u32 %v2126, 23
    %v2128 = vor.u32 4788187, %v2127
    %v2129 = vand.u32 2147483647, %v2128
    %v2131 = vcvt.s32.f32 %v2124
    %v2132 = vmul.f32 %v2131, %v2129
    %v2133 = vxor.u32 %v2132, 2147483648
    %v2134 = vsel %vm2013, %v2133, %v2132
    %v2135 = vsub.s32 4, %v2111
    %v2136 = vsel %vm2013, %v2135, %v2111
    %v2137 = vsel %vm2012, %v609, %v2134
    %v2138 = vsel %vm2012, 0, %v2136
    %v2139 = vmul.f32 %v2137, %v2137
    %v2140 = vmul.f32 %v2139, -0.001358992
    %v2141 = vadd.f32 %v2140, 0.041655596
    %v2142 = vmul.f32 %v2139, %v2141
    %v2143 = vadd.f32 %v2142, -0.4999988
    %v2144 = vmul.f32 %v2139, %v2143
    %v2145 = vadd.f32 1.0, %v2144
    %v2146 = vmul.f32 %v2137, %v2137
    %v2147 = vmul.f32 %v2146, -0.00019511016
    %v2148 = vadd.f32 %v2147, 0.008332121
    %v2149 = vmul.f32 %v2146, %v2148
    %v2150 = vadd.f32 %v2149, -0.16666654
    %v2151 = vmul.f32 %v2146, %v2150
    %v2152 = vadd.f32 %v2151, 1.0
    %v2153 = vmul.f32 %v2152, %v2137
    %vm2154 = vweird.f32 %v609
    %v2155 = vadd.s32 %v2138, 3
    %v2156 = vand.u32 %v2155, 3
    %vm2157 = vcmp.lt.s32.totalorder %v2156, 2
    %vm2158 = vcmp.eq.s32.totalorder %v2156, 0
    %v2159 = vxor.u32 %v2153, 2147483648
    %v2160 = vsel %vm2158, %v2145, %v2159
    %vm2161 = vcmp.eq.s32.totalorder %v2156, 2
    %v2162 = vxor.u32 %v2145, 2147483648
    %v2163 = vsel %vm2161, %v2162, %v2153
    %v2164 = vsel %vm2157, %v2160, %v2163
    %v2165 = vsel %vm2154, nan, %v2164
    %v2166 = vand.u32 2147483647, %v610
    %vm2167 = vcmp.le.f32.partialorder %v2166, 0.7853982
    %vm2168 = vcmp.lt.s32.totalorder %v610, 0
    %v2169 = vand.u32 %v610, 2139095040
    %v2170 = vshrl.u32 %v2169, 23
    %v2171 = vsub.s32 %v2170, 127
    %v2172 = vand.u32 2147483647, %v610
    %v2173 = vand.u32 %v2172, 8388607
    %v2174 = vor.u32 %v2173, 8388608
    %v2175 = vsub.s32 0, %v2174
    %v2176 = vadd.s32 %v2171, 1
    %vm2177 = vcmp.gt.s32.totalorder %v2176, 0
    %v2178 = vsel %vm2177, %v2176, 0
    %v2179 = vshrl.u32 %v2178, 5
    %v2180 = vand.u32 %v2178, 31
    %v2181 = vsub.s32 32, %v2180
    %v2182 = vshrl.u32 683565275, %v2181
    %v2183 = vshll.u32 683565275, %v2180
    %v2184 = vshrl.u32 2475754826, %v2181
    %v2185 = vor.u32 %v2183, %v2184
    %v2186 = vshll.u32 2475754826, %v2180
    %v2187 = vshrl.u32 2131351028, %v2181
    %v2188 = vor.u32 %v2186, %v2187
    %v2189 = vshll.u32 2131351028, %v2180
    %v2190 = vshrl.u32 2102212464, %v2181
    %v2191 = vor.u32 %v2189, %v2190
    %v2192 = vshll.u32 2102212464, %v2180
    %v2193 = vshrl.u32 920167782, %v2181
    %v2194 = vor.u32 %v2192, %v2193
    %v2195 = vshll.u32 920167782, %v2180
    %v2196 = vshrl.u32 1326507024, %v2181
    %v2197 = vor.u32 %v2195, %v2196
    %vm2198 = vcmp.lt.s32.totalorder %v2179, 1
    %vm2199 = vcmp.lt.s32.totalorder %v2179, 2
    %vm2200 = vcmp.lt.s32.totalorder %v2179, 3
    %vm2201 = vcmp.lt.s32.totalorder %v2179, 4
    %v2202 = vsel %vm2198, %v2182, %v2185
    %v2203 = vsel %vm2201, %v2191, 2102212464
    %v2204 = vsel %vm2200, %v2188, %v2203
    %v2205 = vsel %vm2199, %v2202, %v2204
    %v2206 = vsel %vm2198, %v2185, %v2188
    %v2207 = vsel %vm2201, %v2194, 920167782
    %v2208 = vsel %vm2200, %v2191, %v2207
    %v2209 = vsel %vm2199, %v2206, %v2208
    %v2210 = vsel %vm2198, %v2188, %v2191
    %v2211 = vsel %vm2201, %v2197, 1326507024
    %v2212 = vsel %vm2200, %v2194, %v2211
    %v2213 = vsel %vm2199, %v2210, %v2212
    %v2214 = vshll.u32 %v2174, 8
    %v2215 = vand.u32 %v2214, 65535
    %v2216 = vshrl.u32 %v2214, 16
    %v2217 = vand.u32 %v2213, 65535
    %v2218 = vshrl.u32 %v2213, 16
    %v2219 = vmul.u32 %v2215, %v2217
    %v2220 = vmul.u32 %v2215, %v2218
    %v2221 = vmul.u32 %v2216, %v2217
    %v2222 = vmul.u32 %v2216, %v2218
    %v2223 = vshll.u32 %v2220, 16
    %v2224 = vshrl.u32 %v2220, 16
    %v2225 = vshll.u32 %v2221, 16
    %v2226 = vshrl.u32 %v2221, 16
    %vm2227 = vc.u32 %v2219, %v2223
    %v2228 = vsel %vm2227, 1, 0
    %v2229 = vadd.s32 %v2219, %v2223
    %v2230 = vadd.s32 %v2222, %v2228
    %vm2231 = vc.u32 %v2229, %v2225
    %v2232 = vsel %vm2231, 1, 0
    %v2233 = vadd.s32 %v2229, %v2225
    %v2234 = vadd.s32 %v2230, %v2232
    %v2235 = vadd.s32 %v2234, %v2224
    %v2236 = vadd.s32 %v2235, %v2226
    %v2237 = vand.u32 %v2214, 65535
    %v2238 = vshrl.u32 %v2214, 16
    %v2239 = vand.u32 %v2209, 65535
    %v2240 = vshrl.u32 %v2209, 16
    %v2241 = vmul.u32 %v2237, %v2239
    %v2242 = vmul.u32 %v2237, %v2240
    %v2243 = vmul.u32 %v2238, %v2239
    %v2244 = vmul.u32 %v2238, %v2240
    %v2245 = vshll.u32 %v2242, 16
    %v2246 = vshrl.u32 %v2242, 16
    %v2247 = vshll.u32 %v2243, 16
    %v2248 = vshrl.u32 %v2243, 16
    %vm2249 = vc.u32 %v2241, %v2245
    %v2250 = vsel %vm2249, 1, 0
    %v2251 = vadd.s32 %v2241, %v2245
    %v2252 = vadd.s32 %v2244, %v2250
    %vm2253 = vc.u32 %v2251, %v2247
    %v2254 = vsel %vm2253, 1, 0
    %v2255 = vadd.s32 %v2251, %v2247
    %v2256 = vadd.s32 %v2252, %v2254
    %v2257 = vadd.s32 %v2256, %v2246
    %v2258 = vadd.s32 %v2257, %v2248
    %v2259 = vmul.u32 %v2214, %v2205
    %v2260 = vadd.s32 %v2236, %v2255
    %vm2261 = vc.u32 %v2236, %v2255
    %v2262 = vadd.s32 %v2258, 1
    %v2263 = vsel %vm2261, %v2262, %v2258
    %v2264 = vadd.s32 %v2259, %v2263
    %v2265 = vadd.s32 %v2264, 536870912
    %v2266 = vshrl.u32 %v2265, 30
    %v2267 = vshll.u32 %v2266, 30
    %v2268 = vsub.s32 %v2264, %v2267
    %vm2269 = vcmp.lt.s32.totalorder %v2268, 0
    %v2270 = vsub.s32 0, %v2268
    %v2271 = vsel %vm2269, %v2270, %v2268
    %v2272 = vclz %v2271
    %v2273 = vsub.s32 %v2272, 2
    %vm2274 = vcmp.gt.s32.totalorder 0, %v2273
    %v2275 = vsel %vm2274, 0, %v2273
    %v2276 = vsub.s32 32, %v2275
    %v2277 = vshll.u32 %v2268, %v2275
    %v2278 = vshrl.u32 %v2260, %v2276
    %v2279 = vor.u32 %v2277, %v2278
    %v2280 = vsub.s32 4294967266, %v2275
    %v2281 = vadd.s32 %v2280, 127
    %v2282 = vshll.u32 %v2281, 23
    %v2283 = vor.u32 4788187, %v2282
    %v2284 = vand.u32 2147483647, %v2283
    %v2286 = vcvt.s32.f32 %v2279
    %v2287 = vmul.f32 %v2286, %v2284
    %v2288 = vxor.u32 %v2287, 2147483648
    %v2289 = vsel %vm2168, %v2288, %v2287
    %v2290 = vsub.s32 4, %v2266
    %v2291 = vsel %vm2168, %v2290, %v2266
    %v2292 = vsel %vm2167, %v610, %v2289
    %v2293 = vsel %vm2167, 0, %v2291
    %v2294 = vmul.f32 %v2292, %v2292
    %v2295 = vmul.f32 %v2294, -0.001358992
    %v2296 = vadd.f32 %v2295, 0.041655596
    %v2297 = vmul.f32 %v2294, %v2296
    %v2298 = vadd.f32 %v2297, -0.4999988
    %v2299 = vmul.f32 %v2294, %v2298
    %v2300 = vadd.f32 1.0, %v2299
    %v2301 = vmul.f32 %v2292, %v2292
    %v2302 = vmul.f32 %v2301, -0.00019511016
    %v2303 = vadd.f32 %v2302, 0.008332121
    %v2304 = vmul.f32 %v2301, %v2303
    %v2305 = vadd.f32 %v2304, -0.16666654
    %v2306 = vmul.f32 %v2301, %v2305
    %v2307 = vadd.f32 %v2306, 1.0
    %v2308 = vmul.f32 %v2307, %v2292
    %vm2309 = vweird.f32 %v610
    %v2310 = vadd.s32 %v2293, 3
    %v2311 = vand.u32 %v2310, 3
    %vm2312 = vcmp.lt.s32.totalorder %v2311, 2
    %vm2313 = vcmp.eq.s32.totalorder %v2311, 0
    %v2314 = vxor.u32 %v2308, 2147483648
    %v2315 = vsel %vm2313, %v2300, %v2314
    %vm2316 = vcmp.eq.s32.totalorder %v2311, 2
    %v2317 = vxor.u32 %v2300, 2147483648
    %v2318 = vsel %vm2316, %v2317, %v2308
    %v2319 = vsel %vm2312, %v2315, %v2318
    %v2320 = vsel %vm2309, nan, %v2319
    %v2321 = vand.u32 2147483647, %v611
    %vm2322 = vcmp.le.f32.partialorder %v2321, 0.7853982
    %vm2323 = vcmp.lt.s32.totalorder %v611, 0
    %v2324 = vand.u32 %v611, 2139095040
    %v2325 = vshrl.u32 %v2324, 23
    %v2326 = vsub.s32 %v2325, 127
    %v2327 = vand.u32 2147483647, %v611
    %v2328 = vand.u32 %v2327, 8388607
    %v2329 = vor.u32 %v2328, 8388608
    %v2330 = vsub.s32 0, %v2329
    %v2331 = vadd.s32 %v2326, 1
    %vm2332 = vcmp.gt.s32.totalorder %v2331, 0
    %v2333 = vsel %vm2332, %v2331, 0
    %v2334 = vshrl.u32 %v2333, 5
    %v2335 = vand.u32 %v2333, 31
    %v2336 = vsub.s32 32, %v2335
    %v2337 = vshrl.u32 683565275, %v2336
    %v2338 = vshll.u32 683565275, %v2335
    %v2339 = vshrl.u32 2475754826, %v2336
    %v2340 = vor.u32 %v2338, %v2339
    %v2341 = vshll.u32 2475754826, %v2335
    %v2342 = vshrl.u32 2131351028, %v2336
    %v2343 = vor.u32 %v2341, %v2342
    %v2344 = vshll.u32 2131351028, %v2335
    %v2345 = vshrl.u32 2102212464, %v2336
    %v2346 = vor.u32 %v2344, %v2345
    %v2347 = vshll.u32 2102212464, %v2335
    %v2348 = vshrl.u32 920167782, %v2336
    %v2349 = vor.u32 %v2347, %v2348
    %v2350 = vshll.u32 920167782, %v2335
    %v2351 = vshrl.u32 1326507024, %v2336
    %v2352 = vor.u32 %v2350, %v2351
    %vm2353 = vcmp.lt.s32.totalorder %v2334, 1
    %vm2354 = vcmp.lt.s32.totalorder %v2334, 2
    %vm2355 = vcmp.lt.s32.totalorder %v2334, 3
    %vm2356 = vcmp.lt.s32.totalorder %v2334, 4
    %v2357 = vsel %vm2353, %v2337, %v2340
    %v2358 = vsel %vm2356, %v2346, 2102212464
    %v2359 = vsel %vm2355, %v2343, %v2358
    %v2360 = vsel %vm2354, %v2357, %v2359
    %v2361 = vsel %vm2353, %v2340, %v2343
    %v2362 = vsel %vm2356, %v2349, 920167782
    %v2363 = vsel %vm2355, %v2346, %v2362
    %v2364 = vsel %vm2354, %v2361, %v2363
    %v2365 = vsel %vm2353, %v2343, %v2346
    %v2366 = vsel %vm2356, %v2352, 1326507024
    %v2367 = vsel %vm2355, %v2349, %v2366
    %v2368 = vsel %vm2354, %v2365, %v2367
    %v2369 = vshll.u32 %v2329, 8
    %v2370 = vand.u32 %v2369, 65535
    %v2371 = vshrl.u32 %v2369, 16
    %v2372 = vand.u32 %v2368, 65535
    %v2373 = vshrl.u32 %v2368, 16
    %v2374 = vmul.u32 %v2370, %v2372
    %v2375 = vmul.u32 %v2370, %v2373
    %v2376 = vmul.u32 %v2371, %v2372
    %v2377 = vmul.u32 %v2371, %v2373
    %v2378 = vshll.u32 %v2375, 16
    %v2379 = vshrl.u32 %v2375, 16
    %v2380 = vshll.u32 %v2376, 16
    %v2381 = vshrl.u32 %v2376, 16
    %vm2382 = vc.u32 %v2374, %v2378
    %v2383 = vsel %vm2382, 1, 0
    %v2384 = vadd.s32 %v2374, %v2378
    %v2385 = vadd.s32 %v2377, %v2383
    %vm2386 = vc.u32 %v2384, %v2380
    %v2387 = vsel %vm2386, 1, 0
    %v2388 = vadd.s32 %v2384, %v2380
    %v2389 = vadd.s32 %v2385, %v2387
    %v2390 = vadd.s32 %v2389, %v2379
    %v2391 = vadd.s32 %v2390, %v2381
    %v2392 = vand.u32 %v2369, 65535
    %v2393 = vshrl.u32 %v2369, 16
    %v2394 = vand.u32 %v2364, 65535
    %v2395 = vshrl.u32 %v2364, 16
    %v2396 = vmul.u32 %v2392, %v2394
    %v2397 = vmul.u32 %v2392, %v2395
    %v2398 = vmul.u32 %v2393, %v2394
    %v2399 = vmul.u32 %v2393, %v2395
    %v2400 = vshll.u32 %v2397, 16
    %v2401 = vshrl.u32 %v2397, 16
    %v2402 = vshll.u32 %v2398, 16
    %v2403 = vshrl.u32 %v2398, 16
    %vm2404 = vc.u32 %v2396, %v2400
    %v2405 = vsel %vm2404, 1, 0
    %v2406 = vadd.s32 %v2396, %v2400
    %v2407 = vadd.s32 %v2399, %v2405
    %vm2408 = vc.u32 %v2406, %v2402
    %v2409 = vsel %vm2408, 1, 0
    %v2410 = vadd.s32 %v2406, %v2402
    %v2411 = vadd.s32 %v2407, %v2409
    %v2412 = vadd.s32 %v2411, %v2401
    %v2413 = vadd.s32 %v2412, %v2403
    %v2414 = vmul.u32 %v2369, %v2360
    %v2415 = vadd.s32 %v2391, %v2410
    %vm2416 = vc.u32 %v2391, %v2410
    %v2417 = vadd.s32 %v2413, 1
    %v2418 = vsel %vm2416, %v2417, %v2413
    %v2419 = vadd.s32 %v2414, %v2418
    %v2420 = vadd.s32 %v2419, 536870912
    %v2421 = vshrl.u32 %v2420, 30
    %v2422 = vshll.u32 %v2421, 30
    %v2423 = vsub.s32 %v2419, %v2422
    %vm2424 = vcmp.lt.s32.totalorder %v2423, 0
    %v2425 = vsub.s32 0, %v2423
    %v2426 = vsel %vm2424, %v2425, %v2423
    %v2427 = vclz %v2426
    %v2428 = vsub.s32 %v2427, 2
    %vm2429 = vcmp.gt.s32.totalorder 0, %v2428
    %v2430 = vsel %vm2429, 0, %v2428
    %v2431 = vsub.s32 32, %v2430
    %v2432 = vshll.u32 %v2423, %v2430
    %v2433 = vshrl.u32 %v2415, %v2431
    %v2434 = vor.u32 %v2432, %v2433
    %v2435 = vsub.s32 4294967266, %v2430
    %v2436 = vadd.s32 %v2435, 127
    %v2437 = vshll.u32 %v2436, 23
    %v2438 = vor.u32 4788187, %v2437
    %v2439 = vand.u32 2147483647, %v2438
    %v2441 = vcvt.s32.f32 %v2434
    %v2442 = vmul.f32 %v2441, %v2439
    %v2443 = vxor.u32 %v2442, 2147483648
    %v2444 = vsel %vm2323, %v2443, %v2442
    %v2445 = vsub.s32 4, %v2421
    %v2446 = vsel %vm2323, %v2445, %v2421
    %v2447 = vsel %vm2322, %v611, %v2444
    %v2448 = vsel %vm2322, 0, %v2446
    %v2449 = vmul.f32 %v2447, %v2447
    %v2450 = vmul.f32 %v2449, -0.001358992
    %v2451 = vadd.f32 %v2450, 0.041655596
    %v2452 = vmul.f32 %v2449, %v2451
    %v2453 = vadd.f32 %v2452, -0.4999988
    %v2454 = vmul.f32 %v2449, %v2453
    %v2455 = vadd.f32 1.0, %v2454
    %v2456 = vmul.f32 %v2447, %v2447
    %v2457 = vmul.f32 %v2456, -0.00019511016
    %v2458 = vadd.f32 %v2457, 0.008332121
    %v2459 = vmul.f32 %v2456, %v2458
    %v2460 = vadd.f32 %v2459, -0.16666654
    %v2461 = vmul.f32 %v2456, %v2460
    %v2462 = vadd.f32 %v2461, 1.0
    %v2463 = vmul.f32 %v2462, %v2447
    %vm2464 = vweird.f32 %v611
    %v2465 = vadd.s32 %v2448, 3
    %v2466 = vand.u32 %v2465, 3
    %vm2467 = vcmp.lt.s32.totalorder %v2466, 2
    %vm2468 = vcmp.eq.s32.totalorder %v2466, 0
    %v2469 = vxor.u32 %v2463, 2147483648
    %v2470 = vsel %vm2468, %v2455, %v2469
    %vm2471 = vcmp.eq.s32.totalorder %v2466, 2
    %v2472 = vxor.u32 %v2455, 2147483648
    %v2473 = vsel %vm2471, %v2472, %v2463
    %v2474 = vsel %vm2467, %v2470, %v2473
    %v2475 = vsel %vm2464, nan, %v2474
    %v2476 = vand.u32 2147483647, %v612
    %vm2477 = vcmp.le.f32.partialorder %v2476, 0.7853982
    %vm2478 = vcmp.lt.s32.totalorder %v612, 0
    %v2479 = vand.u32 %v612, 2139095040
    %v2480 = vshrl.u32 %v2479, 23
    %v2481 = vsub.s32 %v2480, 127
    %v2482 = vand.u32 2147483647, %v612
    %v2483 = vand.u32 %v2482, 8388607
    %v2484 = vor.u32 %v2483, 8388608
    %v2485 = vsub.s32 0, %v2484
    %v2486 = vadd.s32 %v2481, 1
    %vm2487 = vcmp.gt.s32.totalorder %v2486, 0
    %v2488 = vsel %vm2487, %v2486, 0
    %v2489 = vshrl.u32 %v2488, 5
    %v2490 = vand.u32 %v2488, 31
    %v2491 = vsub.s32 32, %v2490
    %v2492 = vshrl.u32 683565275, %v2491
    %v2493 = vshll.u32 683565275, %v2490
    %v2494 = vshrl.u32 2475754826, %v2491
    %v2495 = vor.u32 %v2493, %v2494
    %v2496 = vshll.u32 2475754826, %v2490
    %v2497 = vshrl.u32 2131351028, %v2491
    %v2498 = vor.u32 %v2496, %v2497
    %v2499 = vshll.u32 2131351028, %v2490
    %v2500 = vshrl.u32 2102212464, %v2491
    %v2501 = vor.u32 %v2499, %v2500
    %v2502 = vshll.u32 2102212464, %v2490
    %v2503 = vshrl.u32 920167782, %v2491
    %v2504 = vor.u32 %v2502, %v2503
    %v2505 = vshll.u32 920167782, %v2490
    %v2506 = vshrl.u32 1326507024, %v2491
    %v2507 = vor.u32 %v2505, %v2506
    %vm2508 = vcmp.lt.s32.totalorder %v2489, 1
    %vm2509 = vcmp.lt.s32.totalorder %v2489, 2
    %vm2510 = vcmp.lt.s32.totalorder %v2489, 3
    %vm2511 = vcmp.lt.s32.totalorder %v2489, 4
    %v2512 = vsel %vm2508, %v2492, %v2495
    %v2513 = vsel %vm2511, %v2501, 2102212464
    %v2514 = vsel %vm2510, %v2498, %v2513
    %v2515 = vsel %vm2509, %v2512, %v2514
    %v2516 = vsel %vm2508, %v2495, %v2498
    %v2517 = vsel %vm2511, %v2504, 920167782
    %v2518 = vsel %vm2510, %v2501, %v2517
    %v2519 = vsel %vm2509, %v2516, %v2518
    %v2520 = vsel %vm2508, %v2498, %v2501
    %v2521 = vsel %vm2511, %v2507, 1326507024
    %v2522 = vsel %vm2510, %v2504, %v2521
    %v2523 = vsel %vm2509, %v2520, %v2522
    %v2524 = vshll.u32 %v2484, 8
    %v2525 = vand.u32 %v2524, 65535
    %v2526 = vshrl.u32 %v2524, 16
    %v2527 = vand.u32 %v2523, 65535
    %v2528 = vshrl.u32 %v2523, 16
    %v2529 = vmul.u32 %v2525, %v2527
    %v2530 = vmul.u32 %v2525, %v2528
    %v2531 = vmul.u32 %v2526, %v2527
    %v2532 = vmul.u32 %v2526, %v2528
    %v2533 = vshll.u32 %v2530, 16
    %v2534 = vshrl.u32 %v2530, 16
    %v2535 = vshll.u32 %v2531, 16
    %v2536 = vshrl.u32 %v2531, 16
    %vm2537 = vc.u32 %v2529, %v2533
    %v2538 = vsel %vm2537, 1, 0
    %v2539 = vadd.s32 %v2529, %v2533
    %v2540 = vadd.s32 %v2532, %v2538
    %vm2541 = vc.u32 %v2539, %v2535
    %v2542 = vsel %vm2541, 1, 0
    %v2543 = vadd.s32 %v2539, %v2535
    %v2544 = vadd.s32 %v2540, %v2542
    %v2545 = vadd.s32 %v2544, %v2534
    %v2546 = vadd.s32 %v2545, %v2536
    %v2547 = vand.u32 %v2524, 65535
    %v2548 = vshrl.u32 %v2524, 16
    %v2549 = vand.u32 %v2519, 65535
    %v2550 = vshrl.u32 %v2519, 16
    %v2551 = vmul.u32 %v2547, %v2549
    %v2552 = vmul.u32 %v2547, %v2550
    %v2553 = vmul.u32 %v2548, %v2549
    %v2554 = vmul.u32 %v2548, %v2550
    %v2555 = vshll.u32 %v2552, 16
    %v2556 = vshrl.u32 %v2552, 16
    %v2557 = vshll.u32 %v2553, 16
    %v2558 = vshrl.u32 %v2553, 16
    %vm2559 = vc.u32 %v2551, %v2555
    %v2560 = vsel %vm2559, 1, 0
    %v2561 = vadd.s32 %v2551, %v2555
    %v2562 = vadd.s32 %v2554, %v2560
    %vm2563 = vc.u32 %v2561, %v2557
    %v2564 = vsel %vm2563, 1, 0
    %v2565 = vadd.s32 %v2561, %v2557
    %v2566 = vadd.s32 %v2562, %v2564
    %v2567 = vadd.s32 %v2566, %v2556
    %v2568 = vadd.s32 %v2567, %v2558
    %v2569 = vmul.u32 %v2524, %v2515
    %v2570 = vadd.s32 %v2546, %v2565
    %vm2571 = vc.u32 %v2546, %v2565
    %v2572 = vadd.s32 %v2568, 1
    %v2573 = vsel %vm2571, %v2572, %v2568
    %v2574 = vadd.s32 %v2569, %v2573
    %v2575 = vadd.s32 %v2574, 536870912
    %v2576 = vshrl.u32 %v2575, 30
    %v2577 = vshll.u32 %v2576, 30
    %v2578 = vsub.s32 %v2574, %v2577
    %vm2579 = vcmp.lt.s32.totalorder %v2578, 0
    %v2580 = vsub.s32 0, %v2578
    %v2581 = vsel %vm2579, %v2580, %v2578
    %v2582 = vclz %v2581
    %v2583 = vsub.s32 %v2582, 2
    %vm2584 = vcmp.gt.s32.totalorder 0, %v2583
    %v2585 = vsel %vm2584, 0, %v2583
    %v2586 = vsub.s32 32, %v2585
    %v2587 = vshll.u32 %v2578, %v2585
    %v2588 = vshrl.u32 %v2570, %v2586
    %v2589 = vor.u32 %v2587, %v2588
    %v2590 = vsub.s32 4294967266, %v2585
    %v2591 = vadd.s32 %v2590, 127
    %v2592 = vshll.u32 %v2591, 23
    %v2593 = vor.u32 4788187, %v2592
    %v2594 = vand.u32 2147483647, %v2593
    %v2596 = vcvt.s32.f32 %v2589
    %v2597 = vmul.f32 %v2596, %v2594
    %v2598 = vxor.u32 %v2597, 2147483648
    %v2599 = vsel %vm2478, %v2598, %v2597
    %v2600 = vsub.s32 4, %v2576
    %v2601 = vsel %vm2478, %v2600, %v2576
    %v2602 = vsel %vm2477, %v612, %v2599
    %v2603 = vsel %vm2477, 0, %v2601
    %v2604 = vmul.f32 %v2602, %v2602
    %v2605 = vmul.f32 %v2604, -0.001358992
    %v2606 = vadd.f32 %v2605, 0.041655596
    %v2607 = vmul.f32 %v2604, %v2606
    %v2608 = vadd.f32 %v2607, -0.4999988
    %v2609 = vmul.f32 %v2604, %v2608
    %v2610 = vadd.f32 1.0, %v2609
    %v2611 = vmul.f32 %v2602, %v2602
    %v2612 = vmul.f32 %v2611, -0.00019511016
    %v2613 = vadd.f32 %v2612, 0.008332121
    %v2614 = vmul.f32 %v2611, %v2613
    %v2615 = vadd.f32 %v2614, -0.16666654
    %v2616 = vmul.f32 %v2611, %v2615
    %v2617 = vadd.f32 %v2616, 1.0
    %v2618 = vmul.f32 %v2617, %v2602
    %vm2619 = vweird.f32 %v612
    %v2620 = vadd.s32 %v2603, 3
    %v2621 = vand.u32 %v2620, 3
    %vm2622 = vcmp.lt.s32.totalorder %v2621, 2
    %vm2623 = vcmp.eq.s32.totalorder %v2621, 0
    %v2624 = vxor.u32 %v2618, 2147483648
    %v2625 = vsel %vm2623, %v2610, %v2624
    %vm2626 = vcmp.eq.s32.totalorder %v2621, 2
    %v2627 = vxor.u32 %v2610, 2147483648
    %v2628 = vsel %vm2626, %v2627, %v2618
    %v2629 = vsel %vm2622, %v2625, %v2628
    %v2630 = vsel %vm2619, nan, %v2629
    %v2631 = vand.u32 2147483647, %v613
    %vm2632 = vcmp.le.f32.partialorder %v2631, 0.7853982
    %vm2633 = vcmp.lt.s32.totalorder %v613, 0
    %v2634 = vand.u32 %v613, 2139095040
    %v2635 = vshrl.u32 %v2634, 23
    %v2636 = vsub.s32 %v2635, 127
    %v2637 = vand.u32 2147483647, %v613
    %v2638 = vand.u32 %v2637, 8388607
    %v2639 = vor.u32 %v2638, 8388608
    %v2640 = vsub.s32 0, %v2639
    %v2641 = vadd.s32 %v2636, 1
    %vm2642 = vcmp.gt.s32.totalorder %v2641, 0
    %v2643 = vsel %vm2642, %v2641, 0
    %v2644 = vshrl.u32 %v2643, 5
    %v2645 = vand.u32 %v2643, 31
    %v2646 = vsub.s32 32, %v2645
    %v2647 = vshrl.u32 683565275, %v2646
    %v2648 = vshll.u32 683565275, %v2645
    %v2649 = vshrl.u32 2475754826, %v2646
    %v2650 = vor.u32 %v2648, %v2649
    %v2651 = vshll.u32 2475754826, %v2645
    %v2652 = vshrl.u32 2131351028, %v2646
    %v2653 = vor.u32 %v2651, %v2652
    %v2654 = vshll.u32 2131351028, %v2645
    %v2655 = vshrl.u32 2102212464, %v2646
    %v2656 = vor.u32 %v2654, %v2655
    %v2657 = vshll.u32 2102212464, %v2645
    %v2658 = vshrl.u32 920167782, %v2646
    %v2659 = vor.u32 %v2657, %v2658
    %v2660 = vshll.u32 920167782, %v2645
    %v2661 = vshrl.u32 1326507024, %v2646
    %v2662 = vor.u32 %v2660, %v2661
    %vm2663 = vcmp.lt.s32.totalorder %v2644, 1
    %vm2664 = vcmp.lt.s32.totalorder %v2644, 2
    %vm2665 = vcmp.lt.s32.totalorder %v2644, 3
    %vm2666 = vcmp.lt.s32.totalorder %v2644, 4
    %v2667 = vsel %vm2663, %v2647, %v2650
    %v2668 = vsel %vm2666, %v2656, 2102212464
    %v2669 = vsel %vm2665, %v2653, %v2668
    %v2670 = vsel %vm2664, %v2667, %v2669
    %v2671 = vsel %vm2663, %v2650, %v2653
    %v2672 = vsel %vm2666, %v2659, 920167782
    %v2673 = vsel %vm2665, %v2656, %v2672
    %v2674 = vsel %vm2664, %v2671, %v2673
    %v2675 = vsel %vm2663, %v2653, %v2656
    %v2676 = vsel %vm2666, %v2662, 1326507024
    %v2677 = vsel %vm2665, %v2659, %v2676
    %v2678 = vsel %vm2664, %v2675, %v2677
    %v2679 = vshll.u32 %v2639, 8
    %v2680 = vand.u32 %v2679, 65535
    %v2681 = vshrl.u32 %v2679, 16
    %v2682 = vand.u32 %v2678, 65535
    %v2683 = vshrl.u32 %v2678, 16
    %v2684 = vmul.u32 %v2680, %v2682
    %v2685 = vmul.u32 %v2680, %v2683
    %v2686 = vmul.u32 %v2681, %v2682
    %v2687 = vmul.u32 %v2681, %v2683
    %v2688 = vshll.u32 %v2685, 16
    %v2689 = vshrl.u32 %v2685, 16
    %v2690 = vshll.u32 %v2686, 16
    %v2691 = vshrl.u32 %v2686, 16
    %vm2692 = vc.u32 %v2684, %v2688
    %v2693 = vsel %vm2692, 1, 0
    %v2694 = vadd.s32 %v2684, %v2688
    %v2695 = vadd.s32 %v2687, %v2693
    %vm2696 = vc.u32 %v2694, %v2690
    %v2697 = vsel %vm2696, 1, 0
    %v2698 = vadd.s32 %v2694, %v2690
    %v2699 = vadd.s32 %v2695, %v2697
    %v2700 = vadd.s32 %v2699, %v2689
    %v2701 = vadd.s32 %v2700, %v2691
    %v2702 = vand.u32 %v2679, 65535
    %v2703 = vshrl.u32 %v2679, 16
    %v2704 = vand.u32 %v2674, 65535
    %v2705 = vshrl.u32 %v2674, 16
    %v2706 = vmul.u32 %v2702, %v2704
    %v2707 = vmul.u32 %v2702, %v2705
    %v2708 = vmul.u32 %v2703, %v2704
    %v2709 = vmul.u32 %v2703, %v2705
    %v2710 = vshll.u32 %v2707, 16
    %v2711 = vshrl.u32 %v2707, 16
    %v2712 = vshll.u32 %v2708, 16
    %v2713 = vshrl.u32 %v2708, 16
    %vm2714 = vc.u32 %v2706, %v2710
    %v2715 = vsel %vm2714, 1, 0
    %v2716 = vadd.s32 %v2706, %v2710
    %v2717 = vadd.s32 %v2709, %v2715
    %vm2718 = vc.u32 %v2716, %v2712
    %v2719 = vsel %vm2718, 1, 0
    %v2720 = vadd.s32 %v2716, %v2712
    %v2721 = vadd.s32 %v2717, %v2719
    %v2722 = vadd.s32 %v2721, %v2711
    %v2723 = vadd.s32 %v2722, %v2713
    %v2724 = vmul.u32 %v2679, %v2670
    %v2725 = vadd.s32 %v2701, %v2720
    %vm2726 = vc.u32 %v2701, %v2720
    %v2727 = vadd.s32 %v2723, 1
    %v2728 = vsel %vm2726, %v2727, %v2723
    %v2729 = vadd.s32 %v2724, %v2728
    %v2730 = vadd.s32 %v2729, 536870912
    %v2731 = vshrl.u32 %v2730, 30
    %v2732 = vshll.u32 %v2731, 30
    %v2733 = vsub.s32 %v2729, %v2732
    %vm2734 = vcmp.lt.s32.totalorder %v2733, 0
    %v2735 = vsub.s32 0, %v2733
    %v2736 = vsel %vm2734, %v2735, %v2733
    %v2737 = vclz %v2736
    %v2738 = vsub.s32 %v2737, 2
    %vm2739 = vcmp.gt.s32.totalorder 0, %v2738
    %v2740 = vsel %vm2739, 0, %v2738
    %v2741 = vsub.s32 32, %v2740
    %v2742 = vshll.u32 %v2733, %v2740
    %v2743 = vshrl.u32 %v2725, %v2741
    %v2744 = vor.u32 %v2742, %v2743
    %v2745 = vsub.s32 4294967266, %v2740
    %v2746 = vadd.s32 %v2745, 127
    %v2747 = vshll.u32 %v2746, 23
    %v2748 = vor.u32 4788187, %v2747
    %v2749 = vand.u32 2147483647, %v2748
    %v2751 = vcvt.s32.f32 %v2744
    %v2752 = vmul.f32 %v2751, %v2749
    %v2753 = vxor.u32 %v2752, 2147483648
    %v2754 = vsel %vm2633, %v2753, %v2752
    %v2755 = vsub.s32 4, %v2731
    %v2756 = vsel %vm2633, %v2755, %v2731
    %v2757 = vsel %vm2632, %v613, %v2754
    %v2758 = vsel %vm2632, 0, %v2756
    %v2759 = vmul.f32 %v2757, %v2757
    %v2760 = vmul.f32 %v2759, -0.001358992
    %v2761 = vadd.f32 %v2760, 0.041655596
    %v2762 = vmul.f32 %v2759, %v2761
    %v2763 = vadd.f32 %v2762, -0.4999988
    %v2764 = vmul.f32 %v2759, %v2763
    %v2765 = vadd.f32 1.0, %v2764
    %v2766 = vmul.f32 %v2757, %v2757
    %v2767 = vmul.f32 %v2766, -0.00019511016
    %v2768 = vadd.f32 %v2767, 0.008332121
    %v2769 = vmul.f32 %v2766, %v2768
    %v2770 = vadd.f32 %v2769, -0.16666654
    %v2771 = vmul.f32 %v2766, %v2770
    %v2772 = vadd.f32 %v2771, 1.0
    %v2773 = vmul.f32 %v2772, %v2757
    %vm2774 = vweird.f32 %v613
    %v2775 = vadd.s32 %v2758, 3
    %v2776 = vand.u32 %v2775, 3
    %vm2777 = vcmp.lt.s32.totalorder %v2776, 2
    %vm2778 = vcmp.eq.s32.totalorder %v2776, 0
    %v2779 = vxor.u32 %v2773, 2147483648
    %v2780 = vsel %vm2778, %v2765, %v2779
    %vm2781 = vcmp.eq.s32.totalorder %v2776, 2
    %v2782 = vxor.u32 %v2765, 2147483648
    %v2783 = vsel %vm2781, %v2782, %v2773
    %v2784 = vsel %vm2777, %v2780, %v2783
    %v2785 = vsel %vm2774, nan, %v2784
    %v2786 = vand.u32 2147483647, %v614
    %vm2787 = vcmp.le.f32.partialorder %v2786, 0.7853982
    %vm2788 = vcmp.lt.s32.totalorder %v614, 0
    %v2789 = vand.u32 %v614, 2139095040
    %v2790 = vshrl.u32 %v2789, 23
    %v2791 = vsub.s32 %v2790, 127
    %v2792 = vand.u32 2147483647, %v614
    %v2793 = vand.u32 %v2792, 8388607
    %v2794 = vor.u32 %v2793, 8388608
    %v2795 = vsub.s32 0, %v2794
    %v2796 = vadd.s32 %v2791, 1
    %vm2797 = vcmp.gt.s32.totalorder %v2796, 0
    %v2798 = vsel %vm2797, %v2796, 0
    %v2799 = vshrl.u32 %v2798, 5
    %v2800 = vand.u32 %v2798, 31
    %v2801 = vsub.s32 32, %v2800
    %v2802 = vshrl.u32 683565275, %v2801
    %v2803 = vshll.u32 683565275, %v2800
    %v2804 = vshrl.u32 2475754826, %v2801
    %v2805 = vor.u32 %v2803, %v2804
    %v2806 = vshll.u32 2475754826, %v2800
    %v2807 = vshrl.u32 2131351028, %v2801
    %v2808 = vor.u32 %v2806, %v2807
    %v2809 = vshll.u32 2131351028, %v2800
    %v2810 = vshrl.u32 2102212464, %v2801
    %v2811 = vor.u32 %v2809, %v2810
    %v2812 = vshll.u32 2102212464, %v2800
    %v2813 = vshrl.u32 920167782, %v2801
    %v2814 = vor.u32 %v2812, %v2813
    %v2815 = vshll.u32 920167782, %v2800
    %v2816 = vshrl.u32 1326507024, %v2801
    %v2817 = vor.u32 %v2815, %v2816
    %vm2818 = vcmp.lt.s32.totalorder %v2799, 1
    %vm2819 = vcmp.lt.s32.totalorder %v2799, 2
    %vm2820 = vcmp.lt.s32.totalorder %v2799, 3
    %vm2821 = vcmp.lt.s32.totalorder %v2799, 4
    %v2822 = vsel %vm2818, %v2802, %v2805
    %v2823 = vsel %vm2821, %v2811, 2102212464
    %v2824 = vsel %vm2820, %v2808, %v2823
    %v2825 = vsel %vm2819, %v2822, %v2824
    %v2826 = vsel %vm2818, %v2805, %v2808
    %v2827 = vsel %vm2821, %v2814, 920167782
    %v2828 = vsel %vm2820, %v2811, %v2827
    %v2829 = vsel %vm2819, %v2826, %v2828
    %v2830 = vsel %vm2818, %v2808, %v2811
    %v2831 = vsel %vm2821, %v2817, 1326507024
    %v2832 = vsel %vm2820, %v2814, %v2831
    %v2833 = vsel %vm2819, %v2830, %v2832
    %v2834 = vshll.u32 %v2794, 8
    %v2835 = vand.u32 %v2834, 65535
    %v2836 = vshrl.u32 %v2834, 16
    %v2837 = vand.u32 %v2833, 65535
    %v2838 = vshrl.u32 %v2833, 16
    %v2839 = vmul.u32 %v2835, %v2837
    %v2840 = vmul.u32 %v2835, %v2838
    %v2841 = vmul.u32 %v2836, %v2837
    %v2842 = vmul.u32 %v2836, %v2838
    %v2843 = vshll.u32 %v2840, 16
    %v2844 = vshrl.u32 %v2840, 16
    %v2845 = vshll.u32 %v2841, 16
    %v2846 = vshrl.u32 %v2841, 16
    %vm2847 = vc.u32 %v2839, %v2843
    %v2848 = vsel %vm2847, 1, 0
    %v2849 = vadd.s32 %v2839, %v2843
    %v2850 = vadd.s32 %v2842, %v2848
    %vm2851 = vc.u32 %v2849, %v2845
    %v2852 = vsel %vm2851, 1, 0
    %v2853 = vadd.s32 %v2849, %v2845
    %v2854 = vadd.s32 %v2850, %v2852
    %v2855 = vadd.s32 %v2854, %v2844
    %v2856 = vadd.s32 %v2855, %v2846
    %v2857 = vand.u32 %v2834, 65535
    %v2858 = vshrl.u32 %v2834, 16
    %v2859 = vand.u32 %v2829, 65535
    %v2860 = vshrl.u32 %v2829, 16
    %v2861 = vmul.u32 %v2857, %v2859
    %v2862 = vmul.u32 %v2857, %v2860
    %v2863 = vmul.u32 %v2858, %v2859
    %v2864 = vmul.u32 %v2858, %v2860
    %v2865 = vshll.u32 %v2862, 16
    %v2866 = vshrl.u32 %v2862, 16
    %v2867 = vshll.u32 %v2863, 16
    %v2868 = vshrl.u32 %v2863, 16
    %vm2869 = vc.u32 %v2861, %v2865
    %v2870 = vsel %vm2869, 1, 0
    %v2871 = vadd.s32 %v2861, %v2865
    %v2872 = vadd.s32 %v2864, %v2870
    %vm2873 = vc.u32 %v2871, %v2867
    %v2874 = vsel %vm2873, 1, 0
    %v2875 = vadd.s32 %v2871, %v2867
    %v2876 = vadd.s32 %v2872, %v2874
    %v2877 = vadd.s32 %v2876, %v2866
    %v2878 = vadd.s32 %v2877, %v2868
    %v2879 = vmul.u32 %v2834, %v2825
    %v2880 = vadd.s32 %v2856, %v2875
    %vm2881 = vc.u32 %v2856, %v2875
    %v2882 = vadd.s32 %v2878, 1
    %v2883 = vsel %vm2881, %v2882, %v2878
    %v2884 = vadd.s32 %v2879, %v2883
    %v2885 = vadd.s32 %v2884, 536870912
    %v2886 = vshrl.u32 %v2885, 30
    %v2887 = vshll.u32 %v2886, 30
    %v2888 = vsub.s32 %v2884, %v2887
    %vm2889 = vcmp.lt.s32.totalorder %v2888, 0
    %v2890 = vsub.s32 0, %v2888
    %v2891 = vsel %vm2889, %v2890, %v2888
    %v2892 = vclz %v2891
    %v2893 = vsub.s32 %v2892, 2
    %vm2894 = vcmp.gt.s32.totalorder 0, %v2893
    %v2895 = vsel %vm2894, 0, %v2893
    %v2896 = vsub.s32 32, %v2895
    %v2897 = vshll.u32 %v2888, %v2895
    %v2898 = vshrl.u32 %v2880, %v2896
    %v2899 = vor.u32 %v2897, %v2898
    %v2900 = vsub.s32 4294967266, %v2895
    %v2901 = vadd.s32 %v2900, 127
    %v2902 = vshll.u32 %v2901, 23
    %v2903 = vor.u32 4788187, %v2902
    %v2904 = vand.u32 2147483647, %v2903
    %v2906 = vcvt.s32.f32 %v2899
    %v2907 = vmul.f32 %v2906, %v2904
    %v2908 = vxor.u32 %v2907, 2147483648
    %v2909 = vsel %vm2788, %v2908, %v2907
    %v2910 = vsub.s32 4, %v2886
    %v2911 = vsel %vm2788, %v2910, %v2886
    %v2912 = vsel %vm2787, %v614, %v2909
    %v2913 = vsel %vm2787, 0, %v2911
    %v2914 = vmul.f32 %v2912, %v2912
    %v2915 = vmul.f32 %v2914, -0.001358992
    %v2916 = vadd.f32 %v2915, 0.041655596
    %v2917 = vmul.f32 %v2914, %v2916
    %v2918 = vadd.f32 %v2917, -0.4999988
    %v2919 = vmul.f32 %v2914, %v2918
    %v2920 = vadd.f32 1.0, %v2919
    %v2921 = vmul.f32 %v2912, %v2912
    %v2922 = vmul.f32 %v2921, -0.00019511016
    %v2923 = vadd.f32 %v2922, 0.008332121
    %v2924 = vmul.f32 %v2921, %v2923
    %v2925 = vadd.f32 %v2924, -0.16666654
    %v2926 = vmul.f32 %v2921, %v2925
    %v2927 = vadd.f32 %v2926, 1.0
    %v2928 = vmul.f32 %v2927, %v2912
    %vm2929 = vweird.f32 %v614
    %v2930 = vadd.s32 %v2913, 3
    %v2931 = vand.u32 %v2930, 3
    %vm2932 = vcmp.lt.s32.totalorder %v2931, 2
    %vm2933 = vcmp.eq.s32.totalorder %v2931, 0
    %v2934 = vxor.u32 %v2928, 2147483648
    %v2935 = vsel %vm2933, %v2920, %v2934
    %vm2936 = vcmp.eq.s32.totalorder %v2931, 2
    %v2937 = vxor.u32 %v2920, 2147483648
    %v2938 = vsel %vm2936, %v2937, %v2928
    %v2939 = vsel %vm2932, %v2935, %v2938
    %v2940 = vsel %vm2929, nan, %v2939
    %v2941 = vand.u32 2147483647, %v615
    %vm2942 = vcmp.le.f32.partialorder %v2941, 0.7853982
    %vm2943 = vcmp.lt.s32.totalorder %v615, 0
    %v2944 = vand.u32 %v615, 2139095040
    %v2945 = vshrl.u32 %v2944, 23
    %v2946 = vsub.s32 %v2945, 127
    %v2947 = vand.u32 2147483647, %v615
    %v2948 = vand.u32 %v2947, 8388607
    %v2949 = vor.u32 %v2948, 8388608
    %v2950 = vsub.s32 0, %v2949
    %v2951 = vadd.s32 %v2946, 1
    %vm2952 = vcmp.gt.s32.totalorder %v2951, 0
    %v2953 = vsel %vm2952, %v2951, 0
    %v2954 = vshrl.u32 %v2953, 5
    %v2955 = vand.u32 %v2953, 31
    %v2956 = vsub.s32 32, %v2955
    %v2957 = vshrl.u32 683565275, %v2956
    %v2958 = vshll.u32 683565275, %v2955
    %v2959 = vshrl.u32 2475754826, %v2956
    %v2960 = vor.u32 %v2958, %v2959
    %v2961 = vshll.u32 2475754826, %v2955
    %v2962 = vshrl.u32 2131351028, %v2956
    %v2963 = vor.u32 %v2961, %v2962
    %v2964 = vshll.u32 2131351028, %v2955
    %v2965 = vshrl.u32 2102212464, %v2956
    %v2966 = vor.u32 %v2964, %v2965
    %v2967 = vshll.u32 2102212464, %v2955
    %v2968 = vshrl.u32 920167782, %v2956
    %v2969 = vor.u32 %v2967, %v2968
    %v2970 = vshll.u32 920167782, %v2955
    %v2971 = vshrl.u32 1326507024, %v2956
    %v2972 = vor.u32 %v2970, %v2971
    %vm2973 = vcmp.lt.s32.totalorder %v2954, 1
    %vm2974 = vcmp.lt.s32.totalorder %v2954, 2
    %vm2975 = vcmp.lt.s32.totalorder %v2954, 3
    %vm2976 = vcmp.lt.s32.totalorder %v2954, 4
    %v2977 = vsel %vm2973, %v2957, %v2960
    %v2978 = vsel %vm2976, %v2966, 2102212464
    %v2979 = vsel %vm2975, %v2963, %v2978
    %v2980 = vsel %vm2974, %v2977, %v2979
    %v2981 = vsel %vm2973, %v2960, %v2963
    %v2982 = vsel %vm2976, %v2969, 920167782
    %v2983 = vsel %vm2975, %v2966, %v2982
    %v2984 = vsel %vm2974, %v2981, %v2983
    %v2985 = vsel %vm2973, %v2963, %v2966
    %v2986 = vsel %vm2976, %v2972, 1326507024
    %v2987 = vsel %vm2975, %v2969, %v2986
    %v2988 = vsel %vm2974, %v2985, %v2987
    %v2989 = vshll.u32 %v2949, 8
    %v2990 = vand.u32 %v2989, 65535
    %v2991 = vshrl.u32 %v2989, 16
    %v2992 = vand.u32 %v2988, 65535
    %v2993 = vshrl.u32 %v2988, 16
    %v2994 = vmul.u32 %v2990, %v2992
    %v2995 = vmul.u32 %v2990, %v2993
    %v2996 = vmul.u32 %v2991, %v2992
    %v2997 = vmul.u32 %v2991, %v2993
    %v2998 = vshll.u32 %v2995, 16
    %v2999 = vshrl.u32 %v2995, 16
    %v3000 = vshll.u32 %v2996, 16
    %v3001 = vshrl.u32 %v2996, 16
    %vm3002 = vc.u32 %v2994, %v2998
    %v3003 = vsel %vm3002, 1, 0
    %v3004 = vadd.s32 %v2994, %v2998
    %v3005 = vadd.s32 %v2997, %v3003
    %vm3006 = vc.u32 %v3004, %v3000
    %v3007 = vsel %vm3006, 1, 0
    %v3008 = vadd.s32 %v3004, %v3000
    %v3009 = vadd.s32 %v3005, %v3007
    %v3010 = vadd.s32 %v3009, %v2999
    %v3011 = vadd.s32 %v3010, %v3001
    %v3012 = vand.u32 %v2989, 65535
    %v3013 = vshrl.u32 %v2989, 16
    %v3014 = vand.u32 %v2984, 65535
    %v3015 = vshrl.u32 %v2984, 16
    %v3016 = vmul.u32 %v3012, %v3014
    %v3017 = vmul.u32 %v3012, %v3015
    %v3018 = vmul.u32 %v3013, %v3014
    %v3019 = vmul.u32 %v3013, %v3015
    %v3020 = vshll.u32 %v3017, 16
    %v3021 = vshrl.u32 %v3017, 16
    %v3022 = vshll.u32 %v3018, 16
    %v3023 = vshrl.u32 %v3018, 16
    %vm3024 = vc.u32 %v3016, %v3020
    %v3025 = vsel %vm3024, 1, 0
    %v3026 = vadd.s32 %v3016, %v3020
    %v3027 = vadd.s32 %v3019, %v3025
    %vm3028 = vc.u32 %v3026, %v3022
    %v3029 = vsel %vm3028, 1, 0
    %v3030 = vadd.s32 %v3026, %v3022
    %v3031 = vadd.s32 %v3027, %v3029
    %v3032 = vadd.s32 %v3031, %v3021
    %v3033 = vadd.s32 %v3032, %v3023
    %v3034 = vmul.u32 %v2989, %v2980
    %v3035 = vadd.s32 %v3011, %v3030
    %vm3036 = vc.u32 %v3011, %v3030
    %v3037 = vadd.s32 %v3033, 1
    %v3038 = vsel %vm3036, %v3037, %v3033
    %v3039 = vadd.s32 %v3034, %v3038
    %v3040 = vadd.s32 %v3039, 536870912
    %v3041 = vshrl.u32 %v3040, 30
    %v3042 = vshll.u32 %v3041, 30
    %v3043 = vsub.s32 %v3039, %v3042
    %vm3044 = vcmp.lt.s32.totalorder %v3043, 0
    %v3045 = vsub.s32 0, %v3043
    %v3046 = vsel %vm3044, %v3045, %v3043
    %v3047 = vclz %v3046
    %v3048 = vsub.s32 %v3047, 2
    %vm3049 = vcmp.gt.s32.totalorder 0, %v3048
    %v3050 = vsel %vm3049, 0, %v3048
    %v3051 = vsub.s32 32, %v3050
    %v3052 = vshll.u32 %v3043, %v3050
    %v3053 = vshrl.u32 %v3035, %v3051
    %v3054 = vor.u32 %v3052, %v3053
    %v3055 = vsub.s32 4294967266, %v3050
    %v3056 = vadd.s32 %v3055, 127
    %v3057 = vshll.u32 %v3056, 23
    %v3058 = vor.u32 4788187, %v3057
    %v3059 = vand.u32 2147483647, %v3058
    %v3061 = vcvt.s32.f32 %v3054
    %v3062 = vmul.f32 %v3061, %v3059
    %v3063 = vxor.u32 %v3062, 2147483648
    %v3064 = vsel %vm2943, %v3063, %v3062
    %v3065 = vsub.s32 4, %v3041
    %v3066 = vsel %vm2943, %v3065, %v3041
    %v3067 = vsel %vm2942, %v615, %v3064
    %v3068 = vsel %vm2942, 0, %v3066
    %v3069 = vmul.f32 %v3067, %v3067
    %v3070 = vmul.f32 %v3069, -0.001358992
    %v3071 = vadd.f32 %v3070, 0.041655596
    %v3072 = vmul.f32 %v3069, %v3071
    %v3073 = vadd.f32 %v3072, -0.4999988
    %v3074 = vmul.f32 %v3069, %v3073
    %v3075 = vadd.f32 1.0, %v3074
    %v3076 = vmul.f32 %v3067, %v3067
    %v3077 = vmul.f32 %v3076, -0.00019511016
    %v3078 = vadd.f32 %v3077, 0.008332121
    %v3079 = vmul.f32 %v3076, %v3078
    %v3080 = vadd.f32 %v3079, -0.16666654
    %v3081 = vmul.f32 %v3076, %v3080
    %v3082 = vadd.f32 %v3081, 1.0
    %v3083 = vmul.f32 %v3082, %v3067
    %vm3084 = vweird.f32 %v615
    %v3085 = vadd.s32 %v3068, 3
    %v3086 = vand.u32 %v3085, 3
    %vm3087 = vcmp.lt.s32.totalorder %v3086, 2
    %vm3088 = vcmp.eq.s32.totalorder %v3086, 0
    %v3089 = vxor.u32 %v3083, 2147483648
    %v3090 = vsel %vm3088, %v3075, %v3089
    %vm3091 = vcmp.eq.s32.totalorder %v3086, 2
    %v3092 = vxor.u32 %v3075, 2147483648
    %v3093 = vsel %vm3091, %v3092, %v3083
    %v3094 = vsel %vm3087, %v3090, %v3093
    %v3095 = vsel %vm3084, nan, %v3094
    %v3096 = vmul.f32 %v770, 0.6324555
    %v3097 = vmul.f32 %v925, 0.6324555
    %v3098 = vmul.f32 %v1080, 0.6324555
    %v3099 = vmul.f32 %v1235, 0.6324555
    %v3100 = vmul.f32 %v1390, 0.6324555
    %v3101 = vmul.f32 %v1545, 0.6324555
    %v3102 = vmul.f32 %v1700, 0.6324555
    %v3103 = vmul.f32 %v1855, 0.6324555
    %v3104 = vmul.f32 %v2010, 0.6324555
    %v3105 = vmul.f32 %v2165, 0.6324555
    %v3106 = vmul.f32 %v2320, 0.6324555
    %v3107 = vmul.f32 %v2475, 0.6324555
    %v3108 = vmul.f32 %v2630, 0.6324555
    %v3109 = vmul.f32 %v2785, 0.6324555
    %v3110 = vmul.f32 %v2940, 0.6324555
    %v3111 = vmul.f32 %v3095, 0.6324555
    %v3112 = vmul.f32 %v3096, %v423
    %v3113 = vmul.f32 %v3097, %v428
    %v3114 = vmul.f32 %v3098, %v433
    %v3115 = vmul.f32 %v3099, %v438
    %v3116 = vmul.f32 %v3100, %v443
    %v3117 = vmul.f32 %v3101, %v448
    %v3118 = vmul.f32 %v3102, %v453
    %v3119 = vmul.f32 %v3103, %v458
    %v3120 = vmul.f32 %v3104, %v463
    %v3121 = vmul.f32 %v3105, %v468
    %v3122 = vmul.f32 %v3106, %v473
    %v3123 = vmul.f32 %v3107, %v478
    %v3124 = vmul.f32 %v3108, %v483
    %v3125 = vmul.f32 %v3109, %v488
    %v3126 = vmul.f32 %v3110, %v493
    %v3127 = vmul.f32 %v3111, %v498
    %v3128 = vpack.c.bf16 %v3113, %v3112
    %v3129 = vpack.c.bf16 %v3115, %v3114
    %v3130 = vpack.c.bf16 %v3117, %v3116
    %v3131 = vpack.c.bf16 %v3119, %v3118
    %v3132 = vpack.c.bf16 %v3121, %v3120
    %v3133 = vpack.c.bf16 %v3123, %v3122
    %v3134 = vpack.c.bf16 %v3125, %v3124
    %v3135 = vpack.c.bf16 %v3127, %v3126
    %v3136 = vld [vmem:[%s7] sm:$0xff]
    %v3137 = vld [vmem:[%s7 + $0x8] sm:$0xf]
    %v3138 = vld [vmem:[%s8] sm:$0x7]
    %v3140 = vperm.slane %v3138, 0
    %v3141 = vperm.slane %v3138, 1
    %v3142 = vperm.slane %v3138, 2
    %v3148 = vunpack.c.l.b16 %v3136
    %v3149 = vunpack.c.h.b16 %v3136
    %v3150 = vunpack.c.l.b16 %v3137
    %v3151 = vpack.c.b16 %v3148, %v3148
    %v3152 = vpack.c.b16 %v3149, %v3149
    %v3153 = vpack.c.b16 %v3150, %v3150
    %vm3154 = vcmask 64512
    %v3156 = vsel %vm3154, %v3128, 0
    %v3159 = vsel %vm3154, %v3129, 0
    %v3162 = vsel %vm3154, %v3130, 0
    %v3165 = vsel %vm3154, %v3131, 0
    %v3168 = vsel %vm3154, %v3132, 0
    %v3171 = vsel %vm3154, %v3133, 0
    %v3174 = vsel %vm3154, %v3134, 0
    %v3177 = vsel %vm3154, %v3135, 0
    %vm3179 = vcmask 1043456
    %v3181 = vsel %vm3179, %v3151, 0
    %v3184 = vsel %vm3179, %v3152, 0
    %v3187 = vsel %vm3179, %v3153, 0
    %3189 = vmatpush.bf16.msra.mxu0 0
    %3190 = vmatpush.bf16.msra.mxu0 0
    %3191 = vmatpush.bf16.msra.mxu0 0
    %3192 = vmatpush.bf16.msra.mxu0 0
    %3193 = vmatpush.bf16.msra.mxu0 0
    %3194 = vmatpush.bf16.msra.mxu0 0
    %3195 = vmatpush.bf16.msra.mxu0 0
    %3196 = vmatpush.bf16.msra.mxu0 %v3181
    %3197 = vmatmul.bf16.gmra.mxu0 %v3156
    %v3198 = vpop.f32.mrf.mxu0
    %v3199 = vadd.f32 %v3140, %v3198
    %v3200 = vpop.f32.mrf.mxu0
    %v3201 = vadd.f32 %v3140, %v3200
    %3202 = vmatmul.bf16.gmra.mxu0 %v3159
    %v3203 = vpop.f32.mrf.mxu0
    %v3204 = vadd.f32 %v3140, %v3203
    %v3205 = vpop.f32.mrf.mxu0
    %v3206 = vadd.f32 %v3140, %v3205
    %3207 = vmatmul.bf16.gmra.mxu0 %v3162
    %v3208 = vpop.f32.mrf.mxu0
    %v3209 = vadd.f32 %v3140, %v3208
    %v3210 = vpop.f32.mrf.mxu0
    %v3211 = vadd.f32 %v3140, %v3210
    %3212 = vmatmul.bf16.gmra.mxu0 %v3165
    %v3213 = vpop.f32.mrf.mxu0
    %v3214 = vadd.f32 %v3140, %v3213
    %v3215 = vpop.f32.mrf.mxu0
    %v3216 = vadd.f32 %v3140, %v3215
    %3217 = vmatmul.bf16.gmra.mxu0 %v3168
    %v3218 = vpop.f32.mrf.mxu0
    %v3219 = vadd.f32 %v3140, %v3218
    %v3220 = vpop.f32.mrf.mxu0
    %v3221 = vadd.f32 %v3140, %v3220
    %3222 = vmatmul.bf16.gmra.mxu0 %v3171
    %v3223 = vpop.f32.mrf.mxu0
    %v3224 = vadd.f32 %v3140, %v3223
    %v3225 = vpop.f32.mrf.mxu0
    %v3226 = vadd.f32 %v3140, %v3225
    %3227 = vmatmul.bf16.gmra.mxu0 %v3174
    %v3228 = vpop.f32.mrf.mxu0
    %v3229 = vadd.f32 %v3140, %v3228
    %v3230 = vpop.f32.mrf.mxu0
    %v3231 = vadd.f32 %v3140, %v3230
    %3232 = vmatmul.bf16.gmra.mxu0 %v3177
    %v3233 = vpop.f32.mrf.mxu0
    %v3234 = vadd.f32 %v3140, %v3233
    %v3235 = vpop.f32.mrf.mxu0
    %v3236 = vadd.f32 %v3140, %v3235
    %3237 = vdwg.mxu0
    %3238 = vmatpush.bf16.msra.mxu0 0
    %3239 = vmatpush.bf16.msra.mxu0 0
    %3240 = vmatpush.bf16.msra.mxu0 0
    %3241 = vmatpush.bf16.msra.mxu0 0
    %3242 = vmatpush.bf16.msra.mxu0 0
    %3243 = vmatpush.bf16.msra.mxu0 0
    %3244 = vmatpush.bf16.msra.mxu0 0
    %3245 = vmatpush.bf16.msra.mxu0 %v3184
    %3246 = vmatmul.bf16.gmra.mxu0 %v3156
    %v3247 = vpop.f32.mrf.mxu0
    %v3248 = vadd.f32 %v3141, %v3247
    %v3249 = vpop.f32.mrf.mxu0
    %v3250 = vadd.f32 %v3141, %v3249
    %3251 = vmatmul.bf16.gmra.mxu0 %v3159
    %v3252 = vpop.f32.mrf.mxu0
    %v3253 = vadd.f32 %v3141, %v3252
    %v3254 = vpop.f32.mrf.mxu0
    %v3255 = vadd.f32 %v3141, %v3254
    %3256 = vmatmul.bf16.gmra.mxu0 %v3162
    %v3257 = vpop.f32.mrf.mxu0
    %v3258 = vadd.f32 %v3141, %v3257
    %v3259 = vpop.f32.mrf.mxu0
    %v3260 = vadd.f32 %v3141, %v3259
    %3261 = vmatmul.bf16.gmra.mxu0 %v3165
    %v3262 = vpop.f32.mrf.mxu0
    %v3263 = vadd.f32 %v3141, %v3262
    %v3264 = vpop.f32.mrf.mxu0
    %v3265 = vadd.f32 %v3141, %v3264
    %3266 = vmatmul.bf16.gmra.mxu0 %v3168
    %v3267 = vpop.f32.mrf.mxu0
    %v3268 = vadd.f32 %v3141, %v3267
    %v3269 = vpop.f32.mrf.mxu0
    %v3270 = vadd.f32 %v3141, %v3269
    %3271 = vmatmul.bf16.gmra.mxu0 %v3171
    %v3272 = vpop.f32.mrf.mxu0
    %v3273 = vadd.f32 %v3141, %v3272
    %v3274 = vpop.f32.mrf.mxu0
    %v3275 = vadd.f32 %v3141, %v3274
    %3276 = vmatmul.bf16.gmra.mxu0 %v3174
    %v3277 = vpop.f32.mrf.mxu0
    %v3278 = vadd.f32 %v3141, %v3277
    %v3279 = vpop.f32.mrf.mxu0
    %v3280 = vadd.f32 %v3141, %v3279
    %3281 = vmatmul.bf16.gmra.mxu0 %v3177
    %v3282 = vpop.f32.mrf.mxu0
    %v3283 = vadd.f32 %v3141, %v3282
    %v3284 = vpop.f32.mrf.mxu0
    %v3285 = vadd.f32 %v3141, %v3284
    %3286 = vdwg.mxu0
    %3287 = vmatpush.bf16.msra.mxu0 0
    %3288 = vmatpush.bf16.msra.mxu0 0
    %3289 = vmatpush.bf16.msra.mxu0 0
    %3290 = vmatpush.bf16.msra.mxu0 0
    %3291 = vmatpush.bf16.msra.mxu0 0
    %3292 = vmatpush.bf16.msra.mxu0 0
    %3293 = vmatpush.bf16.msra.mxu0 0
    %3294 = vmatpush.bf16.msra.mxu0 %v3187
    %3295 = vmatmul.bf16.gmra.mxu0 %v3156
    %v3296 = vpop.f32.mrf.mxu0
    %v3297 = vadd.f32 %v3142, %v3296
    %v3298 = vpop.f32.mrf.mxu0
    %v3299 = vadd.f32 %v3142, %v3298
    %3300 = vmatmul.bf16.gmra.mxu0 %v3159
    %v3301 = vpop.f32.mrf.mxu0
    %v3302 = vadd.f32 %v3142, %v3301
    %v3303 = vpop.f32.mrf.mxu0
    %v3304 = vadd.f32 %v3142, %v3303
    %3305 = vmatmul.bf16.gmra.mxu0 %v3162
    %v3306 = vpop.f32.mrf.mxu0
    %v3307 = vadd.f32 %v3142, %v3306
    %v3308 = vpop.f32.mrf.mxu0
    %v3309 = vadd.f32 %v3142, %v3308
    %3310 = vmatmul.bf16.gmra.mxu0 %v3165
    %v3311 = vpop.f32.mrf.mxu0
    %v3312 = vadd.f32 %v3142, %v3311
    %v3313 = vpop.f32.mrf.mxu0
    %v3314 = vadd.f32 %v3142, %v3313
    %3315 = vmatmul.bf16.gmra.mxu0 %v3168
    %v3316 = vpop.f32.mrf.mxu0
    %v3317 = vadd.f32 %v3142, %v3316
    %v3318 = vpop.f32.mrf.mxu0
    %v3319 = vadd.f32 %v3142, %v3318
    %3320 = vmatmul.bf16.gmra.mxu0 %v3171
    %v3321 = vpop.f32.mrf.mxu0
    %v3322 = vadd.f32 %v3142, %v3321
    %v3323 = vpop.f32.mrf.mxu0
    %v3324 = vadd.f32 %v3142, %v3323
    %3325 = vmatmul.bf16.gmra.mxu0 %v3174
    %v3326 = vpop.f32.mrf.mxu0
    %v3327 = vadd.f32 %v3142, %v3326
    %v3328 = vpop.f32.mrf.mxu0
    %v3329 = vadd.f32 %v3142, %v3328
    %3330 = vmatmul.bf16.gmra.mxu0 %v3177
    %v3331 = vpop.f32.mrf.mxu0
    %v3332 = vadd.f32 %v3142, %v3331
    %v3333 = vpop.f32.mrf.mxu0
    %v3334 = vadd.f32 %v3142, %v3333
    %3335 = vdwg.mxu0
    %v3336 = vmul.f32 %v372, 0.2
    %v3337 = vmul.f32 %v373, 0.2
    %v3338 = vmul.f32 %v374, 0.2
    %v3339 = vmul.f32 %v375, 0.2
    %v3340 = vmul.f32 %v376, 0.2
    %v3341 = vmul.f32 %v377, 0.2
    %v3342 = vmul.f32 %v378, 0.2
    %v3343 = vmul.f32 %v379, 0.2
    %v3344 = vmul.f32 %v380, 0.2
    %v3345 = vmul.f32 %v381, 0.2
    %v3346 = vmul.f32 %v382, 0.2
    %v3347 = vmul.f32 %v383, 0.2
    %v3348 = vmul.f32 %v384, 0.2
    %v3349 = vmul.f32 %v385, 0.2
    %v3350 = vmul.f32 %v386, 0.2
    %v3351 = vmul.f32 %v387, 0.2
    %v3352 = vmul.f32 %v3336, %v3336
    %v3353 = vmul.f32 %v3337, %v3337
    %v3354 = vmul.f32 %v3338, %v3338
    %v3355 = vmul.f32 %v3339, %v3339
    %v3356 = vmul.f32 %v3340, %v3340
    %v3357 = vmul.f32 %v3341, %v3341
    %v3358 = vmul.f32 %v3342, %v3342
    %v3359 = vmul.f32 %v3343, %v3343
    %v3360 = vmul.f32 %v3344, %v3344
    %v3361 = vmul.f32 %v3345, %v3345
    %v3362 = vmul.f32 %v3346, %v3346
    %v3363 = vmul.f32 %v3347, %v3347
    %v3364 = vmul.f32 %v3348, %v3348
    %v3365 = vmul.f32 %v3349, %v3349
    %v3366 = vmul.f32 %v3350, %v3350
    %v3367 = vmul.f32 %v3351, %v3351
    %v3368 = vmul.f32 %v3352, %v3352
    %v3369 = vmul.f32 %v3353, %v3353
    %v3370 = vmul.f32 %v3354, %v3354
    %v3371 = vmul.f32 %v3355, %v3355
    %v3372 = vmul.f32 %v3356, %v3356
    %v3373 = vmul.f32 %v3357, %v3357
    %v3374 = vmul.f32 %v3358, %v3358
    %v3375 = vmul.f32 %v3359, %v3359
    %v3376 = vmul.f32 %v3360, %v3360
    %v3377 = vmul.f32 %v3361, %v3361
    %v3378 = vmul.f32 %v3362, %v3362
    %v3379 = vmul.f32 %v3363, %v3363
    %v3380 = vmul.f32 %v3364, %v3364
    %v3381 = vmul.f32 %v3365, %v3365
    %v3382 = vmul.f32 %v3366, %v3366
    %v3383 = vmul.f32 %v3367, %v3367
    %v3384 = vmul.f32 %v3368, %v3352
    %v3385 = vmul.f32 %v3369, %v3353
    %v3386 = vmul.f32 %v3370, %v3354
    %v3387 = vmul.f32 %v3371, %v3355
    %v3388 = vmul.f32 %v3372, %v3356
    %v3389 = vmul.f32 %v3373, %v3357
    %v3390 = vmul.f32 %v3374, %v3358
    %v3391 = vmul.f32 %v3375, %v3359
    %v3392 = vmul.f32 %v3376, %v3360
    %v3393 = vmul.f32 %v3377, %v3361
    %v3394 = vmul.f32 %v3378, %v3362
    %v3395 = vmul.f32 %v3379, %v3363
    %v3396 = vmul.f32 %v3380, %v3364
    %v3397 = vmul.f32 %v3381, %v3365
    %v3398 = vmul.f32 %v3382, %v3366
    %v3399 = vmul.f32 %v3383, %v3367
    %v3400 = vmul.f32 %v3384, 28.0
    %v3401 = vmul.f32 %v3385, 28.0
    %v3402 = vmul.f32 %v3386, 28.0
    %v3403 = vmul.f32 %v3387, 28.0
    %v3404 = vmul.f32 %v3388, 28.0
    %v3405 = vmul.f32 %v3389, 28.0
    %v3406 = vmul.f32 %v3390, 28.0
    %v3407 = vmul.f32 %v3391, 28.0
    %v3408 = vmul.f32 %v3392, 28.0
    %v3409 = vmul.f32 %v3393, 28.0
    %v3410 = vmul.f32 %v3394, 28.0
    %v3411 = vmul.f32 %v3395, 28.0
    %v3412 = vmul.f32 %v3396, 28.0
    %v3413 = vmul.f32 %v3397, 28.0
    %v3414 = vmul.f32 %v3398, 28.0
    %v3415 = vmul.f32 %v3399, 28.0
    %v3416 = vsub.f32 1.0, %v3400
    %v3417 = vsub.f32 1.0, %v3401
    %v3418 = vsub.f32 1.0, %v3402
    %v3419 = vsub.f32 1.0, %v3403
    %v3420 = vsub.f32 1.0, %v3404
    %v3421 = vsub.f32 1.0, %v3405
    %v3422 = vsub.f32 1.0, %v3406
    %v3423 = vsub.f32 1.0, %v3407
    %v3424 = vsub.f32 1.0, %v3408
    %v3425 = vsub.f32 1.0, %v3409
    %v3426 = vsub.f32 1.0, %v3410
    %v3427 = vsub.f32 1.0, %v3411
    %v3428 = vsub.f32 1.0, %v3412
    %v3429 = vsub.f32 1.0, %v3413
    %v3430 = vsub.f32 1.0, %v3414
    %v3431 = vsub.f32 1.0, %v3415
    %v3432 = vmul.f32 %v3384, 48.0
    %v3433 = vmul.f32 %v3385, 48.0
    %v3434 = vmul.f32 %v3386, 48.0
    %v3435 = vmul.f32 %v3387, 48.0
    %v3436 = vmul.f32 %v3388, 48.0
    %v3437 = vmul.f32 %v3389, 48.0
    %v3438 = vmul.f32 %v3390, 48.0
    %v3439 = vmul.f32 %v3391, 48.0
    %v3440 = vmul.f32 %v3392, 48.0
    %v3441 = vmul.f32 %v3393, 48.0
    %v3442 = vmul.f32 %v3394, 48.0
    %v3443 = vmul.f32 %v3395, 48.0
    %v3444 = vmul.f32 %v3396, 48.0
    %v3445 = vmul.f32 %v3397, 48.0
    %v3446 = vmul.f32 %v3398, 48.0
    %v3447 = vmul.f32 %v3399, 48.0
    %v3448 = vmul.f32 %v3432, %v3336
    %v3449 = vmul.f32 %v3433, %v3337
    %v3450 = vmul.f32 %v3434, %v3338
    %v3451 = vmul.f32 %v3435, %v3339
    %v3452 = vmul.f32 %v3436, %v3340
    %v3453 = vmul.f32 %v3437, %v3341
    %v3454 = vmul.f32 %v3438, %v3342
    %v3455 = vmul.f32 %v3439, %v3343
    %v3456 = vmul.f32 %v3440, %v3344
    %v3457 = vmul.f32 %v3441, %v3345
    %v3458 = vmul.f32 %v3442, %v3346
    %v3459 = vmul.f32 %v3443, %v3347
    %v3460 = vmul.f32 %v3444, %v3348
    %v3461 = vmul.f32 %v3445, %v3349
    %v3462 = vmul.f32 %v3446, %v3350
    %v3463 = vmul.f32 %v3447, %v3351
    %v3464 = vadd.f32 %v3416, %v3448
    %v3465 = vadd.f32 %v3417, %v3449
    %v3466 = vadd.f32 %v3418, %v3450
    %v3467 = vadd.f32 %v3419, %v3451
    %v3468 = vadd.f32 %v3420, %v3452
    %v3469 = vadd.f32 %v3421, %v3453
    %v3470 = vadd.f32 %v3422, %v3454
    %v3471 = vadd.f32 %v3423, %v3455
    %v3472 = vadd.f32 %v3424, %v3456
    %v3473 = vadd.f32 %v3425, %v3457
    %v3474 = vadd.f32 %v3426, %v3458
    %v3475 = vadd.f32 %v3427, %v3459
    %v3476 = vadd.f32 %v3428, %v3460
    %v3477 = vadd.f32 %v3429, %v3461
    %v3478 = vadd.f32 %v3430, %v3462
    %v3479 = vadd.f32 %v3431, %v3463
    %v3480 = vmul.f32 %v3384, 21.0
    %v3481 = vmul.f32 %v3385, 21.0
    %v3482 = vmul.f32 %v3386, 21.0
    %v3483 = vmul.f32 %v3387, 21.0
    %v3484 = vmul.f32 %v3388, 21.0
    %v3485 = vmul.f32 %v3389, 21.0
    %v3486 = vmul.f32 %v3390, 21.0
    %v3487 = vmul.f32 %v3391, 21.0
    %v3488 = vmul.f32 %v3392, 21.0
    %v3489 = vmul.f32 %v3393, 21.0
    %v3490 = vmul.f32 %v3394, 21.0
    %v3491 = vmul.f32 %v3395, 21.0
    %v3492 = vmul.f32 %v3396, 21.0
    %v3493 = vmul.f32 %v3397, 21.0
    %v3494 = vmul.f32 %v3398, 21.0
    %v3495 = vmul.f32 %v3399, 21.0
    %v3496 = vmul.f32 %v3480, %v3352
    %v3497 = vmul.f32 %v3481, %v3353
    %v3498 = vmul.f32 %v3482, %v3354
    %v3499 = vmul.f32 %v3483, %v3355
    %v3500 = vmul.f32 %v3484, %v3356
    %v3501 = vmul.f32 %v3485, %v3357
    %v3502 = vmul.f32 %v3486, %v3358
    %v3503 = vmul.f32 %v3487, %v3359
    %v3504 = vmul.f32 %v3488, %v3360
    %v3505 = vmul.f32 %v3489, %v3361
    %v3506 = vmul.f32 %v3490, %v3362
    %v3507 = vmul.f32 %v3491, %v3363
    %v3508 = vmul.f32 %v3492, %v3364
    %v3509 = vmul.f32 %v3493, %v3365
    %v3510 = vmul.f32 %v3494, %v3366
    %v3511 = vmul.f32 %v3495, %v3367
    %v3512 = vsub.f32 %v3464, %v3496
    %v3513 = vsub.f32 %v3465, %v3497
    %v3514 = vsub.f32 %v3466, %v3498
    %v3515 = vsub.f32 %v3467, %v3499
    %v3516 = vsub.f32 %v3468, %v3500
    %v3517 = vsub.f32 %v3469, %v3501
    %v3518 = vsub.f32 %v3470, %v3502
    %v3519 = vsub.f32 %v3471, %v3503
    %v3520 = vsub.f32 %v3472, %v3504
    %v3521 = vsub.f32 %v3473, %v3505
    %v3522 = vsub.f32 %v3474, %v3506
    %v3523 = vsub.f32 %v3475, %v3507
    %v3524 = vsub.f32 %v3476, %v3508
    %v3525 = vsub.f32 %v3477, %v3509
    %v3526 = vsub.f32 %v3478, %v3510
    %v3527 = vsub.f32 %v3479, %v3511
    %vm3528 = vcmp.lt.f32.partialorder %v372, 5.0
    %vm3529 = vcmp.lt.f32.partialorder %v373, 5.0
    %vm3530 = vcmp.lt.f32.partialorder %v374, 5.0
    %vm3531 = vcmp.lt.f32.partialorder %v375, 5.0
    %vm3532 = vcmp.lt.f32.partialorder %v376, 5.0
    %vm3533 = vcmp.lt.f32.partialorder %v377, 5.0
    %vm3534 = vcmp.lt.f32.partialorder %v378, 5.0
    %vm3535 = vcmp.lt.f32.partialorder %v379, 5.0
    %vm3536 = vcmp.lt.f32.partialorder %v380, 5.0
    %vm3537 = vcmp.lt.f32.partialorder %v381, 5.0
    %vm3538 = vcmp.lt.f32.partialorder %v382, 5.0
    %vm3539 = vcmp.lt.f32.partialorder %v383, 5.0
    %vm3540 = vcmp.lt.f32.partialorder %v384, 5.0
    %vm3541 = vcmp.lt.f32.partialorder %v385, 5.0
    %vm3542 = vcmp.lt.f32.partialorder %v386, 5.0
    %vm3543 = vcmp.lt.f32.partialorder %v387, 5.0
    %v3544 = vsel %vm3528, 1, 0
    %v3545 = vsel %vm3529, 1, 0
    %v3546 = vsel %vm3530, 1, 0
    %v3547 = vsel %vm3531, 1, 0
    %v3548 = vsel %vm3532, 1, 0
    %v3549 = vsel %vm3533, 1, 0
    %v3550 = vsel %vm3534, 1, 0
    %v3551 = vsel %vm3535, 1, 0
    %v3552 = vsel %vm3536, 1, 0
    %v3553 = vsel %vm3537, 1, 0
    %v3554 = vsel %vm3538, 1, 0
    %v3555 = vsel %vm3539, 1, 0
    %v3556 = vsel %vm3540, 1, 0
    %v3557 = vsel %vm3541, 1, 0
    %v3558 = vsel %vm3542, 1, 0
    %v3559 = vsel %vm3543, 1, 0
    %v3560 = vcvt.s32.f32 %v3544
    %v3561 = vcvt.s32.f32 %v3545
    %v3562 = vcvt.s32.f32 %v3546
    %v3563 = vcvt.s32.f32 %v3547
    %v3564 = vcvt.s32.f32 %v3548
    %v3565 = vcvt.s32.f32 %v3549
    %v3566 = vcvt.s32.f32 %v3550
    %v3567 = vcvt.s32.f32 %v3551
    %v3568 = vcvt.s32.f32 %v3552
    %v3569 = vcvt.s32.f32 %v3553
    %v3570 = vcvt.s32.f32 %v3554
    %v3571 = vcvt.s32.f32 %v3555
    %v3572 = vcvt.s32.f32 %v3556
    %v3573 = vcvt.s32.f32 %v3557
    %v3574 = vcvt.s32.f32 %v3558
    %v3575 = vcvt.s32.f32 %v3559
    %v3576 = vmul.f32 %v3512, %v3560
    %v3577 = vmul.f32 %v3513, %v3561
    %v3578 = vmul.f32 %v3514, %v3562
    %v3579 = vmul.f32 %v3515, %v3563
    %v3580 = vmul.f32 %v3516, %v3564
    %v3581 = vmul.f32 %v3517, %v3565
    %v3582 = vmul.f32 %v3518, %v3566
    %v3583 = vmul.f32 %v3519, %v3567
    %v3584 = vmul.f32 %v3520, %v3568
    %v3585 = vmul.f32 %v3521, %v3569
    %v3586 = vmul.f32 %v3522, %v3570
    %v3587 = vmul.f32 %v3523, %v3571
    %v3588 = vmul.f32 %v3524, %v3572
    %v3589 = vmul.f32 %v3525, %v3573
    %v3590 = vmul.f32 %v3526, %v3574
    %v3591 = vmul.f32 %v3527, %v3575
    %3593 = vset.pattern.permute.xlu0 0
    %3594 = vperm.xlu0 %3593, %v3576
    %v3595 = vpop.permute.xlu0 %3594
    %3598 = vset.pattern.permute.xlu0 0
    %3599 = vperm.xlu0 %3598, %v3577
    %v3600 = vpop.permute.xlu0 %3599
    %3603 = vset.pattern.permute.xlu0 0
    %3604 = vperm.xlu0 %3603, %v3578
    %v3605 = vpop.permute.xlu0 %3604
    %3608 = vset.pattern.permute.xlu0 0
    %3609 = vperm.xlu0 %3608, %v3579
    %v3610 = vpop.permute.xlu0 %3609
    %3613 = vset.pattern.permute.xlu0 0
    %3614 = vperm.xlu0 %3613, %v3580
    %v3615 = vpop.permute.xlu0 %3614
    %3618 = vset.pattern.permute.xlu0 0
    %3619 = vperm.xlu0 %3618, %v3581
    %v3620 = vpop.permute.xlu0 %3619
    %3623 = vset.pattern.permute.xlu0 0
    %3624 = vperm.xlu0 %3623, %v3582
    %v3625 = vpop.permute.xlu0 %3624
    %3628 = vset.pattern.permute.xlu0 0
    %3629 = vperm.xlu0 %3628, %v3583
    %v3630 = vpop.permute.xlu0 %3629
    %3633 = vset.pattern.permute.xlu0 0
    %3634 = vperm.xlu0 %3633, %v3584
    %v3635 = vpop.permute.xlu0 %3634
    %3638 = vset.pattern.permute.xlu0 0
    %3639 = vperm.xlu0 %3638, %v3585
    %v3640 = vpop.permute.xlu0 %3639
    %3643 = vset.pattern.permute.xlu0 0
    %3644 = vperm.xlu0 %3643, %v3586
    %v3645 = vpop.permute.xlu0 %3644
    %3648 = vset.pattern.permute.xlu0 0
    %3649 = vperm.xlu0 %3648, %v3587
    %v3650 = vpop.permute.xlu0 %3649
    %3653 = vset.pattern.permute.xlu0 0
    %3654 = vperm.xlu0 %3653, %v3588
    %v3655 = vpop.permute.xlu0 %3654
    %3658 = vset.pattern.permute.xlu0 0
    %3659 = vperm.xlu0 %3658, %v3589
    %v3660 = vpop.permute.xlu0 %3659
    %3663 = vset.pattern.permute.xlu0 0
    %3664 = vperm.xlu0 %3663, %v3590
    %v3665 = vpop.permute.xlu0 %3664
    %3668 = vset.pattern.permute.xlu0 0
    %3669 = vperm.xlu0 %3668, %v3591
    %v3670 = vpop.permute.xlu0 %3669
    %v3672 = vmul.f32 %v3199, %v3595
    %v3673 = vmul.f32 %v3248, %v3595
    %v3674 = vmul.f32 %v3297, %v3595
    %v3675 = vmul.f32 %v3201, %v3600
    %v3676 = vmul.f32 %v3250, %v3600
    %v3677 = vmul.f32 %v3299, %v3600
    %v3678 = vmul.f32 %v3204, %v3605
    %v3679 = vmul.f32 %v3253, %v3605
    %v3680 = vmul.f32 %v3302, %v3605
    %v3681 = vmul.f32 %v3206, %v3610
    %v3682 = vmul.f32 %v3255, %v3610
    %v3683 = vmul.f32 %v3304, %v3610
    %v3684 = vmul.f32 %v3209, %v3615
    %v3685 = vmul.f32 %v3258, %v3615
    %v3686 = vmul.f32 %v3307, %v3615
    %v3687 = vmul.f32 %v3211, %v3620
    %v3688 = vmul.f32 %v3260, %v3620
    %v3689 = vmul.f32 %v3309, %v3620
    %v3690 = vmul.f32 %v3214, %v3625
    %v3691 = vmul.f32 %v3263, %v3625
    %v3692 = vmul.f32 %v3312, %v3625
    %v3693 = vmul.f32 %v3216, %v3630
    %v3694 = vmul.f32 %v3265, %v3630
    %v3695 = vmul.f32 %v3314, %v3630
    %v3696 = vmul.f32 %v3219, %v3635
    %v3697 = vmul.f32 %v3268, %v3635
    %v3698 = vmul.f32 %v3317, %v3635
    %v3699 = vmul.f32 %v3221, %v3640
    %v3700 = vmul.f32 %v3270, %v3640
    %v3701 = vmul.f32 %v3319, %v3640
    %v3702 = vmul.f32 %v3224, %v3645
    %v3703 = vmul.f32 %v3273, %v3645
    %v3704 = vmul.f32 %v3322, %v3645
    %v3705 = vmul.f32 %v3226, %v3650
    %v3706 = vmul.f32 %v3275, %v3650
    %v3707 = vmul.f32 %v3324, %v3650
    %v3708 = vmul.f32 %v3229, %v3655
    %v3709 = vmul.f32 %v3278, %v3655
    %v3710 = vmul.f32 %v3327, %v3655
    %v3711 = vmul.f32 %v3231, %v3660
    %v3712 = vmul.f32 %v3280, %v3660
    %v3713 = vmul.f32 %v3329, %v3660
    %v3714 = vmul.f32 %v3234, %v3665
    %v3715 = vmul.f32 %v3283, %v3665
    %v3716 = vmul.f32 %v3332, %v3665
    %v3717 = vmul.f32 %v3236, %v3670
    %v3718 = vmul.f32 %v3285, %v3670
    %v3719 = vmul.f32 %v3334, %v3670
    %v3720 = vld [vmem:[%s3] sm:$0xff]
    %v3721 = vld [vmem:[%s3 + $0x8] sm:$0xff]
    %v3722 = vld [vmem:[%s3 + $0x10] sm:$0xff]
    %v3723 = vld [vmem:[%s3 + $0x18] sm:$0xff]
    %v3724 = vld [vmem:[%s3 + $0x20] sm:$0xff]
    %v3725 = vld [vmem:[%s3 + $0x28] sm:$0xff]
    %v3726 = vld [vmem:[%s3 + $0x30] sm:$0xff]
    %v3727 = vld [vmem:[%s3 + $0x38] sm:$0xff]
    %v3728 = vld [vmem:[%s3 + $0x40] sm:$0xff]
    %v3729 = vld [vmem:[%s3 + $0x48] sm:$0xff]
    %v3730 = vld [vmem:[%s3 + $0x50] sm:$0xff]
    %v3731 = vld [vmem:[%s3 + $0x58] sm:$0xff]
    %v3732 = vld [vmem:[%s3 + $0x60] sm:$0xff]
    %v3733 = vld [vmem:[%s3 + $0x68] sm:$0xff]
    %v3734 = vld [vmem:[%s3 + $0x70] sm:$0xff]
    %v3735 = vld [vmem:[%s3 + $0x78] sm:$0xff]
    %v3736 = vlaneseq
    %v3737 = vand.u32 %v3736, 127
    %3738 = vset.pattern.permute.xlu0 0
    %3739 = vperm.xlu0 %3738, %v3720
    %v3740 = vpop.permute.xlu0 %3739
    %3741 = vset.pattern.permute.xlu0 0
    %3742 = vperm.xlu0 %3741, %v3721
    %v3743 = vpop.permute.xlu0 %3742
    %3744 = vset.pattern.permute.xlu0 0
    %3745 = vperm.xlu0 %3744, %v3722
    %v3746 = vpop.permute.xlu0 %3745
    %3747 = vset.pattern.permute.xlu0 0
    %3748 = vperm.xlu0 %3747, %v3723
    %v3749 = vpop.permute.xlu0 %3748
    %3750 = vset.pattern.permute.xlu0 0
    %3751 = vperm.xlu0 %3750, %v3724
    %v3752 = vpop.permute.xlu0 %3751
    %3753 = vset.pattern.permute.xlu0 0
    %3754 = vperm.xlu0 %3753, %v3725
    %v3755 = vpop.permute.xlu0 %3754
    %3756 = vset.pattern.permute.xlu0 0
    %3757 = vperm.xlu0 %3756, %v3726
    %v3758 = vpop.permute.xlu0 %3757
    %3759 = vset.pattern.permute.xlu0 0
    %3760 = vperm.xlu0 %3759, %v3727
    %v3761 = vpop.permute.xlu0 %3760
    %3762 = vset.pattern.permute.xlu0 0
    %3763 = vperm.xlu0 %3762, %v3728
    %v3764 = vpop.permute.xlu0 %3763
    %3765 = vset.pattern.permute.xlu0 0
    %3766 = vperm.xlu0 %3765, %v3729
    %v3767 = vpop.permute.xlu0 %3766
    %3768 = vset.pattern.permute.xlu0 0
    %3769 = vperm.xlu0 %3768, %v3730
    %v3770 = vpop.permute.xlu0 %3769
    %3771 = vset.pattern.permute.xlu0 0
    %3772 = vperm.xlu0 %3771, %v3731
    %v3773 = vpop.permute.xlu0 %3772
    %3774 = vset.pattern.permute.xlu0 0
    %3775 = vperm.xlu0 %3774, %v3732
    %v3776 = vpop.permute.xlu0 %3775
    %3777 = vset.pattern.permute.xlu0 0
    %3778 = vperm.xlu0 %3777, %v3733
    %v3779 = vpop.permute.xlu0 %3778
    %3780 = vset.pattern.permute.xlu0 0
    %3781 = vperm.xlu0 %3780, %v3734
    %v3782 = vpop.permute.xlu0 %3781
    %3783 = vset.pattern.permute.xlu0 0
    %3784 = vperm.xlu0 %3783, %v3735
    %v3785 = vpop.permute.xlu0 %3784
    %vm3786 = vcmp.eq.s32.totalorder %v3740, %v3737
    %vm3787 = vcmp.eq.s32.totalorder %v3743, %v3737
    %vm3788 = vcmp.eq.s32.totalorder %v3746, %v3737
    %vm3789 = vcmp.eq.s32.totalorder %v3749, %v3737
    %vm3790 = vcmp.eq.s32.totalorder %v3752, %v3737
    %vm3791 = vcmp.eq.s32.totalorder %v3755, %v3737
    %vm3792 = vcmp.eq.s32.totalorder %v3758, %v3737
    %vm3793 = vcmp.eq.s32.totalorder %v3761, %v3737
    %vm3794 = vcmp.eq.s32.totalorder %v3764, %v3737
    %vm3795 = vcmp.eq.s32.totalorder %v3767, %v3737
    %vm3796 = vcmp.eq.s32.totalorder %v3770, %v3737
    %vm3797 = vcmp.eq.s32.totalorder %v3773, %v3737
    %vm3798 = vcmp.eq.s32.totalorder %v3776, %v3737
    %vm3799 = vcmp.eq.s32.totalorder %v3779, %v3737
    %vm3800 = vcmp.eq.s32.totalorder %v3782, %v3737
    %vm3801 = vcmp.eq.s32.totalorder %v3785, %v3737
    %v3802 = vsel %vm3786, 1, 0
    %v3803 = vsel %vm3787, 1, 0
    %v3804 = vsel %vm3788, 1, 0
    %v3805 = vsel %vm3789, 1, 0
    %v3806 = vsel %vm3790, 1, 0
    %v3807 = vsel %vm3791, 1, 0
    %v3808 = vsel %vm3792, 1, 0
    %v3809 = vsel %vm3793, 1, 0
    %v3810 = vsel %vm3794, 1, 0
    %v3811 = vsel %vm3795, 1, 0
    %v3812 = vsel %vm3796, 1, 0
    %v3813 = vsel %vm3797, 1, 0
    %v3814 = vsel %vm3798, 1, 0
    %v3815 = vsel %vm3799, 1, 0
    %v3816 = vsel %vm3800, 1, 0
    %v3817 = vsel %vm3801, 1, 0
    %v3818 = vcvt.s32.f32 %v3802
    %v3819 = vcvt.s32.f32 %v3803
    %v3820 = vcvt.s32.f32 %v3804
    %v3821 = vcvt.s32.f32 %v3805
    %v3822 = vcvt.s32.f32 %v3806
    %v3823 = vcvt.s32.f32 %v3807
    %v3824 = vcvt.s32.f32 %v3808
    %v3825 = vcvt.s32.f32 %v3809
    %v3826 = vcvt.s32.f32 %v3810
    %v3827 = vcvt.s32.f32 %v3811
    %v3828 = vcvt.s32.f32 %v3812
    %v3829 = vcvt.s32.f32 %v3813
    %v3830 = vcvt.s32.f32 %v3814
    %v3831 = vcvt.s32.f32 %v3815
    %v3832 = vcvt.s32.f32 %v3816
    %v3833 = vcvt.s32.f32 %v3817
    %v3834 = vpack.c.bf16 %v3819, %v3818
    %v3835 = vpack.c.bf16 %v3821, %v3820
    %v3836 = vpack.c.bf16 %v3823, %v3822
    %v3837 = vpack.c.bf16 %v3825, %v3824
    %v3838 = vpack.c.bf16 %v3827, %v3826
    %v3839 = vpack.c.bf16 %v3829, %v3828
    %v3840 = vpack.c.bf16 %v3831, %v3830
    %v3841 = vpack.c.bf16 %v3833, %v3832
    %v3842 = vld [vmem:[#allocation2] sm:$0xff]
    %v3843 = vld [vmem:[#allocation2 + $0x8] sm:$0xff]
    %v3844 = vld [vmem:[#allocation2 + $0x10] sm:$0xff]
    %v3848 = vunpack.c.l.b16 %v3842
    %v3849 = vunpack.c.h.b16 %v3842
    %v3850 = vunpack.c.l.b16 %v3843
    %v3851 = vunpack.c.h.b16 %v3843
    %v3852 = vunpack.c.l.b16 %v3844
    %v3853 = vunpack.c.h.b16 %v3844
    %v3854 = vpack.c.b16 %v3848, %v3848
    %v3855 = vpack.c.b16 %v3849, %v3849
    %v3856 = vpack.c.b16 %v3850, %v3850
    %v3857 = vpack.c.b16 %v3851, %v3851
    %v3858 = vpack.c.b16 %v3852, %v3852
    %v3859 = vpack.c.b16 %v3853, %v3853
    %v3861 = vsel %vm3154, %v3834, 0
    %v3864 = vsel %vm3154, %v3835, 0
    %v3867 = vsel %vm3154, %v3836, 0
    %v3870 = vsel %vm3154, %v3837, 0
    %v3873 = vsel %vm3154, %v3838, 0
    %v3876 = vsel %vm3154, %v3839, 0
    %v3879 = vsel %vm3154, %v3840, 0
    %v3882 = vsel %vm3154, %v3841, 0
    %v3885 = vsel %vm3179, %v3854, 0
    %v3888 = vsel %vm3179, %v3855, 0
    %v3891 = vsel %vm3179, %v3856, 0
    %v3894 = vsel %vm3179, %v3857, 0
    %v3897 = vsel %vm3179, %v3858, 0
    %v3900 = vsel %vm3179, %v3859, 0
    %3902 = vmatpush.bf16.msra.mxu0 0
    %3903 = vmatpush.bf16.msra.mxu0 0
    %3904 = vmatpush.bf16.msra.mxu0 0
    %3905 = vmatpush.bf16.msra.mxu0 0
    %3906 = vmatpush.bf16.msra.mxu0 0
    %3907 = vmatpush.bf16.msra.mxu0 0
    %3908 = vmatpush.bf16.msra.mxu0 0
    %3909 = vmatpush.bf16.msra.mxu0 %v3885
    %3910 = vmatmul.bf16.gmra.mxu0 %v3861
    %v3911 = vpop.f32.mrf.mxu0
    %v3912 = vadd.f32 0.0, %v3911
    %v3913 = vpop.f32.mrf.mxu0
    %v3914 = vadd.f32 0.0, %v3913
    %3915 = vmatmul.bf16.gmra.mxu0 %v3864
    %v3916 = vpop.f32.mrf.mxu0
    %v3917 = vadd.f32 0.0, %v3916
    %v3918 = vpop.f32.mrf.mxu0
    %v3919 = vadd.f32 0.0, %v3918
    %3920 = vmatmul.bf16.gmra.mxu0 %v3867
    %v3921 = vpop.f32.mrf.mxu0
    %v3922 = vadd.f32 0.0, %v3921
    %v3923 = vpop.f32.mrf.mxu0
    %v3924 = vadd.f32 0.0, %v3923
    %3925 = vmatmul.bf16.gmra.mxu0 %v3870
    %v3926 = vpop.f32.mrf.mxu0
    %v3927 = vadd.f32 0.0, %v3926
    %v3928 = vpop.f32.mrf.mxu0
    %v3929 = vadd.f32 0.0, %v3928
    %3930 = vmatmul.bf16.gmra.mxu0 %v3873
    %v3931 = vpop.f32.mrf.mxu0
    %v3932 = vadd.f32 0.0, %v3931
    %v3933 = vpop.f32.mrf.mxu0
    %v3934 = vadd.f32 0.0, %v3933
    %3935 = vmatmul.bf16.gmra.mxu0 %v3876
    %v3936 = vpop.f32.mrf.mxu0
    %v3937 = vadd.f32 0.0, %v3936
    %v3938 = vpop.f32.mrf.mxu0
    %v3939 = vadd.f32 0.0, %v3938
    %3940 = vmatmul.bf16.gmra.mxu0 %v3879
    %v3941 = vpop.f32.mrf.mxu0
    %v3942 = vadd.f32 0.0, %v3941
    %v3943 = vpop.f32.mrf.mxu0
    %v3944 = vadd.f32 0.0, %v3943
    %3945 = vmatmul.bf16.gmra.mxu0 %v3882
    %v3946 = vpop.f32.mrf.mxu0
    %v3947 = vadd.f32 0.0, %v3946
    %v3948 = vpop.f32.mrf.mxu0
    %v3949 = vadd.f32 0.0, %v3948
    %3950 = vdwg.mxu0
    %3951 = vmatpush.bf16.msra.mxu0 0
    %3952 = vmatpush.bf16.msra.mxu0 0
    %3953 = vmatpush.bf16.msra.mxu0 0
    %3954 = vmatpush.bf16.msra.mxu0 0
    %3955 = vmatpush.bf16.msra.mxu0 0
    %3956 = vmatpush.bf16.msra.mxu0 0
    %3957 = vmatpush.bf16.msra.mxu0 0
    %3958 = vmatpush.bf16.msra.mxu0 %v3888
    %3959 = vmatmul.bf16.gmra.mxu0 %v3861
    %v3960 = vpop.f32.mrf.mxu0
    %v3961 = vadd.f32 0.0, %v3960
    %v3962 = vpop.f32.mrf.mxu0
    %v3963 = vadd.f32 0.0, %v3962
    %3964 = vmatmul.bf16.gmra.mxu0 %v3864
    %v3965 = vpop.f32.mrf.mxu0
    %v3966 = vadd.f32 0.0, %v3965
    %v3967 = vpop.f32.mrf.mxu0
    %v3968 = vadd.f32 0.0, %v3967
    %3969 = vmatmul.bf16.gmra.mxu0 %v3867
    %v3970 = vpop.f32.mrf.mxu0
    %v3971 = vadd.f32 0.0, %v3970
    %v3972 = vpop.f32.mrf.mxu0
    %v3973 = vadd.f32 0.0, %v3972
    %3974 = vmatmul.bf16.gmra.mxu0 %v3870
    %v3975 = vpop.f32.mrf.mxu0
    %v3976 = vadd.f32 0.0, %v3975
    %v3977 = vpop.f32.mrf.mxu0
    %v3978 = vadd.f32 0.0, %v3977
    %3979 = vmatmul.bf16.gmra.mxu0 %v3873
    %v3980 = vpop.f32.mrf.mxu0
    %v3981 = vadd.f32 0.0, %v3980
    %v3982 = vpop.f32.mrf.mxu0
    %v3983 = vadd.f32 0.0, %v3982
    %3984 = vmatmul.bf16.gmra.mxu0 %v3876
    %v3985 = vpop.f32.mrf.mxu0
    %v3986 = vadd.f32 0.0, %v3985
    %v3987 = vpop.f32.mrf.mxu0
    %v3988 = vadd.f32 0.0, %v3987
    %3989 = vmatmul.bf16.gmra.mxu0 %v3879
    %v3990 = vpop.f32.mrf.mxu0
    %v3991 = vadd.f32 0.0, %v3990
    %v3992 = vpop.f32.mrf.mxu0
    %v3993 = vadd.f32 0.0, %v3992
    %3994 = vmatmul.bf16.gmra.mxu0 %v3882
    %v3995 = vpop.f32.mrf.mxu0
    %v3996 = vadd.f32 0.0, %v3995
    %v3997 = vpop.f32.mrf.mxu0
    %v3998 = vadd.f32 0.0, %v3997
    %3999 = vdwg.mxu0
    %4000 = vmatpush.bf16.msra.mxu0 0
    %4001 = vmatpush.bf16.msra.mxu0 0
    %4002 = vmatpush.bf16.msra.mxu0 0
    %4003 = vmatpush.bf16.msra.mxu0 0
    %4004 = vmatpush.bf16.msra.mxu0 0
    %4005 = vmatpush.bf16.msra.mxu0 0
    %4006 = vmatpush.bf16.msra.mxu0 0
    %4007 = vmatpush.bf16.msra.mxu0 %v3891
    %4008 = vmatmul.bf16.gmra.mxu0 %v3861
    %v4009 = vpop.f32.mrf.mxu0
    %v4010 = vadd.f32 0.0, %v4009
    %v4011 = vpop.f32.mrf.mxu0
    %v4012 = vadd.f32 0.0, %v4011
    %4013 = vmatmul.bf16.gmra.mxu0 %v3864
    %v4014 = vpop.f32.mrf.mxu0
    %v4015 = vadd.f32 0.0, %v4014
    %v4016 = vpop.f32.mrf.mxu0
    %v4017 = vadd.f32 0.0, %v4016
    %4018 = vmatmul.bf16.gmra.mxu0 %v3867
    %v4019 = vpop.f32.mrf.mxu0
    %v4020 = vadd.f32 0.0, %v4019
    %v4021 = vpop.f32.mrf.mxu0
    %v4022 = vadd.f32 0.0, %v4021
    %4023 = vmatmul.bf16.gmra.mxu0 %v3870
    %v4024 = vpop.f32.mrf.mxu0
    %v4025 = vadd.f32 0.0, %v4024
    %v4026 = vpop.f32.mrf.mxu0
    %v4027 = vadd.f32 0.0, %v4026
    %4028 = vmatmul.bf16.gmra.mxu0 %v3873
    %v4029 = vpop.f32.mrf.mxu0
    %v4030 = vadd.f32 0.0, %v4029
    %v4031 = vpop.f32.mrf.mxu0
    %v4032 = vadd.f32 0.0, %v4031
    %4033 = vmatmul.bf16.gmra.mxu0 %v3876
    %v4034 = vpop.f32.mrf.mxu0
    %v4035 = vadd.f32 0.0, %v4034
    %v4036 = vpop.f32.mrf.mxu0
    %v4037 = vadd.f32 0.0, %v4036
    %4038 = vmatmul.bf16.gmra.mxu0 %v3879
    %v4039 = vpop.f32.mrf.mxu0
    %v4040 = vadd.f32 0.0, %v4039
    %v4041 = vpop.f32.mrf.mxu0
    %v4042 = vadd.f32 0.0, %v4041
    %4043 = vmatmul.bf16.gmra.mxu0 %v3882
    %v4044 = vpop.f32.mrf.mxu0
    %v4045 = vadd.f32 0.0, %v4044
    %v4046 = vpop.f32.mrf.mxu0
    %v4047 = vadd.f32 0.0, %v4046
    %4048 = vdwg.mxu0
    %4049 = vmatpush.bf16.msra.mxu0 0
    %4050 = vmatpush.bf16.msra.mxu0 0
    %4051 = vmatpush.bf16.msra.mxu0 0
    %4052 = vmatpush.bf16.msra.mxu0 0
    %4053 = vmatpush.bf16.msra.mxu0 0
    %4054 = vmatpush.bf16.msra.mxu0 0
    %4055 = vmatpush.bf16.msra.mxu0 0
    %4056 = vmatpush.bf16.msra.mxu0 %v3894
    %4057 = vmatmul.bf16.gmra.mxu0 %v3861
    %v4058 = vpop.f32.mrf.mxu0
    %v4059 = vadd.f32 0.0, %v4058
    %v4060 = vpop.f32.mrf.mxu0
    %v4061 = vadd.f32 0.0, %v4060
    %4062 = vmatmul.bf16.gmra.mxu0 %v3864
    %v4063 = vpop.f32.mrf.mxu0
    %v4064 = vadd.f32 0.0, %v4063
    %v4065 = vpop.f32.mrf.mxu0
    %v4066 = vadd.f32 0.0, %v4065
    %4067 = vmatmul.bf16.gmra.mxu0 %v3867
    %v4068 = vpop.f32.mrf.mxu0
    %v4069 = vadd.f32 0.0, %v4068
    %v4070 = vpop.f32.mrf.mxu0
    %v4071 = vadd.f32 0.0, %v4070
    %4072 = vmatmul.bf16.gmra.mxu0 %v3870
    %v4073 = vpop.f32.mrf.mxu0
    %v4074 = vadd.f32 0.0, %v4073
    %v4075 = vpop.f32.mrf.mxu0
    %v4076 = vadd.f32 0.0, %v4075
    %4077 = vmatmul.bf16.gmra.mxu0 %v3873
    %v4078 = vpop.f32.mrf.mxu0
    %v4079 = vadd.f32 0.0, %v4078
    %v4080 = vpop.f32.mrf.mxu0
    %v4081 = vadd.f32 0.0, %v4080
    %4082 = vmatmul.bf16.gmra.mxu0 %v3876
    %v4083 = vpop.f32.mrf.mxu0
    %v4084 = vadd.f32 0.0, %v4083
    %v4085 = vpop.f32.mrf.mxu0
    %v4086 = vadd.f32 0.0, %v4085
    %4087 = vmatmul.bf16.gmra.mxu0 %v3879
    %v4088 = vpop.f32.mrf.mxu0
    %v4089 = vadd.f32 0.0, %v4088
    %v4090 = vpop.f32.mrf.mxu0
    %v4091 = vadd.f32 0.0, %v4090
    %4092 = vmatmul.bf16.gmra.mxu0 %v3882
    %v4093 = vpop.f32.mrf.mxu0
    %v4094 = vadd.f32 0.0, %v4093
    %v4095 = vpop.f32.mrf.mxu0
    %v4096 = vadd.f32 0.0, %v4095
    %4097 = vdwg.mxu0
    %4098 = vmatpush.bf16.msra.mxu0 0
    %4099 = vmatpush.bf16.msra.mxu0 0
    %4100 = vmatpush.bf16.msra.mxu0 0
    %4101 = vmatpush.bf16.msra.mxu0 0
    %4102 = vmatpush.bf16.msra.mxu0 0
    %4103 = vmatpush.bf16.msra.mxu0 0
    %4104 = vmatpush.bf16.msra.mxu0 0
    %4105 = vmatpush.bf16.msra.mxu0 %v3897
    %4106 = vmatmul.bf16.gmra.mxu0 %v3861
    %v4107 = vpop.f32.mrf.mxu0
    %v4108 = vadd.f32 0.0, %v4107
    %v4109 = vpop.f32.mrf.mxu0
    %v4110 = vadd.f32 0.0, %v4109
    %4111 = vmatmul.bf16.gmra.mxu0 %v3864
    %v4112 = vpop.f32.mrf.mxu0
    %v4113 = vadd.f32 0.0, %v4112
    %v4114 = vpop.f32.mrf.mxu0
    %v4115 = vadd.f32 0.0, %v4114
    %4116 = vmatmul.bf16.gmra.mxu0 %v3867
    %v4117 = vpop.f32.mrf.mxu0
    %v4118 = vadd.f32 0.0, %v4117
    %v4119 = vpop.f32.mrf.mxu0
    %v4120 = vadd.f32 0.0, %v4119
    %4121 = vmatmul.bf16.gmra.mxu0 %v3870
    %v4122 = vpop.f32.mrf.mxu0
    %v4123 = vadd.f32 0.0, %v4122
    %v4124 = vpop.f32.mrf.mxu0
    %v4125 = vadd.f32 0.0, %v4124
    %4126 = vmatmul.bf16.gmra.mxu0 %v3873
    %v4127 = vpop.f32.mrf.mxu0
    %v4128 = vadd.f32 0.0, %v4127
    %v4129 = vpop.f32.mrf.mxu0
    %v4130 = vadd.f32 0.0, %v4129
    %4131 = vmatmul.bf16.gmra.mxu0 %v3876
    %v4132 = vpop.f32.mrf.mxu0
    %v4133 = vadd.f32 0.0, %v4132
    %v4134 = vpop.f32.mrf.mxu0
    %v4135 = vadd.f32 0.0, %v4134
    %4136 = vmatmul.bf16.gmra.mxu0 %v3879
    %v4137 = vpop.f32.mrf.mxu0
    %v4138 = vadd.f32 0.0, %v4137
    %v4139 = vpop.f32.mrf.mxu0
    %v4140 = vadd.f32 0.0, %v4139
    %4141 = vmatmul.bf16.gmra.mxu0 %v3882
    %v4142 = vpop.f32.mrf.mxu0
    %v4143 = vadd.f32 0.0, %v4142
    %v4144 = vpop.f32.mrf.mxu0
    %v4145 = vadd.f32 0.0, %v4144
    %4146 = vdwg.mxu0
    %4147 = vmatpush.bf16.msra.mxu0 0
    %4148 = vmatpush.bf16.msra.mxu0 0
    %4149 = vmatpush.bf16.msra.mxu0 0
    %4150 = vmatpush.bf16.msra.mxu0 0
    %4151 = vmatpush.bf16.msra.mxu0 0
    %4152 = vmatpush.bf16.msra.mxu0 0
    %4153 = vmatpush.bf16.msra.mxu0 0
    %4154 = vmatpush.bf16.msra.mxu0 %v3900
    %4155 = vmatmul.bf16.gmra.mxu0 %v3861
    %v4156 = vpop.f32.mrf.mxu0
    %v4157 = vadd.f32 0.0, %v4156
    %v4158 = vpop.f32.mrf.mxu0
    %v4159 = vadd.f32 0.0, %v4158
    %4160 = vmatmul.bf16.gmra.mxu0 %v3864
    %v4161 = vpop.f32.mrf.mxu0
    %v4162 = vadd.f32 0.0, %v4161
    %v4163 = vpop.f32.mrf.mxu0
    %v4164 = vadd.f32 0.0, %v4163
    %4165 = vmatmul.bf16.gmra.mxu0 %v3867
    %v4166 = vpop.f32.mrf.mxu0
    %v4167 = vadd.f32 0.0, %v4166
    %v4168 = vpop.f32.mrf.mxu0
    %v4169 = vadd.f32 0.0, %v4168
    %4170 = vmatmul.bf16.gmra.mxu0 %v3870
    %v4171 = vpop.f32.mrf.mxu0
    %v4172 = vadd.f32 0.0, %v4171
    %v4173 = vpop.f32.mrf.mxu0
    %v4174 = vadd.f32 0.0, %v4173
    %4175 = vmatmul.bf16.gmra.mxu0 %v3873
    %v4176 = vpop.f32.mrf.mxu0
    %v4177 = vadd.f32 0.0, %v4176
    %v4178 = vpop.f32.mrf.mxu0
    %v4179 = vadd.f32 0.0, %v4178
    %4180 = vmatmul.bf16.gmra.mxu0 %v3876
    %v4181 = vpop.f32.mrf.mxu0
    %v4182 = vadd.f32 0.0, %v4181
    %v4183 = vpop.f32.mrf.mxu0
    %v4184 = vadd.f32 0.0, %v4183
    %4185 = vmatmul.bf16.gmra.mxu0 %v3879
    %v4186 = vpop.f32.mrf.mxu0
    %v4187 = vadd.f32 0.0, %v4186
    %v4188 = vpop.f32.mrf.mxu0
    %v4189 = vadd.f32 0.0, %v4188
    %4190 = vmatmul.bf16.gmra.mxu0 %v3882
    %v4191 = vpop.f32.mrf.mxu0
    %v4192 = vadd.f32 0.0, %v4191
    %v4193 = vpop.f32.mrf.mxu0
    %v4194 = vadd.f32 0.0, %v4193
    %4195 = vdwg.mxu0
    %v4196 = vmul.f32 %v3912, %v3672
    %v4197 = vmul.f32 %v3961, %v3673
    %v4198 = vmul.f32 %v4010, %v3674
    %v4199 = vmul.f32 %v3914, %v3675
    %v4200 = vmul.f32 %v3963, %v3676
    %v4201 = vmul.f32 %v4012, %v3677
    %v4202 = vmul.f32 %v3917, %v3678
    %v4203 = vmul.f32 %v3966, %v3679
    %v4204 = vmul.f32 %v4015, %v3680
    %v4205 = vmul.f32 %v3919, %v3681
    %v4206 = vmul.f32 %v3968, %v3682
    %v4207 = vmul.f32 %v4017, %v3683
    %v4208 = vmul.f32 %v3922, %v3684
    %v4209 = vmul.f32 %v3971, %v3685
    %v4210 = vmul.f32 %v4020, %v3686
    %v4211 = vmul.f32 %v3924, %v3687
    %v4212 = vmul.f32 %v3973, %v3688
    %v4213 = vmul.f32 %v4022, %v3689
    %v4214 = vmul.f32 %v3927, %v3690
    %v4215 = vmul.f32 %v3976, %v3691
    %v4216 = vmul.f32 %v4025, %v3692
    %v4217 = vmul.f32 %v3929, %v3693
    %v4218 = vmul.f32 %v3978, %v3694
    %v4219 = vmul.f32 %v4027, %v3695
    %v4220 = vmul.f32 %v3932, %v3696
    %v4221 = vmul.f32 %v3981, %v3697
    %v4222 = vmul.f32 %v4030, %v3698
    %v4223 = vmul.f32 %v3934, %v3699
    %v4224 = vmul.f32 %v3983, %v3700
    %v4225 = vmul.f32 %v4032, %v3701
    %v4226 = vmul.f32 %v3937, %v3702
    %v4227 = vmul.f32 %v3986, %v3703
    %v4228 = vmul.f32 %v4035, %v3704
    %v4229 = vmul.f32 %v3939, %v3705
    %v4230 = vmul.f32 %v3988, %v3706
    %v4231 = vmul.f32 %v4037, %v3707
    %v4232 = vmul.f32 %v3942, %v3708
    %v4233 = vmul.f32 %v3991, %v3709
    %v4234 = vmul.f32 %v4040, %v3710
    %v4235 = vmul.f32 %v3944, %v3711
    %v4236 = vmul.f32 %v3993, %v3712
    %v4237 = vmul.f32 %v4042, %v3713
    %v4238 = vmul.f32 %v3947, %v3714
    %v4239 = vmul.f32 %v3996, %v3715
    %v4240 = vmul.f32 %v4045, %v3716
    %v4241 = vmul.f32 %v3949, %v3717
    %v4242 = vmul.f32 %v3998, %v3718
    %v4243 = vmul.f32 %v4047, %v3719
    %4245 = vset.pattern.permute.xlu0 0
    %4246 = vperm.xlu0 %4245, %v500
    %v4247 = vpop.permute.xlu0 %4246
    %4250 = vset.pattern.permute.xlu0 0
    %4251 = vperm.xlu0 %4250, %v501
    %v4252 = vpop.permute.xlu0 %4251
    %4255 = vset.pattern.permute.xlu0 0
    %4256 = vperm.xlu0 %4255, %v502
    %v4257 = vpop.permute.xlu0 %4256
    %4260 = vset.pattern.permute.xlu0 0
    %4261 = vperm.xlu0 %4260, %v503
    %v4262 = vpop.permute.xlu0 %4261
    %4265 = vset.pattern.permute.xlu0 0
    %4266 = vperm.xlu0 %4265, %v504
    %v4267 = vpop.permute.xlu0 %4266
    %4270 = vset.pattern.permute.xlu0 0
    %4271 = vperm.xlu0 %4270, %v505
    %v4272 = vpop.permute.xlu0 %4271
    %4275 = vset.pattern.permute.xlu0 0
    %4276 = vperm.xlu0 %4275, %v506
    %v4277 = vpop.permute.xlu0 %4276
    %4280 = vset.pattern.permute.xlu0 0
    %4281 = vperm.xlu0 %4280, %v507
    %v4282 = vpop.permute.xlu0 %4281
    %4285 = vset.pattern.permute.xlu0 0
    %4286 = vperm.xlu0 %4285, %v508
    %v4287 = vpop.permute.xlu0 %4286
    %4290 = vset.pattern.permute.xlu0 0
    %4291 = vperm.xlu0 %4290, %v509
    %v4292 = vpop.permute.xlu0 %4291
    %4295 = vset.pattern.permute.xlu0 0
    %4296 = vperm.xlu0 %4295, %v510
    %v4297 = vpop.permute.xlu0 %4296
    %4300 = vset.pattern.permute.xlu0 0
    %4301 = vperm.xlu0 %4300, %v511
    %v4302 = vpop.permute.xlu0 %4301
    %4305 = vset.pattern.permute.xlu0 0
    %4306 = vperm.xlu0 %4305, %v512
    %v4307 = vpop.permute.xlu0 %4306
    %4310 = vset.pattern.permute.xlu0 0
    %4311 = vperm.xlu0 %4310, %v513
    %v4312 = vpop.permute.xlu0 %4311
    %4315 = vset.pattern.permute.xlu0 0
    %4316 = vperm.xlu0 %4315, %v514
    %v4317 = vpop.permute.xlu0 %4316
    %4320 = vset.pattern.permute.xlu0 0
    %4321 = vperm.xlu0 %4320, %v515
    %v4322 = vpop.permute.xlu0 %4321
    %v4324 = vmul.f32 %v4197, %v4247
    %v4325 = vmul.f32 %v4200, %v4252
    %v4326 = vmul.f32 %v4203, %v4257
    %v4327 = vmul.f32 %v4206, %v4262
    %v4328 = vmul.f32 %v4209, %v4267
    %v4329 = vmul.f32 %v4212, %v4272
    %v4330 = vmul.f32 %v4215, %v4277
    %v4331 = vmul.f32 %v4218, %v4282
    %v4332 = vmul.f32 %v4221, %v4287
    %v4333 = vmul.f32 %v4224, %v4292
    %v4334 = vmul.f32 %v4227, %v4297
    %v4335 = vmul.f32 %v4230, %v4302
    %v4336 = vmul.f32 %v4233, %v4307
    %v4337 = vmul.f32 %v4236, %v4312
    %v4338 = vmul.f32 %v4239, %v4317
    %v4339 = vmul.f32 %v4242, %v4322
    %v4340 = vmul.f32 %v4198, %v4059
    %v4341 = vmul.f32 %v4201, %v4061
    %v4342 = vmul.f32 %v4204, %v4064
    %v4343 = vmul.f32 %v4207, %v4066
    %v4344 = vmul.f32 %v4210, %v4069
    %v4345 = vmul.f32 %v4213, %v4071
    %v4346 = vmul.f32 %v4216, %v4074
    %v4347 = vmul.f32 %v4219, %v4076
    %v4348 = vmul.f32 %v4222, %v4079
    %v4349 = vmul.f32 %v4225, %v4081
    %v4350 = vmul.f32 %v4228, %v4084
    %v4351 = vmul.f32 %v4231, %v4086
    %v4352 = vmul.f32 %v4234, %v4089
    %v4353 = vmul.f32 %v4237, %v4091
    %v4354 = vmul.f32 %v4240, %v4094
    %v4355 = vmul.f32 %v4243, %v4096
    %v4356 = vadd.f32 %v4324, %v4340
    %v4357 = vadd.f32 %v4325, %v4341
    %v4358 = vadd.f32 %v4326, %v4342
    %v4359 = vadd.f32 %v4327, %v4343
    %v4360 = vadd.f32 %v4328, %v4344
    %v4361 = vadd.f32 %v4329, %v4345
    %v4362 = vadd.f32 %v4330, %v4346
    %v4363 = vadd.f32 %v4331, %v4347
    %v4364 = vadd.f32 %v4332, %v4348
    %v4365 = vadd.f32 %v4333, %v4349
    %v4366 = vadd.f32 %v4334, %v4350
    %v4367 = vadd.f32 %v4335, %v4351
    %v4368 = vadd.f32 %v4336, %v4352
    %v4369 = vadd.f32 %v4337, %v4353
    %v4370 = vadd.f32 %v4338, %v4354
    %v4371 = vadd.f32 %v4339, %v4355
    %4372 = vset.pattern.permute.xlu0 1
    %4373 = vperm.xlu0 %4372, %v500
    %v4374 = vpop.permute.xlu0 %4373
    %4376 = vset.pattern.permute.xlu0 1
    %4377 = vperm.xlu0 %4376, %v501
    %v4378 = vpop.permute.xlu0 %4377
    %4380 = vset.pattern.permute.xlu0 1
    %4381 = vperm.xlu0 %4380, %v502
    %v4382 = vpop.permute.xlu0 %4381
    %4384 = vset.pattern.permute.xlu0 1
    %4385 = vperm.xlu0 %4384, %v503
    %v4386 = vpop.permute.xlu0 %4385
    %4388 = vset.pattern.permute.xlu0 1
    %4389 = vperm.xlu0 %4388, %v504
    %v4390 = vpop.permute.xlu0 %4389
    %4392 = vset.pattern.permute.xlu0 1
    %4393 = vperm.xlu0 %4392, %v505
    %v4394 = vpop.permute.xlu0 %4393
    %4396 = vset.pattern.permute.xlu0 1
    %4397 = vperm.xlu0 %4396, %v506
    %v4398 = vpop.permute.xlu0 %4397
    %4400 = vset.pattern.permute.xlu0 1
    %4401 = vperm.xlu0 %4400, %v507
    %v4402 = vpop.permute.xlu0 %4401
    %4404 = vset.pattern.permute.xlu0 1
    %4405 = vperm.xlu0 %4404, %v508
    %v4406 = vpop.permute.xlu0 %4405
    %4408 = vset.pattern.permute.xlu0 1
    %4409 = vperm.xlu0 %4408, %v509
    %v4410 = vpop.permute.xlu0 %4409
    %4412 = vset.pattern.permute.xlu0 1
    %4413 = vperm.xlu0 %4412, %v510
    %v4414 = vpop.permute.xlu0 %4413
    %4416 = vset.pattern.permute.xlu0 1
    %4417 = vperm.xlu0 %4416, %v511
    %v4418 = vpop.permute.xlu0 %4417
    %4420 = vset.pattern.permute.xlu0 1
    %4421 = vperm.xlu0 %4420, %v512
    %v4422 = vpop.permute.xlu0 %4421
    %4424 = vset.pattern.permute.xlu0 1
    %4425 = vperm.xlu0 %4424, %v513
    %v4426 = vpop.permute.xlu0 %4425
    %4428 = vset.pattern.permute.xlu0 1
    %4429 = vperm.xlu0 %4428, %v514
    %v4430 = vpop.permute.xlu0 %4429
    %4432 = vset.pattern.permute.xlu0 1
    %4433 = vperm.xlu0 %4432, %v515
    %v4434 = vpop.permute.xlu0 %4433
    %v4436 = vmul.f32 %v4197, %v4374
    %v4437 = vmul.f32 %v4200, %v4378
    %v4438 = vmul.f32 %v4203, %v4382
    %v4439 = vmul.f32 %v4206, %v4386
    %v4440 = vmul.f32 %v4209, %v4390
    %v4441 = vmul.f32 %v4212, %v4394
    %v4442 = vmul.f32 %v4215, %v4398
    %v4443 = vmul.f32 %v4218, %v4402
    %v4444 = vmul.f32 %v4221, %v4406
    %v4445 = vmul.f32 %v4224, %v4410
    %v4446 = vmul.f32 %v4227, %v4414
    %v4447 = vmul.f32 %v4230, %v4418
    %v4448 = vmul.f32 %v4233, %v4422
    %v4449 = vmul.f32 %v4236, %v4426
    %v4450 = vmul.f32 %v4239, %v4430
    %v4451 = vmul.f32 %v4242, %v4434
    %v4452 = vmul.f32 %v4198, %v4108
    %v4453 = vmul.f32 %v4201, %v4110
    %v4454 = vmul.f32 %v4204, %v4113
    %v4455 = vmul.f32 %v4207, %v4115
    %v4456 = vmul.f32 %v4210, %v4118
    %v4457 = vmul.f32 %v4213, %v4120
    %v4458 = vmul.f32 %v4216, %v4123
    %v4459 = vmul.f32 %v4219, %v4125
    %v4460 = vmul.f32 %v4222, %v4128
    %v4461 = vmul.f32 %v4225, %v4130
    %v4462 = vmul.f32 %v4228, %v4133
    %v4463 = vmul.f32 %v4231, %v4135
    %v4464 = vmul.f32 %v4234, %v4138
    %v4465 = vmul.f32 %v4237, %v4140
    %v4466 = vmul.f32 %v4240, %v4143
    %v4467 = vmul.f32 %v4243, %v4145
    %v4468 = vadd.f32 %v4436, %v4452
    %v4469 = vadd.f32 %v4437, %v4453
    %v4470 = vadd.f32 %v4438, %v4454
    %v4471 = vadd.f32 %v4439, %v4455
    %v4472 = vadd.f32 %v4440, %v4456
    %v4473 = vadd.f32 %v4441, %v4457
    %v4474 = vadd.f32 %v4442, %v4458
    %v4475 = vadd.f32 %v4443, %v4459
    %v4476 = vadd.f32 %v4444, %v4460
    %v4477 = vadd.f32 %v4445, %v4461
    %v4478 = vadd.f32 %v4446, %v4462
    %v4479 = vadd.f32 %v4447, %v4463
    %v4480 = vadd.f32 %v4448, %v4464
    %v4481 = vadd.f32 %v4449, %v4465
    %v4482 = vadd.f32 %v4450, %v4466
    %v4483 = vadd.f32 %v4451, %v4467
    %4484 = vset.pattern.permute.xlu0 2
    %4485 = vperm.xlu0 %4484, %v500
    %v4486 = vpop.permute.xlu0 %4485
    %4488 = vset.pattern.permute.xlu0 2
    %4489 = vperm.xlu0 %4488, %v501
    %v4490 = vpop.permute.xlu0 %4489
    %4492 = vset.pattern.permute.xlu0 2
    %4493 = vperm.xlu0 %4492, %v502
    %v4494 = vpop.permute.xlu0 %4493
    %4496 = vset.pattern.permute.xlu0 2
    %4497 = vperm.xlu0 %4496, %v503
    %v4498 = vpop.permute.xlu0 %4497
    %4500 = vset.pattern.permute.xlu0 2
    %4501 = vperm.xlu0 %4500, %v504
    %v4502 = vpop.permute.xlu0 %4501
    %4504 = vset.pattern.permute.xlu0 2
    %4505 = vperm.xlu0 %4504, %v505
    %v4506 = vpop.permute.xlu0 %4505
    %4508 = vset.pattern.permute.xlu0 2
    %4509 = vperm.xlu0 %4508, %v506
    %v4510 = vpop.permute.xlu0 %4509
    %4512 = vset.pattern.permute.xlu0 2
    %4513 = vperm.xlu0 %4512, %v507
    %v4514 = vpop.permute.xlu0 %4513
    %4516 = vset.pattern.permute.xlu0 2
    %4517 = vperm.xlu0 %4516, %v508
    %v4518 = vpop.permute.xlu0 %4517
    %4520 = vset.pattern.permute.xlu0 2
    %4521 = vperm.xlu0 %4520, %v509
    %v4522 = vpop.permute.xlu0 %4521
    %4524 = vset.pattern.permute.xlu0 2
    %4525 = vperm.xlu0 %4524, %v510
    %v4526 = vpop.permute.xlu0 %4525
    %4528 = vset.pattern.permute.xlu0 2
    %4529 = vperm.xlu0 %4528, %v511
    %v4530 = vpop.permute.xlu0 %4529
    %4532 = vset.pattern.permute.xlu0 2
    %4533 = vperm.xlu0 %4532, %v512
    %v4534 = vpop.permute.xlu0 %4533
    %4536 = vset.pattern.permute.xlu0 2
    %4537 = vperm.xlu0 %4536, %v513
    %v4538 = vpop.permute.xlu0 %4537
    %4540 = vset.pattern.permute.xlu0 2
    %4541 = vperm.xlu0 %4540, %v514
    %v4542 = vpop.permute.xlu0 %4541
    %4544 = vset.pattern.permute.xlu0 2
    %4545 = vperm.xlu0 %4544, %v515
    %v4546 = vpop.permute.xlu0 %4545
    %v4548 = vmul.f32 %v4197, %v4486
    %v4549 = vmul.f32 %v4200, %v4490
    %v4550 = vmul.f32 %v4203, %v4494
    %v4551 = vmul.f32 %v4206, %v4498
    %v4552 = vmul.f32 %v4209, %v4502
    %v4553 = vmul.f32 %v4212, %v4506
    %v4554 = vmul.f32 %v4215, %v4510
    %v4555 = vmul.f32 %v4218, %v4514
    %v4556 = vmul.f32 %v4221, %v4518
    %v4557 = vmul.f32 %v4224, %v4522
    %v4558 = vmul.f32 %v4227, %v4526
    %v4559 = vmul.f32 %v4230, %v4530
    %v4560 = vmul.f32 %v4233, %v4534
    %v4561 = vmul.f32 %v4236, %v4538
    %v4562 = vmul.f32 %v4239, %v4542
    %v4563 = vmul.f32 %v4242, %v4546
    %v4564 = vmul.f32 %v4198, %v4157
    %v4565 = vmul.f32 %v4201, %v4159
    %v4566 = vmul.f32 %v4204, %v4162
    %v4567 = vmul.f32 %v4207, %v4164
    %v4568 = vmul.f32 %v4210, %v4167
    %v4569 = vmul.f32 %v4213, %v4169
    %v4570 = vmul.f32 %v4216, %v4172
    %v4571 = vmul.f32 %v4219, %v4174
    %v4572 = vmul.f32 %v4222, %v4177
    %v4573 = vmul.f32 %v4225, %v4179
    %v4574 = vmul.f32 %v4228, %v4182
    %v4575 = vmul.f32 %v4231, %v4184
    %v4576 = vmul.f32 %v4234, %v4187
    %v4577 = vmul.f32 %v4237, %v4189
    %v4578 = vmul.f32 %v4240, %v4192
    %v4579 = vmul.f32 %v4243, %v4194
    %v4580 = vadd.f32 %v4548, %v4564
    %v4581 = vadd.f32 %v4549, %v4565
    %v4582 = vadd.f32 %v4550, %v4566
    %v4583 = vadd.f32 %v4551, %v4567
    %v4584 = vadd.f32 %v4552, %v4568
    %v4585 = vadd.f32 %v4553, %v4569
    %v4586 = vadd.f32 %v4554, %v4570
    %v4587 = vadd.f32 %v4555, %v4571
    %v4588 = vadd.f32 %v4556, %v4572
    %v4589 = vadd.f32 %v4557, %v4573
    %v4590 = vadd.f32 %v4558, %v4574
    %v4591 = vadd.f32 %v4559, %v4575
    %v4592 = vadd.f32 %v4560, %v4576
    %v4593 = vadd.f32 %v4561, %v4577
    %v4594 = vadd.f32 %v4562, %v4578
    %v4595 = vadd.f32 %v4563, %v4579
    %s4596 = smul.u32 0, 8
    %v4597 = vld [vmem:[%s2] sm:$0xff]
    %v4598 = vld [vmem:[%s2 + $0x8] sm:$0xff]
    %v4599 = vld [vmem:[%s2 + $0x10] sm:$0xff]
    %v4600 = vld [vmem:[%s2 + $0x18] sm:$0xff]
    %v4601 = vld [vmem:[%s2 + $0x20] sm:$0xff]
    %v4602 = vld [vmem:[%s2 + $0x28] sm:$0xff]
    %v4603 = vld [vmem:[%s2 + $0x30] sm:$0xff]
    %v4604 = vld [vmem:[%s2 + $0x38] sm:$0xff]
    %v4605 = vld [vmem:[%s2 + $0x40] sm:$0xff]
    %v4606 = vld [vmem:[%s2 + $0x48] sm:$0xff]
    %v4607 = vld [vmem:[%s2 + $0x50] sm:$0xff]
    %v4608 = vld [vmem:[%s2 + $0x58] sm:$0xff]
    %v4609 = vld [vmem:[%s2 + $0x60] sm:$0xff]
    %v4610 = vld [vmem:[%s2 + $0x68] sm:$0xff]
    %v4611 = vld [vmem:[%s2 + $0x70] sm:$0xff]
    %v4612 = vld [vmem:[%s2 + $0x78] sm:$0xff]
    %v4613 = vstv %s4596
    %v4614 = vadd.s32 %v3737, %v4613
    %4615 = vset.pattern.permute.xlu0 0
    %4616 = vperm.xlu0 %4615, %v4597
    %v4617 = vpop.permute.xlu0 %4616
    %4618 = vset.pattern.permute.xlu0 0
    %4619 = vperm.xlu0 %4618, %v4598
    %v4620 = vpop.permute.xlu0 %4619
    %4621 = vset.pattern.permute.xlu0 0
    %4622 = vperm.xlu0 %4621, %v4599
    %v4623 = vpop.permute.xlu0 %4622
    %4624 = vset.pattern.permute.xlu0 0
    %4625 = vperm.xlu0 %4624, %v4600
    %v4626 = vpop.permute.xlu0 %4625
    %4627 = vset.pattern.permute.xlu0 0
    %4628 = vperm.xlu0 %4627, %v4601
    %v4629 = vpop.permute.xlu0 %4628
    %4630 = vset.pattern.permute.xlu0 0
    %4631 = vperm.xlu0 %4630, %v4602
    %v4632 = vpop.permute.xlu0 %4631
    %4633 = vset.pattern.permute.xlu0 0
    %4634 = vperm.xlu0 %4633, %v4603
    %v4635 = vpop.permute.xlu0 %4634
    %4636 = vset.pattern.permute.xlu0 0
    %4637 = vperm.xlu0 %4636, %v4604
    %v4638 = vpop.permute.xlu0 %4637
    %4639 = vset.pattern.permute.xlu0 0
    %4640 = vperm.xlu0 %4639, %v4605
    %v4641 = vpop.permute.xlu0 %4640
    %4642 = vset.pattern.permute.xlu0 0
    %4643 = vperm.xlu0 %4642, %v4606
    %v4644 = vpop.permute.xlu0 %4643
    %4645 = vset.pattern.permute.xlu0 0
    %4646 = vperm.xlu0 %4645, %v4607
    %v4647 = vpop.permute.xlu0 %4646
    %4648 = vset.pattern.permute.xlu0 0
    %4649 = vperm.xlu0 %4648, %v4608
    %v4650 = vpop.permute.xlu0 %4649
    %4651 = vset.pattern.permute.xlu0 0
    %4652 = vperm.xlu0 %4651, %v4609
    %v4653 = vpop.permute.xlu0 %4652
    %4654 = vset.pattern.permute.xlu0 0
    %4655 = vperm.xlu0 %4654, %v4610
    %v4656 = vpop.permute.xlu0 %4655
    %4657 = vset.pattern.permute.xlu0 0
    %4658 = vperm.xlu0 %4657, %v4611
    %v4659 = vpop.permute.xlu0 %4658
    %4660 = vset.pattern.permute.xlu0 0
    %4661 = vperm.xlu0 %4660, %v4612
    %v4662 = vpop.permute.xlu0 %4661
    %vm4663 = vcmp.eq.s32.totalorder %v4617, %v4614
    %vm4664 = vcmp.eq.s32.totalorder %v4620, %v4614
    %vm4665 = vcmp.eq.s32.totalorder %v4623, %v4614
    %vm4666 = vcmp.eq.s32.totalorder %v4626, %v4614
    %vm4667 = vcmp.eq.s32.totalorder %v4629, %v4614
    %vm4668 = vcmp.eq.s32.totalorder %v4632, %v4614
    %vm4669 = vcmp.eq.s32.totalorder %v4635, %v4614
    %vm4670 = vcmp.eq.s32.totalorder %v4638, %v4614
    %vm4671 = vcmp.eq.s32.totalorder %v4641, %v4614
    %vm4672 = vcmp.eq.s32.totalorder %v4644, %v4614
    %vm4673 = vcmp.eq.s32.totalorder %v4647, %v4614
    %vm4674 = vcmp.eq.s32.totalorder %v4650, %v4614
    %vm4675 = vcmp.eq.s32.totalorder %v4653, %v4614
    %vm4676 = vcmp.eq.s32.totalorder %v4656, %v4614
    %vm4677 = vcmp.eq.s32.totalorder %v4659, %v4614
    %vm4678 = vcmp.eq.s32.totalorder %v4662, %v4614
    %v4679 = vld [vmem:[#allocation3] sm:$0xff]
    %v4680 = vld [vmem:[#allocation3 + $0x8] sm:$0xff]
    %v4681 = vld [vmem:[#allocation3 + $0x10] sm:$0xff]
    %v4682 = vld [vmem:[#allocation3 + $0x18] sm:$0xff]
    %v4683 = vsel %vm4663, 1, 0
    %v4684 = vsel %vm4664, 1, 0
    %v4685 = vsel %vm4665, 1, 0
    %v4686 = vsel %vm4666, 1, 0
    %v4687 = vsel %vm4667, 1, 0
    %v4688 = vsel %vm4668, 1, 0
    %v4689 = vsel %vm4669, 1, 0
    %v4690 = vsel %vm4670, 1, 0
    %v4691 = vsel %vm4671, 1, 0
    %v4692 = vsel %vm4672, 1, 0
    %v4693 = vsel %vm4673, 1, 0
    %v4694 = vsel %vm4674, 1, 0
    %v4695 = vsel %vm4675, 1, 0
    %v4696 = vsel %vm4676, 1, 0
    %v4697 = vsel %vm4677, 1, 0
    %v4698 = vsel %vm4678, 1, 0
    %v4699 = vcvt.s32.f32 %v4683
    %v4700 = vcvt.s32.f32 %v4684
    %v4701 = vcvt.s32.f32 %v4685
    %v4702 = vcvt.s32.f32 %v4686
    %v4703 = vcvt.s32.f32 %v4687
    %v4704 = vcvt.s32.f32 %v4688
    %v4705 = vcvt.s32.f32 %v4689
    %v4706 = vcvt.s32.f32 %v4690
    %v4707 = vcvt.s32.f32 %v4691
    %v4708 = vcvt.s32.f32 %v4692
    %v4709 = vcvt.s32.f32 %v4693
    %v4710 = vcvt.s32.f32 %v4694
    %v4711 = vcvt.s32.f32 %v4695
    %v4712 = vcvt.s32.f32 %v4696
    %v4713 = vcvt.s32.f32 %v4697
    %v4714 = vcvt.s32.f32 %v4698
    %v4715 = vpack.c.bf16 %v4700, %v4699
    %v4716 = vpack.c.bf16 %v4702, %v4701
    %v4717 = vpack.c.bf16 %v4704, %v4703
    %v4718 = vpack.c.bf16 %v4706, %v4705
    %v4719 = vpack.c.bf16 %v4708, %v4707
    %v4720 = vpack.c.bf16 %v4710, %v4709
    %v4721 = vpack.c.bf16 %v4712, %v4711
    %v4722 = vpack.c.bf16 %v4714, %v4713
    %v4723 = vpack.c.bf16 %v4199, %v4196
    %v4724 = vpack.c.bf16 %v4357, %v4356
    %v4725 = vpack.c.bf16 %v4469, %v4468
    %v4726 = vpack.c.bf16 %v4581, %v4580
    %v4727 = vpack.c.bf16 %v4205, %v4202
    %v4728 = vpack.c.bf16 %v4359, %v4358
    %v4729 = vpack.c.bf16 %v4471, %v4470
    %v4730 = vpack.c.bf16 %v4583, %v4582
    %v4731 = vpack.c.bf16 %v4211, %v4208
    %v4732 = vpack.c.bf16 %v4361, %v4360
    %v4733 = vpack.c.bf16 %v4473, %v4472
    %v4734 = vpack.c.bf16 %v4585, %v4584
    %v4735 = vpack.c.bf16 %v4217, %v4214
    %v4736 = vpack.c.bf16 %v4363, %v4362
    %v4737 = vpack.c.bf16 %v4475, %v4474
    %v4738 = vpack.c.bf16 %v4587, %v4586
    %v4739 = vpack.c.bf16 %v4223, %v4220
    %v4740 = vpack.c.bf16 %v4365, %v4364
    %v4741 = vpack.c.bf16 %v4477, %v4476
    %v4742 = vpack.c.bf16 %v4589, %v4588
    %v4743 = vpack.c.bf16 %v4229, %v4226
    %v4744 = vpack.c.bf16 %v4367, %v4366
    %v4745 = vpack.c.bf16 %v4479, %v4478
    %v4746 = vpack.c.bf16 %v4591, %v4590
    %v4747 = vpack.c.bf16 %v4235, %v4232
    %v4748 = vpack.c.bf16 %v4369, %v4368
    %v4749 = vpack.c.bf16 %v4481, %v4480
    %v4750 = vpack.c.bf16 %v4593, %v4592
    %v4751 = vpack.c.bf16 %v4241, %v4238
    %v4752 = vpack.c.bf16 %v4371, %v4370
    %v4753 = vpack.c.bf16 %v4483, %v4482
    %v4754 = vpack.c.bf16 %v4595, %v4594
    %4755 = vxpose.xlu0.c.b16.start [1/8] %v4715, 128
    %4756 = vxpose.xlu0.c.b16.cont [2/8] %v4716, 128
    %4757 = vxpose.xlu0.c.b16.cont [3/8] %v4717, 128
    %4758 = vxpose.xlu0.c.b16.cont [4/8] %v4718, 128
    %4759 = vxpose.xlu0.c.b16.cont [5/8] %v4719, 128
    %4760 = vxpose.xlu0.c.b16.cont [6/8] %v4720, 128
    %4761 = vxpose.xlu0.c.b16.cont [7/8] %v4721, 128
    %4762 = vxpose.xlu0.c.b16.end [8/8] %v4722, 128
    %v4763 = vpop.trf.xlu0
    %v4764 = vpop.trf.xlu0
    %v4765 = vpop.trf.xlu0
    %v4766 = vpop.trf.xlu0
    %v4767 = vpop.trf.xlu0
    %v4768 = vpop.trf.xlu0
    %v4769 = vpop.trf.xlu0
    %v4770 = vpop.trf.xlu0
    %4771 = vmatpush.bf16.msra.mxu0 %v4751
    %4772 = vmatpush.bf16.msra.mxu0 %v4747
    %4773 = vmatpush.bf16.msra.mxu0 %v4743
    %4774 = vmatpush.bf16.msra.mxu0 %v4739
    %4775 = vmatpush.bf16.msra.mxu0 %v4735
    %4776 = vmatpush.bf16.msra.mxu0 %v4731
    %4777 = vmatpush.bf16.msra.mxu0 %v4727
    %4778 = vmatpush.bf16.msra.mxu0 %v4723
    %4779 = vmatmul.bf16.gmra.mxu0 %v4763
    %v4780 = vpop.f32.mrf.mxu0
    %v4781 = vadd.f32 0.0, %v4780
    %v4782 = vpop.f32.mrf.mxu0
    %4783 = vdwg.mxu0
    %4784 = vmatpush.bf16.msra.mxu0 %v4752
    %4785 = vmatpush.bf16.msra.mxu0 %v4748
    %4786 = vmatpush.bf16.msra.mxu0 %v4744
    %4787 = vmatpush.bf16.msra.mxu0 %v4740
    %4788 = vmatpush.bf16.msra.mxu0 %v4736
    %4789 = vmatpush.bf16.msra.mxu0 %v4732
    %4790 = vmatpush.bf16.msra.mxu0 %v4728
    %4791 = vmatpush.bf16.msra.mxu0 %v4724
    %4792 = vmatmul.bf16.gmra.mxu0 %v4763
    %v4793 = vpop.f32.mrf.mxu0
    %v4794 = vadd.f32 0.0, %v4793
    %v4795 = vpop.f32.mrf.mxu0
    %4796 = vdwg.mxu0
    %4797 = vmatpush.bf16.msra.mxu0 %v4753
    %4798 = vmatpush.bf16.msra.mxu0 %v4749
    %4799 = vmatpush.bf16.msra.mxu0 %v4745
    %4800 = vmatpush.bf16.msra.mxu0 %v4741
    %4801 = vmatpush.bf16.msra.mxu0 %v4737
    %4802 = vmatpush.bf16.msra.mxu0 %v4733
    %4803 = vmatpush.bf16.msra.mxu0 %v4729
    %4804 = vmatpush.bf16.msra.mxu0 %v4725
    %4805 = vmatmul.bf16.gmra.mxu0 %v4763
    %v4806 = vpop.f32.mrf.mxu0
    %v4807 = vadd.f32 0.0, %v4806
    %v4808 = vpop.f32.mrf.mxu0
    %4809 = vdwg.mxu0
    %4810 = vmatpush.bf16.msra.mxu0 %v4754
    %4811 = vmatpush.bf16.msra.mxu0 %v4750
    %4812 = vmatpush.bf16.msra.mxu0 %v4746
    %4813 = vmatpush.bf16.msra.mxu0 %v4742
    %4814 = vmatpush.bf16.msra.mxu0 %v4738
    %4815 = vmatpush.bf16.msra.mxu0 %v4734
    %4816 = vmatpush.bf16.msra.mxu0 %v4730
    %4817 = vmatpush.bf16.msra.mxu0 %v4726
    %4818 = vmatmul.bf16.gmra.mxu0 %v4763
    %v4819 = vpop.f32.mrf.mxu0
    %v4820 = vadd.f32 0.0, %v4819
    %v4821 = vpop.f32.mrf.mxu0
    %4822 = vdwg.mxu0
    %v4823 = vadd.f32 %v4679, %v4781
    %v4824 = vadd.f32 %v4680, %v4794
    %v4825 = vadd.f32 %v4681, %v4807
    %v4826 = vadd.f32 %v4682, %v4820
    %4827 = vst [vmem:[#allocation3] sm:$0xff] %v4823
    %4828 = vst [vmem:[#allocation3 + $0x8] sm:$0xff] %v4824
    %4829 = vst [vmem:[#allocation3 + $0x10] sm:$0xff] %v4825
    %4830 = vst [vmem:[#allocation3 + $0x18] sm:$0xff] %v4826
    // Predicated region
    $region58: #{tpu_custom_call.1} parent=1 // pred_check
      _
    $region59: #{tpu_custom_call.1} parent=1 // pred_check_branch
      %4832 = sbr.rel (0) target = $region61
    $region60: #{tpu_custom_call.1} parent=1 // pred_region
      %4834 = vsyncadd [#allocation4], 0
      %s4836 = sshll.u32 [#allocation3], 4
      %s4837 = int_to_ptr.vmem [resolvable:$true] %s4836
      %s4838 = sshll.u32 %s13, 4
      %s4839 = int_to_ptr.hbm [resolvable:$true] %s4838
      %4841 = dma.vmem_to_hbm [thread:$0]  %s4837, 512, %s4839, [#allocation4]
    $region61: #{tpu_custom_call.1} parent=1 // pred_fallthru
      _
    // Predicated region
    $region62: #{tpu_custom_call.1} parent=1 // pred_check
      _
    $region63: #{tpu_custom_call.1} parent=1 // pred_check_branch
      %4843 = sbr.rel (0) target = $region65
    $region64: #{tpu_custom_call.1} parent=1 // pred_region
      %4845 = dma.done [#allocation4], 512
    $region65: #{tpu_custom_call.1} parent=1 // pred_fallthru
      _
    %4846 = vsyncpa [#allocation4], 1

</llo_original>
